<compile_context>
chip_gen: v5e
topology: v5e:2x2
jax: 0.10.0
libtpu: 0.0.40
codegen_flags: <defaults>
</compile_context>

<pallas_src>
import functools

import jax
import jax.numpy as jnp
from jax.experimental import pallas as pl
from jax.experimental.pallas import tpu as pltpu


def _ceil_to(x, m):
    return ((x + m - 1) // m) * m


# ---------------------------------------------------------------------------
# Fused residual-block kernel (one batch element per grid step)
# ---------------------------------------------------------------------------
def _residual_block_kernel(*refs, stride, taps1, wg, lacc, cout,
                           shortcut, compute_dtype):
    """Fused conv3x3+BN+ReLU -> conv3x3+BN -> (+shortcut) -> ReLU.

    refs (in order):
      x_ref   : (1, L, Cin) [stride 1]   or (1, 4, Lph, Cin) [stride 2 phases]
      w1_ref  : (9, Cin, Cout)   BN1 scale folded in (bf16 or f32)
      b1_ref  : (1, Cout)        BN1 shift
      w2_ref  : (9, Cout, Cout)  BN2 scale folded in
      b2_ref  : (1, Cout)        BN2 shift
      mask_ref: (lacc, 1)        1.0 on valid spatial columns, 0.0 on pad cols
      [wsc_ref: (Cin, Cout), bsc_ref: (1, Cout)]   only if projection shortcut
      o_ref   : (1, lacc, Cout)
      h1_ref  : VMEM scratch (lpad, Cout) f32  (padded h1 map, zero ring)
    """
    if shortcut == "project":
        (x_ref, w1_ref, b1_ref, w2_ref, b2_ref, mask_ref,
         wsc_ref, bsc_ref, o_ref, h1_ref) = refs
    else:
        (x_ref, w1_ref, b1_ref, w2_ref, b2_ref, mask_ref,
         o_ref, h1_ref) = refs

    def load_x(phase, off, size):
        if stride == 1:
            return x_ref[0, pl.ds(off, size), :]
        return x_ref[0, phase, pl.ds(off, size), :]

    # ---- conv1 (3x3, stride) + BN1 (scale folded) + ReLU -> h1 (VMEM) ------
    acc1 = jnp.zeros((lacc, cout), jnp.float32)
    for t, (phase, off) in enumerate(taps1):
        a = load_x(phase, off, lacc).astype(compute_dtype)
        w = w1_ref[t].astype(compute_dtype)
        acc1 = acc1 + jnp.dot(a, w, preferred_element_type=jnp.float32)
    h1 = jnp.maximum(acc1 + b1_ref[...], 0.0) * mask_ref[...]

    # store h1 into the padded flattened grid (zero ring for conv2's halo)
    h1_ref[...] = jnp.zeros_like(h1_ref)
    h1_ref[pl.ds(wg + 1, lacc), :] = h1.astype(h1_ref.dtype)

    # ---- conv2 (3x3, stride 1) + BN2 + shortcut + ReLU ----------------------
    acc2 = jnp.zeros((lacc, cout), jnp.float32)
    for kh in range(3):
        for kw in range(3):
            t = kh * 3 + kw
            a = h1_ref[pl.ds(kh * wg + kw, lacc), :].astype(compute_dtype)
            w = w2_ref[t].astype(compute_dtype)
            acc2 = acc2 + jnp.dot(a, w, preferred_element_type=jnp.float32)
    acc2 = acc2 + b2_ref[...]

    if shortcut == "identity":
        # residual = x itself (same padded-flattened layout, exact f32 add)
        acc2 = acc2 + load_x(None, wg + 1, lacc)
    else:
        if stride == 1:
            xs = load_x(None, wg + 1, lacc)
        else:
            # phase (odd row, odd col) of x_pad == x[::2, ::2]
            xs = x_ref[0, 3, pl.ds(0, lacc), :]
        acc2 = (acc2
                + jnp.dot(xs.astype(compute_dtype),
                          wsc_ref[...].astype(compute_dtype),
                          preferred_element_type=jnp.float32)
                + bsc_ref[...])

    o_ref[0] = jnp.maximum(acc2, 0.0).astype(o_ref.dtype)


# ---------------------------------------------------------------------------
# Wrapper: layout plumbing + pallas_call
# ---------------------------------------------------------------------------
def _fold_bn(bn):
    # scale = gamma / sqrt(var + eps); shift = beta - mean * scale
    scale = bn["gamma"] / jnp.sqrt(bn["var"] + bn["eps"])
    shift = bn["beta"] - bn["mean"] * scale
    return scale, shift


def residual_block_forward(x, params, stride, *, use_bf16=True):
    """x: (B, Cin, H, W) f32 NCHW.  Returns (B, Cout, H/stride, W/stride) f32."""
    B, Cin, H, W = x.shape
    w1 = params["w1"]                     # (Cout, Cin, 3, 3)
    Cout = w1.shape[0]
    assert stride in (1, 2)
    if stride == 2:
        assert H % 2 == 0 and W % 2 == 0, "stride-2 path assumes even H, W"
    Ho, Wo = H // stride, W // stride
    Wg = Wo + 2                           # padded grid width (h1 and out grids)
    lacc = Ho * Wg - 2                    # accumulator rows (valid + pad cols)
    lpad = (Ho + 2) * Wg                  # flattened padded h1 grid length
    has_proj = (stride != 1) or (Cin != Cout)
    compute_dtype = jnp.bfloat16 if use_bf16 else jnp.float32

    # ---- activations: single spatial pad, no im2col expansion --------------
    x_nhwc = jnp.transpose(x, (0, 2, 3, 1))
    x_pad = jnp.pad(x_nhwc, ((0, 0), (1, 1), (1, 1), (0, 0)))
    if stride == 1:
        x_in = x_pad.reshape(B, (H + 2) * Wg, Cin)            # (B, lpad, Cin)
        x_spec = pl.BlockSpec((1, (H + 2) * Wg, Cin), lambda b: (b, 0, 0))
        taps1 = [(None, kh * Wg + kw) for kh in range(3) for kw in range(3)]
    else:
        # 4 polyphase components of x_pad, each (Ho+1, Wo+1, Cin), padded to
        # width Wg so every flattened grid in the kernel shares the same width.
        phases = [x_pad[:, p::2, q::2, :] for p in (0, 1) for q in (0, 1)]
        phases = jnp.stack(phases, axis=1)                    # (B,4,Ho+1,Wo+1,C)
        phases = jnp.pad(phases, ((0, 0), (0, 0), (0, 0), (0, 1), (0, 0)))
        lph = (Ho + 1) * Wg
        x_in = phases.reshape(B, 4, lph, Cin)
        x_spec = pl.BlockSpec((1, 4, lph, Cin), lambda b: (b, 0, 0, 0))
        taps1 = [((kh % 2) * 2 + (kw % 2), (kh // 2) * Wg + (kw // 2))
                 for kh in range(3) for kw in range(3)]

    # ---- weights: BN scale folded in, stored in the MXU compute dtype ------
    s1, t1 = _fold_bn(params["bn1"])
    s2, t2 = _fold_bn(params["bn2"])
    w1_mat = (jnp.transpose(w1, (2, 3, 1, 0)).reshape(9, Cin, Cout)
              * s1[None, None, :]).astype(compute_dtype)
    w2_mat = (jnp.transpose(params["w2"], (2, 3, 1, 0)).reshape(9, Cout, Cout)
              * s2[None, None, :]).astype(compute_dtype)
    b1 = t1.reshape(1, Cout).astype(jnp.float32)
    b2 = t2.reshape(1, Cout).astype(jnp.float32)

    # valid-column mask on the flattened accumulator rows (zero the
    # interleaved spatial-padding columns so conv2 sees h1's zero ring)
    cols = (jnp.arange(lacc, dtype=jnp.int32) + 1) % Wg
    mask = ((cols >= 1) & (cols <= Wo)).astype(jnp.float32).reshape(lacc, 1)

    operands = [x_in, w1_mat, b1, w2_mat, b2, mask]
    in_specs = [
        x_spec,
        pl.BlockSpec((9, Cin, Cout), lambda b: (0, 0, 0)),
        pl.BlockSpec((1, Cout), lambda b: (0, 0)),
        pl.BlockSpec((9, Cout, Cout), lambda b: (0, 0, 0)),
        pl.BlockSpec((1, Cout), lambda b: (0, 0)),
        pl.BlockSpec((lacc, 1), lambda b: (0, 0)),
    ]
    if has_proj:
        ssc, tsc = _fold_bn(params["bn_sc"])
        wsc_mat = (jnp.transpose(params["w_sc"], (2, 3, 1, 0)).reshape(Cin, Cout)
                   * ssc[None, :]).astype(compute_dtype)
        bsc = tsc.reshape(1, Cout).astype(jnp.float32)
        operands += [wsc_mat, bsc]
        in_specs += [pl.BlockSpec((Cin, Cout), lambda b: (0, 0)),
                     pl.BlockSpec((1, Cout), lambda b: (0, 0))]

    kernel = functools.partial(
        _residual_block_kernel,
        stride=stride, taps1=tuple(taps1), wg=Wg, lacc=lacc, cout=Cout,
        shortcut="project" if has_proj else "identity",
        compute_dtype=compute_dtype)

    # Advisory cost estimate for the XLA scheduler.
    flops = 2 * B * lacc * Cout * (9 * Cin + 9 * Cout + (Cin if has_proj else 0))
    bytes_acc = int(x_in.size * 4 + w1_mat.size * w1_mat.dtype.itemsize
                    + w2_mat.size * w2_mat.dtype.itemsize
                    + B * lacc * Cout * 4)

    # VMEM budgeting: fits the default scoped limit at block shapes; only raise
    # the cap when the per-step footprint is actually large (v5e default 16 MiB,
    # v7x physical 64 MiB).
    def _vmem_bytes(shape, itemsize):
        rows = 1
        for s in shape[:-1]:
            rows *= s
        return _ceil_to(rows, 8) * _ceil_to(shape[-1], 128) * itemsize

    est = (2 * (_vmem_bytes(x_in.shape[1:], 4) + _vmem_bytes((lacc, Cout), 4))
           + _vmem_bytes((lpad, Cout), 4)
           + 2 * _vmem_bytes((9 * max(Cin, Cout), Cout), 4))
    cp = dict(dimension_semantics=("parallel",))
    if est > 12 * 1024 * 1024:
        cp["vmem_limit_bytes"] = int(min(2 * est, 64 * 1024 * 1024))

    out_flat = pl.pallas_call(
        kernel,
        out_shape=jax.ShapeDtypeStruct((B, lacc, Cout), jnp.float32),
        grid=(B,),
        in_specs=in_specs,
        out_specs=pl.BlockSpec((1, lacc, Cout), lambda b: (b, 0, 0)),
        scratch_shapes=[pltpu.VMEM((lpad, Cout), jnp.float32)],
        compiler_params=pltpu.CompilerParams(**cp),
        cost_estimate=pl.CostEstimate(flops=flops, transcendentals=0,
                                      bytes_accessed=bytes_acc),
    )(*operands)

    # un-flatten: accumulator row i*Wg + j (j < Wo) holds output pixel (i, j)
    out_grid = jnp.pad(out_flat, ((0, 0), (0, Ho * Wg - lacc), (0, 0)))
    out_nhwc = out_grid.reshape(B, Ho, Wg, Cout)[:, :, :Wo, :]
    return jnp.transpose(out_nhwc, (0, 3, 1, 2))


# ---------------------------------------------------------------------------
# Pure-JAX reference (mirrors the PyTorch module, BN in eval mode)
# ---------------------------------------------------------------------------
def _conv_ref(x, w, stride, pad):
    return jax.lax.conv_general_dilated(
        x, w, (stride, stride), ((pad, pad), (pad, pad)),
        dimension_numbers=("NCHW", "OIHW", "NCHW"),
        precision=jax.lax.Precision.HIGHEST)


def _bn_ref(y, bn):
    g = bn["gamma"][None, :, None, None]
    b = bn["beta"][None, :, None, None]
    m = bn["mean"][None, :, None, None]
    v = bn["var"][None, :, None, None]
    return (y - m) / jnp.sqrt(v + bn["eps"]) * g + b


def residual_block_ref(x, params, stride):
    Cin = x.shape[1]
    Cout = params["w1"].shape[0]
    h = jax.nn.relu(_bn_ref(_conv_ref(x, params["w1"], stride, 1), params["bn1"]))
    left = _bn_ref(_conv_ref(h, params["w2"], 1, 1), params["bn2"])
    if stride != 1 or Cin != Cout:
        sc = _bn_ref(_conv_ref(x, params["w_sc"], stride, 0), params["bn_sc"])
    else:
        sc = x
    return jax.nn.relu(left + sc)


# ---------------------------------------------------------------------------
def _make_bn(key, c):
    k1, k2, k3, k4 = jax.random.split(key, 4)
    return {
        "gamma": 1.0 + 0.1 * jax.random.normal(k1, (c,), jnp.float32),
        "beta": 0.1 * jax.random.normal(k2, (c,), jnp.float32),
        "mean": 0.1 * jax.random.normal(k3, (c,), jnp.float32),
        "var": 1.0 + jax.random.uniform(k4, (c,), jnp.float32),
        "eps": 1e-5,
    }


def _make_params(key, cin, cout, stride):
    ks = jax.random.split(key, 6)
    params = {
        "w1": 0.2 * jax.random.normal(ks[0], (cout, cin, 3, 3), jnp.float32),
        "w2": 0.2 * jax.random.normal(ks[1], (cout, cout, 3, 3), jnp.float32),
        "bn1": _make_bn(ks[2], cout),
        "bn2": _make_bn(ks[3], cout),
    }
    if stride != 1 or cin != cout:
        params["w_sc"] = 0.2 * jax.random.normal(ks[4], (cout, cin, 1, 1),
                                                 jnp.float32)
        params["bn_sc"] = _make_bn(ks[5], cout)
    return params


if __name__ == "__main__":
    key = jax.random.PRNGKey(0)
    kx, kp1, kp2, kp3 = jax.random.split(key, 4)

    B, H, W = 2, 16, 16
    x = jax.random.normal(kx, (B, 4, H, W), dtype=jnp.float32)

    # bf16 MXU operands vs f32 HIGHEST-precision reference -> loose tolerance;
    # f32 operand runs get a tighter one.
    TOL_BF16 = dict(atol=5e-2, rtol=5e-2)
    TOL_F32 = dict(atol=2e-2, rtol=2e-2)

    # Case 1: identity shortcut (stride=1, Cin == Cout == 4), bf16 fast path
    p_id = _make_params(kp1, 4, 4, 1)
    ref1 = residual_block_ref(x, p_id, 1)
    y1 = jax.block_until_ready(residual_block_forward(x, p_id, 1, use_bf16=True))
    assert y1.shape == (B, 4, H, W)
    assert jnp.allclose(y1, ref1, **TOL_BF16), float(jnp.max(jnp.abs(y1 - ref1)))

    # Case 1b: same block with f32 operands
    y1f = jax.block_until_ready(residual_block_forward(x, p_id, 1, use_bf16=False))
    assert jnp.allclose(y1f, ref1, **TOL_F32), float(jnp.max(jnp.abs(y1f - ref1)))

    # Case 2: projection shortcut with downsampling (stride=2, Cin=4 -> Cout=8)
    p_pr = _make_params(kp2, 4, 8, 2)
    ref2 = residual_block_ref(x, p_pr, 2)
    y2 = jax.block_until_ready(residual_block_forward(x, p_pr, 2, use_bf16=True))
    assert y2.shape == (B, 8, H // 2, W // 2)
    assert jnp.allclose(y2, ref2, **TOL_BF16), float(jnp.max(jnp.abs(y2 - ref2)))

    # Case 2b: stride-2 projection with f32 operands
    y2f = jax.block_until_ready(residual_block_forward(x, p_pr, 2, use_bf16=False))
    assert jnp.allclose(y2f, ref2, **TOL_F32), float(jnp.max(jnp.abs(y2f - ref2)))

    # Case 3: projection shortcut without downsampling (stride=1, 4 -> 8)
    p_pr1 = _make_params(kp3, 4, 8, 1)
    ref3 = residual_block_ref(x, p_pr1, 1)
    y3 = jax.block_until_ready(residual_block_forward(x, p_pr1, 1, use_bf16=True))
    assert y3.shape == (B, 8, H, W)
    assert jnp.allclose(y3, ref3, **TOL_BF16), float(jnp.max(jnp.abs(y3 - ref3)))

    print("KERNEL_OK")
</pallas_src>

<mosaic_0001>
module attributes {stable_mosaic.version = 11 : i64} {
  func.func @_residual_block_kernel(%arg0: i32, %arg1: memref<1x324x4xf32, #tpu.memory_space<vmem>>, %arg2: memref<9x4x4xbf16, #tpu.memory_space<vmem>>, %arg3: memref<1x4xf32, #tpu.memory_space<vmem>>, %arg4: memref<9x4x4xbf16, #tpu.memory_space<vmem>>, %arg5: memref<1x4xf32, #tpu.memory_space<vmem>>, %arg6: memref<286x1xf32, #tpu.memory_space<vmem>>, %arg7: memref<1x286x4xf32, #tpu.memory_space<vmem>>, %arg8: memref<324x4xf32, #tpu.memory_space<vmem>>) attributes {dimension_semantics = [#tpu.dimension_semantics<parallel>], iteration_bounds = array<i64: 2>, scalar_prefetch = 0 : i64, scratch_operands = 1 : i64, tpu.core_type = #tpu.core_type<tc>, window_params = [{transform_indices = @transform_0, window_bounds = array<i64: 1, 324, 4>}, {pipeline_mode = #tpu.pipeline_mode<synchronous>, transform_indices = @transform_1, window_bounds = array<i64: 9, 4, 4>}, {pipeline_mode = #tpu.pipeline_mode<synchronous>, transform_indices = @transform_2, window_bounds = array<i64: 1, 4>}, {pipeline_mode = #tpu.pipeline_mode<synchronous>, transform_indices = @transform_3, window_bounds = array<i64: 9, 4, 4>}, {pipeline_mode = #tpu.pipeline_mode<synchronous>, transform_indices = @transform_4, window_bounds = array<i64: 1, 4>}, {pipeline_mode = #tpu.pipeline_mode<synchronous>, transform_indices = @transform_5, window_bounds = array<i64: 286, 1>}, {transform_indices = @transform_6, window_bounds = array<i64: 1, 286, 4>}]} {
    %cst = arith.constant 0.000000e+00 : f32
    %0 = vector.broadcast %cst : f32 to vector<286x4xf32>
    %c0 = arith.constant 0 : index
    %c0_0 = arith.constant 0 : index
    %c0_1 = arith.constant 0 : index
    %1 = vector.load %arg1[%c0, %c0_0, %c0_1] : memref<1x324x4xf32, #tpu.memory_space<vmem>>, vector<1x286x4xf32>
    %2 = vector.shape_cast %1 : vector<1x286x4xf32> to vector<286x4xf32>
    %3 = arith.truncf %2 : vector<286x4xf32> to vector<286x4xbf16>
    %c0_2 = arith.constant 0 : index
    %c0_3 = arith.constant 0 : index
    %c0_4 = arith.constant 0 : index
    %4 = vector.load %arg2[%c0_2, %c0_3, %c0_4] : memref<9x4x4xbf16, #tpu.memory_space<vmem>>, vector<1x4x4xbf16>
    %5 = vector.shape_cast %4 : vector<1x4x4xbf16> to vector<4x4xbf16>
    %cst_5 = arith.constant dense<0.000000e+00> : vector<286x4xf32>
    %6 = tpu.matmul %3, %5, %cst_5 {dimension_numbers = #tpu.dot_dimension_numbers<[1], [0], [0], [1], [0, 0, 1, 1], [], []>} : vector<286x4xbf16>, vector<4x4xbf16>, vector<286x4xf32> -> vector<286x4xf32>
    %7 = arith.addf %0, %6 : vector<286x4xf32>
    %c0_6 = arith.constant 0 : index
    %c1 = arith.constant 1 : index
    %c0_7 = arith.constant 0 : index
    %8 = vector.load %arg1[%c0_6, %c1, %c0_7] : memref<1x324x4xf32, #tpu.memory_space<vmem>>, vector<1x286x4xf32>
    %9 = vector.shape_cast %8 : vector<1x286x4xf32> to vector<286x4xf32>
    %10 = arith.truncf %9 : vector<286x4xf32> to vector<286x4xbf16>
    %c1_8 = arith.constant 1 : index
    %c0_9 = arith.constant 0 : index
    %c0_10 = arith.constant 0 : index
    %11 = vector.load %arg2[%c1_8, %c0_9, %c0_10] : memref<9x4x4xbf16, #tpu.memory_space<vmem>>, vector<1x4x4xbf16>
    %12 = vector.shape_cast %11 : vector<1x4x4xbf16> to vector<4x4xbf16>
    %cst_11 = arith.constant dense<0.000000e+00> : vector<286x4xf32>
    %13 = tpu.matmul %10, %12, %cst_11 {dimension_numbers = #tpu.dot_dimension_numbers<[1], [0], [0], [1], [0, 0, 1, 1], [], []>} : vector<286x4xbf16>, vector<4x4xbf16>, vector<286x4xf32> -> vector<286x4xf32>
    %14 = arith.addf %7, %13 : vector<286x4xf32>
    %c0_12 = arith.constant 0 : index
    %c2 = arith.constant 2 : index
    %c0_13 = arith.constant 0 : index
    %15 = vector.load %arg1[%c0_12, %c2, %c0_13] : memref<1x324x4xf32, #tpu.memory_space<vmem>>, vector<1x286x4xf32>
    %16 = vector.shape_cast %15 : vector<1x286x4xf32> to vector<286x4xf32>
    %17 = arith.truncf %16 : vector<286x4xf32> to vector<286x4xbf16>
    %c2_14 = arith.constant 2 : index
    %c0_15 = arith.constant 0 : index
    %c0_16 = arith.constant 0 : index
    %18 = vector.load %arg2[%c2_14, %c0_15, %c0_16] : memref<9x4x4xbf16, #tpu.memory_space<vmem>>, vector<1x4x4xbf16>
    %19 = vector.shape_cast %18 : vector<1x4x4xbf16> to vector<4x4xbf16>
    %cst_17 = arith.constant dense<0.000000e+00> : vector<286x4xf32>
    %20 = tpu.matmul %17, %19, %cst_17 {dimension_numbers = #tpu.dot_dimension_numbers<[1], [0], [0], [1], [0, 0, 1, 1], [], []>} : vector<286x4xbf16>, vector<4x4xbf16>, vector<286x4xf32> -> vector<286x4xf32>
    %21 = arith.addf %14, %20 : vector<286x4xf32>
    %c0_18 = arith.constant 0 : index
    %c18 = arith.constant 18 : index
    %c0_19 = arith.constant 0 : index
    %22 = vector.load %arg1[%c0_18, %c18, %c0_19] : memref<1x324x4xf32, #tpu.memory_space<vmem>>, vector<1x286x4xf32>
    %23 = vector.shape_cast %22 : vector<1x286x4xf32> to vector<286x4xf32>
    %24 = arith.truncf %23 : vector<286x4xf32> to vector<286x4xbf16>
    %c3 = arith.constant 3 : index
    %c0_20 = arith.constant 0 : index
    %c0_21 = arith.constant 0 : index
    %25 = vector.load %arg2[%c3, %c0_20, %c0_21] : memref<9x4x4xbf16, #tpu.memory_space<vmem>>, vector<1x4x4xbf16>
    %26 = vector.shape_cast %25 : vector<1x4x4xbf16> to vector<4x4xbf16>
    %cst_22 = arith.constant dense<0.000000e+00> : vector<286x4xf32>
    %27 = tpu.matmul %24, %26, %cst_22 {dimension_numbers = #tpu.dot_dimension_numbers<[1], [0], [0], [1], [0, 0, 1, 1], [], []>} : vector<286x4xbf16>, vector<4x4xbf16>, vector<286x4xf32> -> vector<286x4xf32>
    %28 = arith.addf %21, %27 : vector<286x4xf32>
    %c0_23 = arith.constant 0 : index
    %c19 = arith.constant 19 : index
    %c0_24 = arith.constant 0 : index
    %29 = vector.load %arg1[%c0_23, %c19, %c0_24] : memref<1x324x4xf32, #tpu.memory_space<vmem>>, vector<1x286x4xf32>
    %30 = vector.shape_cast %29 : vector<1x286x4xf32> to vector<286x4xf32>
    %31 = arith.truncf %30 : vector<286x4xf32> to vector<286x4xbf16>
    %c4 = arith.constant 4 : index
    %c0_25 = arith.constant 0 : index
    %c0_26 = arith.constant 0 : index
    %32 = vector.load %arg2[%c4, %c0_25, %c0_26] : memref<9x4x4xbf16, #tpu.memory_space<vmem>>, vector<1x4x4xbf16>
    %33 = vector.shape_cast %32 : vector<1x4x4xbf16> to vector<4x4xbf16>
    %cst_27 = arith.constant dense<0.000000e+00> : vector<286x4xf32>
    %34 = tpu.matmul %31, %33, %cst_27 {dimension_numbers = #tpu.dot_dimension_numbers<[1], [0], [0], [1], [0, 0, 1, 1], [], []>} : vector<286x4xbf16>, vector<4x4xbf16>, vector<286x4xf32> -> vector<286x4xf32>
    %35 = arith.addf %28, %34 : vector<286x4xf32>
    %c0_28 = arith.constant 0 : index
    %c20 = arith.constant 20 : index
    %c0_29 = arith.constant 0 : index
    %36 = vector.load %arg1[%c0_28, %c20, %c0_29] : memref<1x324x4xf32, #tpu.memory_space<vmem>>, vector<1x286x4xf32>
    %37 = vector.shape_cast %36 : vector<1x286x4xf32> to vector<286x4xf32>
    %38 = arith.truncf %37 : vector<286x4xf32> to vector<286x4xbf16>
    %c5 = arith.constant 5 : index
    %c0_30 = arith.constant 0 : index
    %c0_31 = arith.constant 0 : index
    %39 = vector.load %arg2[%c5, %c0_30, %c0_31] : memref<9x4x4xbf16, #tpu.memory_space<vmem>>, vector<1x4x4xbf16>
    %40 = vector.shape_cast %39 : vector<1x4x4xbf16> to vector<4x4xbf16>
    %cst_32 = arith.constant dense<0.000000e+00> : vector<286x4xf32>
    %41 = tpu.matmul %38, %40, %cst_32 {dimension_numbers = #tpu.dot_dimension_numbers<[1], [0], [0], [1], [0, 0, 1, 1], [], []>} : vector<286x4xbf16>, vector<4x4xbf16>, vector<286x4xf32> -> vector<286x4xf32>
    %42 = arith.addf %35, %41 : vector<286x4xf32>
    %c0_33 = arith.constant 0 : index
    %c36 = arith.constant 36 : index
    %c0_34 = arith.constant 0 : index
    %43 = vector.load %arg1[%c0_33, %c36, %c0_34] : memref<1x324x4xf32, #tpu.memory_space<vmem>>, vector<1x286x4xf32>
    %44 = vector.shape_cast %43 : vector<1x286x4xf32> to vector<286x4xf32>
    %45 = arith.truncf %44 : vector<286x4xf32> to vector<286x4xbf16>
    %c6 = arith.constant 6 : index
    %c0_35 = arith.constant 0 : index
    %c0_36 = arith.constant 0 : index
    %46 = vector.load %arg2[%c6, %c0_35, %c0_36] : memref<9x4x4xbf16, #tpu.memory_space<vmem>>, vector<1x4x4xbf16>
    %47 = vector.shape_cast %46 : vector<1x4x4xbf16> to vector<4x4xbf16>
    %cst_37 = arith.constant dense<0.000000e+00> : vector<286x4xf32>
    %48 = tpu.matmul %45, %47, %cst_37 {dimension_numbers = #tpu.dot_dimension_numbers<[1], [0], [0], [1], [0, 0, 1, 1], [], []>} : vector<286x4xbf16>, vector<4x4xbf16>, vector<286x4xf32> -> vector<286x4xf32>
    %49 = arith.addf %42, %48 : vector<286x4xf32>
    %c0_38 = arith.constant 0 : index
    %c37 = arith.constant 37 : index
    %c0_39 = arith.constant 0 : index
    %50 = vector.load %arg1[%c0_38, %c37, %c0_39] : memref<1x324x4xf32, #tpu.memory_space<vmem>>, vector<1x286x4xf32>
    %51 = vector.shape_cast %50 : vector<1x286x4xf32> to vector<286x4xf32>
    %52 = arith.truncf %51 : vector<286x4xf32> to vector<286x4xbf16>
    %c7 = arith.constant 7 : index
    %c0_40 = arith.constant 0 : index
    %c0_41 = arith.constant 0 : index
    %53 = vector.load %arg2[%c7, %c0_40, %c0_41] : memref<9x4x4xbf16, #tpu.memory_space<vmem>>, vector<1x4x4xbf16>
    %54 = vector.shape_cast %53 : vector<1x4x4xbf16> to vector<4x4xbf16>
    %cst_42 = arith.constant dense<0.000000e+00> : vector<286x4xf32>
    %55 = tpu.matmul %52, %54, %cst_42 {dimension_numbers = #tpu.dot_dimension_numbers<[1], [0], [0], [1], [0, 0, 1, 1], [], []>} : vector<286x4xbf16>, vector<4x4xbf16>, vector<286x4xf32> -> vector<286x4xf32>
    %56 = arith.addf %49, %55 : vector<286x4xf32>
    %c0_43 = arith.constant 0 : index
    %c38 = arith.constant 38 : index
    %c0_44 = arith.constant 0 : index
    %57 = vector.load %arg1[%c0_43, %c38, %c0_44] : memref<1x324x4xf32, #tpu.memory_space<vmem>>, vector<1x286x4xf32>
    %58 = vector.shape_cast %57 : vector<1x286x4xf32> to vector<286x4xf32>
    %59 = arith.truncf %58 : vector<286x4xf32> to vector<286x4xbf16>
    %c8 = arith.constant 8 : index
    %c0_45 = arith.constant 0 : index
    %c0_46 = arith.constant 0 : index
    %60 = vector.load %arg2[%c8, %c0_45, %c0_46] : memref<9x4x4xbf16, #tpu.memory_space<vmem>>, vector<1x4x4xbf16>
    %61 = vector.shape_cast %60 : vector<1x4x4xbf16> to vector<4x4xbf16>
    %cst_47 = arith.constant dense<0.000000e+00> : vector<286x4xf32>
    %62 = tpu.matmul %59, %61, %cst_47 {dimension_numbers = #tpu.dot_dimension_numbers<[1], [0], [0], [1], [0, 0, 1, 1], [], []>} : vector<286x4xbf16>, vector<4x4xbf16>, vector<286x4xf32> -> vector<286x4xf32>
    %63 = arith.addf %56, %62 : vector<286x4xf32>
    %c0_48 = arith.constant 0 : index
    %c0_49 = arith.constant 0 : index
    %64 = vector.load %arg3[%c0_48, %c0_49] : memref<1x4xf32, #tpu.memory_space<vmem>>, vector<1x4xf32>
    %65 = vector.broadcast %64 : vector<1x4xf32> to vector<286x4xf32>
    %66 = arith.addf %63, %65 : vector<286x4xf32>
    %cst_50 = arith.constant 0.000000e+00 : f32
    %67 = vector.broadcast %cst_50 : f32 to vector<286x4xf32>
    %68 = arith.maximumf %66, %67 : vector<286x4xf32>
    %c0_51 = arith.constant 0 : index
    %c0_52 = arith.constant 0 : index
    %69 = vector.load %arg6[%c0_51, %c0_52] : memref<286x1xf32, #tpu.memory_space<vmem>>, vector<286x1xf32>
    %70 = vector.broadcast %69 : vector<286x1xf32> to vector<286x4xf32>
    %71 = arith.mulf %68, %70 : vector<286x4xf32>
    %cst_53 = arith.constant 0.000000e+00 : f32
    %72 = vector.broadcast %cst_53 : f32 to vector<324x4xf32>
    %c0_54 = arith.constant 0 : index
    %c0_55 = arith.constant 0 : index
    %73 = vector.load %arg8[%c0_54, %c0_55] : memref<324x4xf32, #tpu.memory_space<vmem>>, vector<324x4xf32>
    tpu.vector_store %arg8[%c0_54, %c0_55], %72 {strides = array<i32>} : memref<324x4xf32, #tpu.memory_space<vmem>>, vector<324x4xf32>,
    %c19_56 = arith.constant 19 : index
    %c0_57 = arith.constant 0 : index
    %74 = vector.load %arg8[%c19_56, %c0_57] : memref<324x4xf32, #tpu.memory_space<vmem>>, vector<286x4xf32>
    tpu.vector_store %arg8[%c19_56, %c0_57], %71 {strides = array<i32>} : memref<324x4xf32, #tpu.memory_space<vmem>>, vector<286x4xf32>,
    %cst_58 = arith.constant 0.000000e+00 : f32
    %75 = vector.broadcast %cst_58 : f32 to vector<286x4xf32>
    %c0_59 = arith.constant 0 : index
    %c0_60 = arith.constant 0 : index
    %76 = vector.load %arg8[%c0_59, %c0_60] : memref<324x4xf32, #tpu.memory_space<vmem>>, vector<286x4xf32>
    %77 = arith.truncf %76 : vector<286x4xf32> to vector<286x4xbf16>
    %c0_61 = arith.constant 0 : index
    %c0_62 = arith.constant 0 : index
    %c0_63 = arith.constant 0 : index
    %78 = vector.load %arg4[%c0_61, %c0_62, %c0_63] : memref<9x4x4xbf16, #tpu.memory_space<vmem>>, vector<1x4x4xbf16>
    %79 = vector.shape_cast %78 : vector<1x4x4xbf16> to vector<4x4xbf16>
    %cst_64 = arith.constant dense<0.000000e+00> : vector<286x4xf32>
    %80 = tpu.matmul %77, %79, %cst_64 {dimension_numbers = #tpu.dot_dimension_numbers<[1], [0], [0], [1], [0, 0, 1, 1], [], []>} : vector<286x4xbf16>, vector<4x4xbf16>, vector<286x4xf32> -> vector<286x4xf32>
    %81 = arith.addf %75, %80 : vector<286x4xf32>
    %c1_65 = arith.constant 1 : index
    %c0_66 = arith.constant 0 : index
    %82 = vector.load %arg8[%c1_65, %c0_66] : memref<324x4xf32, #tpu.memory_space<vmem>>, vector<286x4xf32>
    %83 = arith.truncf %82 : vector<286x4xf32> to vector<286x4xbf16>
    %c1_67 = arith.constant 1 : index
    %c0_68 = arith.constant 0 : index
    %c0_69 = arith.constant 0 : index
    %84 = vector.load %arg4[%c1_67, %c0_68, %c0_69] : memref<9x4x4xbf16, #tpu.memory_space<vmem>>, vector<1x4x4xbf16>
    %85 = vector.shape_cast %84 : vector<1x4x4xbf16> to vector<4x4xbf16>
    %cst_70 = arith.constant dense<0.000000e+00> : vector<286x4xf32>
    %86 = tpu.matmul %83, %85, %cst_70 {dimension_numbers = #tpu.dot_dimension_numbers<[1], [0], [0], [1], [0, 0, 1, 1], [], []>} : vector<286x4xbf16>, vector<4x4xbf16>, vector<286x4xf32> -> vector<286x4xf32>
    %87 = arith.addf %81, %86 : vector<286x4xf32>
    %c2_71 = arith.constant 2 : index
    %c0_72 = arith.constant 0 : index
    %88 = vector.load %arg8[%c2_71, %c0_72] : memref<324x4xf32, #tpu.memory_space<vmem>>, vector<286x4xf32>
    %89 = arith.truncf %88 : vector<286x4xf32> to vector<286x4xbf16>
    %c2_73 = arith.constant 2 : index
    %c0_74 = arith.constant 0 : index
    %c0_75 = arith.constant 0 : index
    %90 = vector.load %arg4[%c2_73, %c0_74, %c0_75] : memref<9x4x4xbf16, #tpu.memory_space<vmem>>, vector<1x4x4xbf16>
    %91 = vector.shape_cast %90 : vector<1x4x4xbf16> to vector<4x4xbf16>
    %cst_76 = arith.constant dense<0.000000e+00> : vector<286x4xf32>
    %92 = tpu.matmul %89, %91, %cst_76 {dimension_numbers = #tpu.dot_dimension_numbers<[1], [0], [0], [1], [0, 0, 1, 1], [], []>} : vector<286x4xbf16>, vector<4x4xbf16>, vector<286x4xf32> -> vector<286x4xf32>
    %93 = arith.addf %87, %92 : vector<286x4xf32>
    %c18_77 = arith.constant 18 : index
    %c0_78 = arith.constant 0 : index
    %94 = vector.load %arg8[%c18_77, %c0_78] : memref<324x4xf32, #tpu.memory_space<vmem>>, vector<286x4xf32>
    %95 = arith.truncf %94 : vector<286x4xf32> to vector<286x4xbf16>
    %c3_79 = arith.constant 3 : index
    %c0_80 = arith.constant 0 : index
    %c0_81 = arith.constant 0 : index
    %96 = vector.load %arg4[%c3_79, %c0_80, %c0_81] : memref<9x4x4xbf16, #tpu.memory_space<vmem>>, vector<1x4x4xbf16>
    %97 = vector.shape_cast %96 : vector<1x4x4xbf16> to vector<4x4xbf16>
    %cst_82 = arith.constant dense<0.000000e+00> : vector<286x4xf32>
    %98 = tpu.matmul %95, %97, %cst_82 {dimension_numbers = #tpu.dot_dimension_numbers<[1], [0], [0], [1], [0, 0, 1, 1], [], []>} : vector<286x4xbf16>, vector<4x4xbf16>, vector<286x4xf32> -> vector<286x4xf32>
    %99 = arith.addf %93, %98 : vector<286x4xf32>
    %c19_83 = arith.constant 19 : index
    %c0_84 = arith.constant 0 : index
    %100 = vector.load %arg8[%c19_83, %c0_84] : memref<324x4xf32, #tpu.memory_space<vmem>>, vector<286x4xf32>
    %101 = arith.truncf %100 : vector<286x4xf32> to vector<286x4xbf16>
    %c4_85 = arith.constant 4 : index
    %c0_86 = arith.constant 0 : index
    %c0_87 = arith.constant 0 : index
    %102 = vector.load %arg4[%c4_85, %c0_86, %c0_87] : memref<9x4x4xbf16, #tpu.memory_space<vmem>>, vector<1x4x4xbf16>
    %103 = vector.shape_cast %102 : vector<1x4x4xbf16> to vector<4x4xbf16>
    %cst_88 = arith.constant dense<0.000000e+00> : vector<286x4xf32>
    %104 = tpu.matmul %101, %103, %cst_88 {dimension_numbers = #tpu.dot_dimension_numbers<[1], [0], [0], [1], [0, 0, 1, 1], [], []>} : vector<286x4xbf16>, vector<4x4xbf16>, vector<286x4xf32> -> vector<286x4xf32>
    %105 = arith.addf %99, %104 : vector<286x4xf32>
    %c20_89 = arith.constant 20 : index
    %c0_90 = arith.constant 0 : index
    %106 = vector.load %arg8[%c20_89, %c0_90] : memref<324x4xf32, #tpu.memory_space<vmem>>, vector<286x4xf32>
    %107 = arith.truncf %106 : vector<286x4xf32> to vector<286x4xbf16>
    %c5_91 = arith.constant 5 : index
    %c0_92 = arith.constant 0 : index
    %c0_93 = arith.constant 0 : index
    %108 = vector.load %arg4[%c5_91, %c0_92, %c0_93] : memref<9x4x4xbf16, #tpu.memory_space<vmem>>, vector<1x4x4xbf16>
    %109 = vector.shape_cast %108 : vector<1x4x4xbf16> to vector<4x4xbf16>
    %cst_94 = arith.constant dense<0.000000e+00> : vector<286x4xf32>
    %110 = tpu.matmul %107, %109, %cst_94 {dimension_numbers = #tpu.dot_dimension_numbers<[1], [0], [0], [1], [0, 0, 1, 1], [], []>} : vector<286x4xbf16>, vector<4x4xbf16>, vector<286x4xf32> -> vector<286x4xf32>
    %111 = arith.addf %105, %110 : vector<286x4xf32>
    %c36_95 = arith.constant 36 : index
    %c0_96 = arith.constant 0 : index
    %112 = vector.load %arg8[%c36_95, %c0_96] : memref<324x4xf32, #tpu.memory_space<vmem>>, vector<286x4xf32>
    %113 = arith.truncf %112 : vector<286x4xf32> to vector<286x4xbf16>
    %c6_97 = arith.constant 6 : index
    %c0_98 = arith.constant 0 : index
    %c0_99 = arith.constant 0 : index
    %114 = vector.load %arg4[%c6_97, %c0_98, %c0_99] : memref<9x4x4xbf16, #tpu.memory_space<vmem>>, vector<1x4x4xbf16>
    %115 = vector.shape_cast %114 : vector<1x4x4xbf16> to vector<4x4xbf16>
    %cst_100 = arith.constant dense<0.000000e+00> : vector<286x4xf32>
    %116 = tpu.matmul %113, %115, %cst_100 {dimension_numbers = #tpu.dot_dimension_numbers<[1], [0], [0], [1], [0, 0, 1, 1], [], []>} : vector<286x4xbf16>, vector<4x4xbf16>, vector<286x4xf32> -> vector<286x4xf32>
    %117 = arith.addf %111, %116 : vector<286x4xf32>
    %c37_101 = arith.constant 37 : index
    %c0_102 = arith.constant 0 : index
    %118 = vector.load %arg8[%c37_101, %c0_102] : memref<324x4xf32, #tpu.memory_space<vmem>>, vector<286x4xf32>
    %119 = arith.truncf %118 : vector<286x4xf32> to vector<286x4xbf16>
    %c7_103 = arith.constant 7 : index
    %c0_104 = arith.constant 0 : index
    %c0_105 = arith.constant 0 : index
    %120 = vector.load %arg4[%c7_103, %c0_104, %c0_105] : memref<9x4x4xbf16, #tpu.memory_space<vmem>>, vector<1x4x4xbf16>
    %121 = vector.shape_cast %120 : vector<1x4x4xbf16> to vector<4x4xbf16>
    %cst_106 = arith.constant dense<0.000000e+00> : vector<286x4xf32>
    %122 = tpu.matmul %119, %121, %cst_106 {dimension_numbers = #tpu.dot_dimension_numbers<[1], [0], [0], [1], [0, 0, 1, 1], [], []>} : vector<286x4xbf16>, vector<4x4xbf16>, vector<286x4xf32> -> vector<286x4xf32>
    %123 = arith.addf %117, %122 : vector<286x4xf32>
    %c38_107 = arith.constant 38 : index
    %c0_108 = arith.constant 0 : index
    %124 = vector.load %arg8[%c38_107, %c0_108] : memref<324x4xf32, #tpu.memory_space<vmem>>, vector<286x4xf32>
    %125 = arith.truncf %124 : vector<286x4xf32> to vector<286x4xbf16>
    %c8_109 = arith.constant 8 : index
    %c0_110 = arith.constant 0 : index
    %c0_111 = arith.constant 0 : index
    %126 = vector.load %arg4[%c8_109, %c0_110, %c0_111] : memref<9x4x4xbf16, #tpu.memory_space<vmem>>, vector<1x4x4xbf16>
    %127 = vector.shape_cast %126 : vector<1x4x4xbf16> to vector<4x4xbf16>
    %cst_112 = arith.constant dense<0.000000e+00> : vector<286x4xf32>
    %128 = tpu.matmul %125, %127, %cst_112 {dimension_numbers = #tpu.dot_dimension_numbers<[1], [0], [0], [1], [0, 0, 1, 1], [], []>} : vector<286x4xbf16>, vector<4x4xbf16>, vector<286x4xf32> -> vector<286x4xf32>
    %129 = arith.addf %123, %128 : vector<286x4xf32>
    %c0_113 = arith.constant 0 : index
    %c0_114 = arith.constant 0 : index
    %130 = vector.load %arg5[%c0_113, %c0_114] : memref<1x4xf32, #tpu.memory_space<vmem>>, vector<1x4xf32>
    %131 = vector.broadcast %130 : vector<1x4xf32> to vector<286x4xf32>
    %132 = arith.addf %129, %131 : vector<286x4xf32>
    %c0_115 = arith.constant 0 : index
    %c19_116 = arith.constant 19 : index
    %c0_117 = arith.constant 0 : index
    %133 = vector.load %arg1[%c0_115, %c19_116, %c0_117] : memref<1x324x4xf32, #tpu.memory_space<vmem>>, vector<1x286x4xf32>
    %134 = vector.shape_cast %133 : vector<1x286x4xf32> to vector<286x4xf32>
    %135 = arith.addf %132, %134 : vector<286x4xf32>
    %cst_118 = arith.constant 0.000000e+00 : f32
    %136 = vector.broadcast %cst_118 : f32 to vector<286x4xf32>
    %137 = arith.maximumf %135, %136 : vector<286x4xf32>
    %c0_119 = arith.constant 0 : index
    %c0_120 = arith.constant 0 : index
    %c0_121 = arith.constant 0 : index
    %138 = vector.load %arg7[%c0_119, %c0_120, %c0_121] : memref<1x286x4xf32, #tpu.memory_space<vmem>>, vector<1x286x4xf32>
    %139 = vector.shape_cast %138 : vector<1x286x4xf32> to vector<286x4xf32>
    %140 = vector.shape_cast %137 : vector<286x4xf32> to vector<1x286x4xf32>
    tpu.vector_store %arg7[%c0_119, %c0_120, %c0_121], %140 {strides = array<i32>} : memref<1x286x4xf32, #tpu.memory_space<vmem>>, vector<1x286x4xf32>,
    return
  }
  func.func @transform_0(%arg0: i32) -> (i32, i32, i32) {
    %c0_i32 = arith.constant 0 : i32
    %c0_i32_0 = arith.constant 0 : i32
    %c0_i32_1 = arith.constant 0 : i32
    return %arg0, %c0_i32, %c0_i32_0 : i32, i32, i32
  }
  func.func @transform_1(%arg0: i32) -> (i32, i32, i32) {
    %c0_i32 = arith.constant 0 : i32
    %c0_i32_0 = arith.constant 0 : i32
    %c0_i32_1 = arith.constant 0 : i32
    %c0_i32_2 = arith.constant 0 : i32
    return %c0_i32, %c0_i32_0, %c0_i32_1 : i32, i32, i32
  }
  func.func @transform_2(%arg0: i32) -> (i32, i32) {
    %c0_i32 = arith.constant 0 : i32
    %c0_i32_0 = arith.constant 0 : i32
    %c0_i32_1 = arith.constant 0 : i32
    return %c0_i32, %c0_i32_0 : i32, i32
  }
  func.func @transform_3(%arg0: i32) -> (i32, i32, i32) {
    %c0_i32 = arith.constant 0 : i32
    %c0_i32_0 = arith.constant 0 : i32
    %c0_i32_1 = arith.constant 0 : i32
    %c0_i32_2 = arith.constant 0 : i32
    return %c0_i32, %c0_i32_0, %c0_i32_1 : i32, i32, i32
  }
  func.func @transform_4(%arg0: i32) -> (i32, i32) {
    %c0_i32 = arith.constant 0 : i32
    %c0_i32_0 = arith.constant 0 : i32
    %c0_i32_1 = arith.constant 0 : i32
    return %c0_i32, %c0_i32_0 : i32, i32
  }
  func.func @transform_5(%arg0: i32) -> (i32, i32) {
    %c0_i32 = arith.constant 0 : i32
    %c0_i32_0 = arith.constant 0 : i32
    %c0_i32_1 = arith.constant 0 : i32
    return %c0_i32, %c0_i32_0 : i32, i32
  }
  func.func @transform_6(%arg0: i32) -> (i32, i32, i32) {
    %c0_i32 = arith.constant 0 : i32
    %c0_i32_0 = arith.constant 0 : i32
    %c0_i32_1 = arith.constant 0 : i32
    return %arg0, %c0_i32, %c0_i32_0 : i32, i32, i32
  }
}

</mosaic_0001>

<llo_original>
// kernel: tpu_custom_call.1
$region0: #{tpu_custom_call.1}
  #allocation0 [shape = 'u32[]', space=smem, size = 0x4, offset = 0x4, fixed_abs, tag = 'smem constant byte address 0x4 - core index']
  #allocation1 [shape = 'u32[72,128]{1,0:T(1,128)}', space=vmem, size = 0x9000, scoped, tag = 'internal scratch']
  #allocation2 [shape = 'f32[324,4]{1,0:T(8,128)}', space=vmem, size = 0x29000, scoped, tag = 'scratch operand']
  %s0 = inlined_call_operand.vmem [shape: f32[2,324,4], index: 0, kind: input, shape index: {}]
  %s1 = inlined_call_operand.vmem [shape: bf16[9,4,4], index: 1, kind: input, shape index: {}]
  %s2 = inlined_call_operand.vmem [shape: f32[1,4], index: 2, kind: input, shape index: {}]
  %s3 = inlined_call_operand.vmem [shape: bf16[9,4,4], index: 3, kind: input, shape index: {}]
  %s4 = inlined_call_operand.vmem [shape: f32[1,4], index: 4, kind: input, shape index: {}]
  %s5 = inlined_call_operand.vmem [shape: f32[286,1], index: 5, kind: input, shape index: {}]
  %s6 = inlined_call_operand.vmem [shape: f32[2,286,4], index: 6, kind: output, shape index: {}]
  %s7 = sld [smem:[#allocation0]]
  $region57: #{tpu_custom_call.1} parent=0
    _
  %s9 = ssub.s32 1, %s7
  %s10 = scalar_select 0, %s9, %s7
  loop: start=0, step=1, limit=4
  $region2: #{tpu_custom_call.1} parent=0 // loop_pre_header
    _
  $region3: #{tpu_custom_call.1} parent=0 // loop_header
    %s12 = sphi 0, %s16
    %p13 = scmp.ge.s32.totalorder %s12, 4
    %s22 = sphi 0, %s24
    %s25 = sphi 0, %s22
    %s26 = sphi 0, %s25
    %s42 = sphi 0, %s26
    %s46 = sphi 0, %s46
    %s48 = sphi 0, %s46
    %s49 = sphi 0, %s48
    %s63 = sphi 0, %s49
    %s67 = sphi 0, %s67
    %s69 = sphi 0, %s67
    %s70 = sphi 0, %s69
    %s84 = sphi 0, %s70
    %s88 = sphi 0, %s88
    %s90 = sphi 0, %s88
    %s91 = sphi 0, %s90
    %s105 = sphi 0, %s91
    %s109 = sphi 0, %s109
    %s111 = sphi 0, %s109
    %s112 = sphi 0, %s111
    %s126 = sphi 0, %s112
    %s130 = sphi 0, %s130
    %s132 = sphi 0, %s130
    %s133 = sphi 0, %s132
    %s147 = sphi 0, %s133
    %s153 = sphi 0, %s155
    %s156 = sphi 0, %s153
    %s157 = sphi 0, %s156
    %s173 = sphi 0, %s157
  $region4: #{tpu_custom_call.1} parent=0 // loop_header_branch
    %15 = sbr.rel (%p13) target = $region8
  $region5: #{tpu_custom_call.1} parent=0 // loop_body
    %s17 = ssub.s32 %s12, 1
    %s18 = ssub.s32 %s12, 2
    %s19 = sadd.s32 %s12, 1
    %s20 = ssub.s32 %s12, %s19
    %p21 = scmp.eq.s32.totalorder %s20, 0
    %s23 = sadd.s32 %s22, 1
    %s24 = scalar_select %p21, %s22, %s23
    %p27 = pneg %p21
    %p28 = scmp.eq.s32.totalorder %s12, 1
    %p29 = por %p27, %p28
    %p30 = scmp.ne.s32.totalorder %s22, %s25
    %p31 = scmp.eq.s32.totalorder %s12, 0
    %p32 = por %p30, %p31
    %p33 = scmp.ne.s32.totalorder %s22, %s25
    %p34 = scmp.eq.s32.totalorder %s17, 1
    %p35 = por %p33, %p34
    %p36 = scmp.ne.s32.totalorder %s25, %s26
    %p37 = scmp.eq.s32.totalorder %s17, 0
    %p38 = por %p36, %p37
    %p39 = scmp.ne.s32.totalorder %s25, %s26
    %p40 = scmp.eq.s32.totalorder %s18, 1
    %p41 = por %p39, %p40
    %p43 = scmp.ne.s32.totalorder %s26, %s42
    %p44 = scmp.eq.s32.totalorder %s18, 0
    %p45 = por %p43, %p44
    %s47 = sadd.s32 %s46, 1
    %p50 = scmp.eq.s32.totalorder %s12, 1
    %p51 = scmp.ne.s32.totalorder %s46, %s48
    %p52 = scmp.eq.s32.totalorder %s12, 0
    %p53 = por %p51, %p52
    %p54 = scmp.ne.s32.totalorder %s46, %s48
    %p55 = scmp.eq.s32.totalorder %s17, 1
    %p56 = por %p54, %p55
    %p57 = scmp.ne.s32.totalorder %s48, %s49
    %p58 = scmp.eq.s32.totalorder %s17, 0
    %p59 = por %p57, %p58
    %p60 = scmp.ne.s32.totalorder %s48, %s49
    %p61 = scmp.eq.s32.totalorder %s18, 1
    %p62 = por %p60, %p61
    %p64 = scmp.ne.s32.totalorder %s49, %s63
    %p65 = scmp.eq.s32.totalorder %s18, 0
    %p66 = por %p64, %p65
    %s68 = sadd.s32 %s67, 1
    %p71 = scmp.eq.s32.totalorder %s12, 1
    %p72 = scmp.ne.s32.totalorder %s67, %s69
    %p73 = scmp.eq.s32.totalorder %s12, 0
    %p74 = por %p72, %p73
    %p75 = scmp.ne.s32.totalorder %s67, %s69
    %p76 = scmp.eq.s32.totalorder %s17, 1
    %p77 = por %p75, %p76
    %p78 = scmp.ne.s32.totalorder %s69, %s70
    %p79 = scmp.eq.s32.totalorder %s17, 0
    %p80 = por %p78, %p79
    %p81 = scmp.ne.s32.totalorder %s69, %s70
    %p82 = scmp.eq.s32.totalorder %s18, 1
    %p83 = por %p81, %p82
    %p85 = scmp.ne.s32.totalorder %s70, %s84
    %p86 = scmp.eq.s32.totalorder %s18, 0
    %p87 = por %p85, %p86
    %s89 = sadd.s32 %s88, 1
    %p92 = scmp.eq.s32.totalorder %s12, 1
    %p93 = scmp.ne.s32.totalorder %s88, %s90
    %p94 = scmp.eq.s32.totalorder %s12, 0
    %p95 = por %p93, %p94
    %p96 = scmp.ne.s32.totalorder %s88, %s90
    %p97 = scmp.eq.s32.totalorder %s17, 1
    %p98 = por %p96, %p97
    %p99 = scmp.ne.s32.totalorder %s90, %s91
    %p100 = scmp.eq.s32.totalorder %s17, 0
    %p101 = por %p99, %p100
    %p102 = scmp.ne.s32.totalorder %s90, %s91
    %p103 = scmp.eq.s32.totalorder %s18, 1
    %p104 = por %p102, %p103
    %p106 = scmp.ne.s32.totalorder %s91, %s105
    %p107 = scmp.eq.s32.totalorder %s18, 0
    %p108 = por %p106, %p107
    %s110 = sadd.s32 %s109, 1
    %p113 = scmp.eq.s32.totalorder %s12, 1
    %p114 = scmp.ne.s32.totalorder %s109, %s111
    %p115 = scmp.eq.s32.totalorder %s12, 0
    %p116 = por %p114, %p115
    %p117 = scmp.ne.s32.totalorder %s109, %s111
    %p118 = scmp.eq.s32.totalorder %s17, 1
    %p119 = por %p117, %p118
    %p120 = scmp.ne.s32.totalorder %s111, %s112
    %p121 = scmp.eq.s32.totalorder %s17, 0
    %p122 = por %p120, %p121
    %p123 = scmp.ne.s32.totalorder %s111, %s112
    %p124 = scmp.eq.s32.totalorder %s18, 1
    %p125 = por %p123, %p124
    %p127 = scmp.ne.s32.totalorder %s112, %s126
    %p128 = scmp.eq.s32.totalorder %s18, 0
    %p129 = por %p127, %p128
    %s131 = sadd.s32 %s130, 1
    %p134 = scmp.eq.s32.totalorder %s12, 1
    %p135 = scmp.ne.s32.totalorder %s130, %s132
    %p136 = scmp.eq.s32.totalorder %s12, 0
    %p137 = por %p135, %p136
    %p138 = scmp.ne.s32.totalorder %s130, %s132
    %p139 = scmp.eq.s32.totalorder %s17, 1
    %p140 = por %p138, %p139
    %p141 = scmp.ne.s32.totalorder %s132, %s133
    %p142 = scmp.eq.s32.totalorder %s17, 0
    %p143 = por %p141, %p142
    %p144 = scmp.ne.s32.totalorder %s132, %s133
    %p145 = scmp.eq.s32.totalorder %s18, 1
    %p146 = por %p144, %p145
    %p148 = scmp.ne.s32.totalorder %s133, %s147
    %p149 = scmp.eq.s32.totalorder %s18, 0
    %p150 = por %p148, %p149
    %s151 = ssub.s32 %s12, %s19
    %p152 = scmp.eq.s32.totalorder %s151, 0
    %s154 = sadd.s32 %s153, 1
    %s155 = scalar_select %p152, %s153, %s154
    %p158 = pneg %p152
    %p159 = scmp.eq.s32.totalorder %s12, 1
    %p160 = por %p158, %p159
    %p161 = scmp.ne.s32.totalorder %s153, %s156
    %p162 = scmp.eq.s32.totalorder %s12, 0
    %p163 = por %p161, %p162
    %p164 = scmp.ne.s32.totalorder %s153, %s156
    %p165 = scmp.eq.s32.totalorder %s17, 1
    %p166 = por %p164, %p165
    %p167 = scmp.ne.s32.totalorder %s156, %s157
    %p168 = scmp.eq.s32.totalorder %s17, 0
    %p169 = por %p167, %p168
    %p170 = scmp.ne.s32.totalorder %s156, %s157
    %p171 = scmp.eq.s32.totalorder %s18, 1
    %p172 = por %p170, %p171
    %p174 = scmp.ne.s32.totalorder %s157, %s173
    %p175 = scmp.eq.s32.totalorder %s18, 0
    %p176 = por %p174, %p175
    %p177 = scmp.le.s32.totalorder 1, %s12
    %p178 = scmp.lt.s32.totalorder %s12, 3
    %p179 = pnand %p177, %p178
    %p180 = pneg %p179
    // Predicated region
    $region9: #{tpu_custom_call.1} parent=5 // pred_check
      _
    $region10: #{tpu_custom_call.1} parent=5 // pred_check_branch
      %182 = sbr.rel (%p179) target = $region12
    $region11: #{tpu_custom_call.1} parent=5 // pred_region
      %s183 = ssub.s32 %s12, 1
      // Predicated region
      $region13: #{tpu_custom_call.1} parent=11 // pred_check
        %p184 = pneg %p59
      $region14: #{tpu_custom_call.1} parent=11 // pred_check_branch
        %186 = sbr.rel (%p184) target = $region16
      $region15: #{tpu_custom_call.1} parent=11 // pred_region
        _
      $region16: #{tpu_custom_call.1} parent=11 // pred_fallthru
        _
      // Predicated region
      $region17: #{tpu_custom_call.1} parent=11 // pred_check
        %p187 = pneg %p80
      $region18: #{tpu_custom_call.1} parent=11 // pred_check_branch
        %189 = sbr.rel (%p187) target = $region20
      $region19: #{tpu_custom_call.1} parent=11 // pred_region
        _
      $region20: #{tpu_custom_call.1} parent=11 // pred_fallthru
        _
      // Predicated region
      $region21: #{tpu_custom_call.1} parent=11 // pred_check
        %p190 = pneg %p101
      $region22: #{tpu_custom_call.1} parent=11 // pred_check_branch
        %192 = sbr.rel (%p190) target = $region24
      $region23: #{tpu_custom_call.1} parent=11 // pred_region
        _
      $region24: #{tpu_custom_call.1} parent=11 // pred_fallthru
        _
      // Predicated region
      $region25: #{tpu_custom_call.1} parent=11 // pred_check
        %p193 = pneg %p122
      $region26: #{tpu_custom_call.1} parent=11 // pred_check_branch
        %195 = sbr.rel (%p193) target = $region28
      $region27: #{tpu_custom_call.1} parent=11 // pred_region
        _
      $region28: #{tpu_custom_call.1} parent=11 // pred_fallthru
        _
      // Predicated region
      $region29: #{tpu_custom_call.1} parent=11 // pred_check
        %p196 = pneg %p143
      $region30: #{tpu_custom_call.1} parent=11 // pred_check_branch
        %198 = sbr.rel (%p196) target = $region32
      $region31: #{tpu_custom_call.1} parent=11 // pred_region
        _
      $region32: #{tpu_custom_call.1} parent=11 // pred_fallthru
        _
    $region12: #{tpu_custom_call.1} parent=5 // pred_fallthru
      _
    %p199 = scmp.lt.s32.totalorder %s12, 2
    // Predicated region
    $region33: #{tpu_custom_call.1} parent=5 // pred_check
      %p200 = pneg %p199
    $region34: #{tpu_custom_call.1} parent=5 // pred_check_branch
      %202 = sbr.rel (%p200) target = $region36
    $region35: #{tpu_custom_call.1} parent=5 // pred_region
      // Predicated region
      $region37: #{tpu_custom_call.1} parent=35 // pred_check
        %p203 = pneg %p32
      $region38: #{tpu_custom_call.1} parent=35 // pred_check_branch
        %205 = sbr.rel (%p203) target = $region40
      $region39: #{tpu_custom_call.1} parent=35 // pred_region
        %p206 = scmp.lt.s32.totalorder %s12, 1
        %s207 = scalar_select %p206, %s12, 1
        %s208 = smul.addr %s207, 41
        %s209 = smul.addr %s208, 8
        %s210 = scalar_lea.vmem %s0, %s209
      $region40: #{tpu_custom_call.1} parent=35 // pred_fallthru
        _
    $region36: #{tpu_custom_call.1} parent=5 // pred_fallthru
      _
    %p211 = scmp.le.s32.totalorder 1, %s12
    %p212 = scmp.lt.s32.totalorder %s12, 3
    %p213 = pnand %p211, %p212
    %p214 = pneg %p213
    // Predicated region
    $region41: #{tpu_custom_call.1} parent=5 // pred_check
      _
    $region42: #{tpu_custom_call.1} parent=5 // pred_check_branch
      %216 = sbr.rel (%p213) target = $region44
    $region43: #{tpu_custom_call.1} parent=5 // pred_region
      %s217 = ssub.s32 %s12, 1
      %p218 = scmp.lt.s32.totalorder %s17, 1
      %s219 = scalar_select %p218, %s17, 1
      %s220 = smul.addr %s219, 41
      %s221 = smul.addr %s220, 8
      %s222 = scalar_lea.vmem %s0, %s221
      %p223 = pneg %p38
      %p224 = pneg %p35
      %p225 = pneg %p59
      %p226 = pneg %p56
      %p227 = pneg %p80
      %p228 = pneg %p77
      %p229 = pneg %p101
      %p230 = pneg %p98
      %p231 = pneg %p122
      %p232 = pneg %p119
      %p233 = pneg %p143
      %p234 = pneg %p140
      %p235 = pneg %p169
      %p236 = pneg %p166
      %p237 = scmp.lt.s32.totalorder %s17, 1
      %s238 = scalar_select %p237, %s17, 1
      %s239 = smul.addr %s238, 36
      %s240 = smul.addr %s239, 8
      %s241 = scalar_lea.vmem %s6, %s240
      %p242 = scmp.lt.s32.totalorder %s17, 1
      %s243 = scalar_select %p242, %s17, 1
      %s244 = smul.addr %s243, 41
      %s245 = smul.addr %s244, 8
      %s246 = scalar_lea.vmem %s0, %s245
      %p247 = scmp.lt.s32.totalorder %s17, 1
      %s248 = scalar_select %p247, %s17, 1
      %s249 = smul.addr %s248, 36
      %s250 = smul.addr %s249, 8
      %s251 = scalar_lea.vmem %s6, %s250
      %v253 = vld [vmem:[%s246] sm:$0xff]
      %v254 = vld [vmem:[%s246 + $0x8] sm:$0xff]
      %v255 = vld [vmem:[%s246 + $0x10] sm:$0xff]
      %v256 = vld [vmem:[%s246 + $0x18] sm:$0xff]
      %v257 = vld [vmem:[%s246 + $0x20] sm:$0xff]
      %v258 = vld [vmem:[%s246 + $0x28] sm:$0xff]
      %v259 = vld [vmem:[%s246 + $0x30] sm:$0xff]
      %v260 = vld [vmem:[%s246 + $0x38] sm:$0xff]
      %v261 = vld [vmem:[%s246 + $0x40] sm:$0xff]
      %v262 = vld [vmem:[%s246 + $0x48] sm:$0xff]
      %v263 = vld [vmem:[%s246 + $0x50] sm:$0xff]
      %v264 = vld [vmem:[%s246 + $0x58] sm:$0xff]
      %v265 = vld [vmem:[%s246 + $0x60] sm:$0xff]
      %v266 = vld [vmem:[%s246 + $0x68] sm:$0xff]
      %v267 = vld [vmem:[%s246 + $0x70] sm:$0xff]
      %v268 = vld [vmem:[%s246 + $0x78] sm:$0xff]
      %v269 = vld [vmem:[%s246 + $0x80] sm:$0xff]
      %v270 = vld [vmem:[%s246 + $0x88] sm:$0xff]
      %v271 = vld [vmem:[%s246 + $0x90] sm:$0xff]
      %v272 = vld [vmem:[%s246 + $0x98] sm:$0xff]
      %v273 = vld [vmem:[%s246 + $0xa0] sm:$0xff]
      %v274 = vld [vmem:[%s246 + $0xa8] sm:$0xff]
      %v275 = vld [vmem:[%s246 + $0xb0] sm:$0xff]
      %v276 = vld [vmem:[%s246 + $0xb8] sm:$0xff]
      %v277 = vld [vmem:[%s246 + $0xc0] sm:$0xff]
      %v278 = vld [vmem:[%s246 + $0xc8] sm:$0xff]
      %v279 = vld [vmem:[%s246 + $0xd0] sm:$0xff]
      %v280 = vld [vmem:[%s246 + $0xd8] sm:$0xff]
      %v281 = vld [vmem:[%s246 + $0xe0] sm:$0xff]
      %v282 = vld [vmem:[%s246 + $0xe8] sm:$0xff]
      %v283 = vld [vmem:[%s246 + $0xf0] sm:$0xff]
      %v284 = vld [vmem:[%s246 + $0xf8] sm:$0xff]
      %v285 = vld [vmem:[%s246 + $0x100] sm:$0xff]
      %v286 = vld [vmem:[%s246 + $0x108] sm:$0xff]
      %v287 = vld [vmem:[%s246 + $0x110] sm:$0xff]
      %v288 = vld [vmem:[%s246 + $0x118] sm:$0x3f]
      %v289 = vpack.c.bf16 %v254, %v253
      %v290 = vpack.c.bf16 %v256, %v255
      %v291 = vpack.c.bf16 %v258, %v257
      %v292 = vpack.c.bf16 %v260, %v259
      %v293 = vpack.c.bf16 %v262, %v261
      %v294 = vpack.c.bf16 %v264, %v263
      %v295 = vpack.c.bf16 %v266, %v265
      %v296 = vpack.c.bf16 %v268, %v267
      %v297 = vpack.c.bf16 %v270, %v269
      %v298 = vpack.c.bf16 %v272, %v271
      %v299 = vpack.c.bf16 %v274, %v273
      %v300 = vpack.c.bf16 %v276, %v275
      %v301 = vpack.c.bf16 %v278, %v277
      %v302 = vpack.c.bf16 %v280, %v279
      %v303 = vpack.c.bf16 %v282, %v281
      %v304 = vpack.c.bf16 %v284, %v283
      %v305 = vpack.c.bf16 %v286, %v285
      %v306 = vpack.c.bf16 %v288, %v287
      %v307 = vld [vmem:[%s1] sm:$0x3]
      %v308 = vld [vmem:[%s246 + $0x1] sm:$0xff]
      %v309 = vld [vmem:[%s246 + $0x9] sm:$0xff]
      %v310 = vld [vmem:[%s246 + $0x11] sm:$0xff]
      %v311 = vld [vmem:[%s246 + $0x19] sm:$0xff]
      %v312 = vld [vmem:[%s246 + $0x21] sm:$0xff]
      %v313 = vld [vmem:[%s246 + $0x29] sm:$0xff]
      %v314 = vld [vmem:[%s246 + $0x31] sm:$0xff]
      %v315 = vld [vmem:[%s246 + $0x39] sm:$0xff]
      %v316 = vld [vmem:[%s246 + $0x41] sm:$0xff]
      %v317 = vld [vmem:[%s246 + $0x49] sm:$0xff]
      %v318 = vld [vmem:[%s246 + $0x51] sm:$0xff]
      %v319 = vld [vmem:[%s246 + $0x59] sm:$0xff]
      %v320 = vld [vmem:[%s246 + $0x61] sm:$0xff]
      %v321 = vld [vmem:[%s246 + $0x69] sm:$0xff]
      %v322 = vld [vmem:[%s246 + $0x71] sm:$0xff]
      %v323 = vld [vmem:[%s246 + $0x79] sm:$0xff]
      %v324 = vld [vmem:[%s246 + $0x81] sm:$0xff]
      %v325 = vld [vmem:[%s246 + $0x89] sm:$0xff]
      %v326 = vld [vmem:[%s246 + $0x91] sm:$0xff]
      %v327 = vld [vmem:[%s246 + $0x99] sm:$0xff]
      %v328 = vld [vmem:[%s246 + $0xa1] sm:$0xff]
      %v329 = vld [vmem:[%s246 + $0xa9] sm:$0xff]
      %v330 = vld [vmem:[%s246 + $0xb1] sm:$0xff]
      %v331 = vld [vmem:[%s246 + $0xb9] sm:$0xff]
      %v332 = vld [vmem:[%s246 + $0xc1] sm:$0xff]
      %v333 = vld [vmem:[%s246 + $0xc9] sm:$0xff]
      %v334 = vld [vmem:[%s246 + $0xd1] sm:$0xff]
      %v335 = vld [vmem:[%s246 + $0xd9] sm:$0xff]
      %v336 = vld [vmem:[%s246 + $0xe1] sm:$0xff]
      %v337 = vld [vmem:[%s246 + $0xe9] sm:$0xff]
      %v338 = vld [vmem:[%s246 + $0xf1] sm:$0xff]
      %v339 = vld [vmem:[%s246 + $0xf9] sm:$0xff]
      %v340 = vld [vmem:[%s246 + $0x101] sm:$0xff]
      %v341 = vld [vmem:[%s246 + $0x109] sm:$0xff]
      %v342 = vld [vmem:[%s246 + $0x111] sm:$0xff]
      %v343 = vld [vmem:[%s246 + $0x119] sm:$0x3f]
      %v344 = vpack.c.bf16 %v309, %v308
      %v345 = vpack.c.bf16 %v311, %v310
      %v346 = vpack.c.bf16 %v313, %v312
      %v347 = vpack.c.bf16 %v315, %v314
      %v348 = vpack.c.bf16 %v317, %v316
      %v349 = vpack.c.bf16 %v319, %v318
      %v350 = vpack.c.bf16 %v321, %v320
      %v351 = vpack.c.bf16 %v323, %v322
      %v352 = vpack.c.bf16 %v325, %v324
      %v353 = vpack.c.bf16 %v327, %v326
      %v354 = vpack.c.bf16 %v329, %v328
      %v355 = vpack.c.bf16 %v331, %v330
      %v356 = vpack.c.bf16 %v333, %v332
      %v357 = vpack.c.bf16 %v335, %v334
      %v358 = vpack.c.bf16 %v337, %v336
      %v359 = vpack.c.bf16 %v339, %v338
      %v360 = vpack.c.bf16 %v341, %v340
      %v361 = vpack.c.bf16 %v343, %v342
      %s362 = scalar_lea.vmem %s1, 2
      %v363 = vld [vmem:[%s362] sm:$0x3]
      %vm364 = vcmask 31744
      %v366 = vsel %vm364, %v344, 0
      %v369 = vsel %vm364, %v345, 0
      %v372 = vsel %vm364, %v346, 0
      %v375 = vsel %vm364, %v347, 0
      %v378 = vsel %vm364, %v348, 0
      %v381 = vsel %vm364, %v349, 0
      %v384 = vsel %vm364, %v350, 0
      %v387 = vsel %vm364, %v351, 0
      %v390 = vsel %vm364, %v352, 0
      %v393 = vsel %vm364, %v353, 0
      %v396 = vsel %vm364, %v354, 0
      %v399 = vsel %vm364, %v355, 0
      %v402 = vsel %vm364, %v356, 0
      %v405 = vsel %vm364, %v357, 0
      %v408 = vsel %vm364, %v358, 0
      %v411 = vsel %vm364, %v359, 0
      %v414 = vsel %vm364, %v360, 0
      %v417 = vsel %vm364, %v361, 0
      %vm419 = vcmask 1041408
      %v421 = vsel %vm419, %v363, 0
      %423 = vmatpush.bf16.msra.mxu0 0
      %424 = vmatpush.bf16.msra.mxu0 0
      %425 = vmatpush.bf16.msra.mxu0 0
      %426 = vmatpush.bf16.msra.mxu0 0
      %427 = vmatpush.bf16.msra.mxu0 0
      %428 = vmatpush.bf16.msra.mxu0 0
      %429 = vmatpush.bf16.msra.mxu0 0
      %430 = vmatpush.bf16.msra.mxu0 %v421
      %431 = vmatmul.bf16.gmra.mxu0 %v366
      %v432 = vpop.f32.mrf.mxu0
      %v433 = vadd.f32 0.0, %v432
      %v434 = vpop.f32.mrf.mxu0
      %v435 = vadd.f32 0.0, %v434
      %436 = vmatmul.bf16.gmra.mxu0 %v369
      %v437 = vpop.f32.mrf.mxu0
      %v438 = vadd.f32 0.0, %v437
      %v439 = vpop.f32.mrf.mxu0
      %v440 = vadd.f32 0.0, %v439
      %441 = vmatmul.bf16.gmra.mxu0 %v372
      %v442 = vpop.f32.mrf.mxu0
      %v443 = vadd.f32 0.0, %v442
      %v444 = vpop.f32.mrf.mxu0
      %v445 = vadd.f32 0.0, %v444
      %446 = vmatmul.bf16.gmra.mxu0 %v375
      %v447 = vpop.f32.mrf.mxu0
      %v448 = vadd.f32 0.0, %v447
      %v449 = vpop.f32.mrf.mxu0
      %v450 = vadd.f32 0.0, %v449
      %451 = vmatmul.bf16.gmra.mxu0 %v378
      %v452 = vpop.f32.mrf.mxu0
      %v453 = vadd.f32 0.0, %v452
      %v454 = vpop.f32.mrf.mxu0
      %v455 = vadd.f32 0.0, %v454
      %456 = vmatmul.bf16.gmra.mxu0 %v381
      %v457 = vpop.f32.mrf.mxu0
      %v458 = vadd.f32 0.0, %v457
      %v459 = vpop.f32.mrf.mxu0
      %v460 = vadd.f32 0.0, %v459
      %461 = vmatmul.bf16.gmra.mxu0 %v384
      %v462 = vpop.f32.mrf.mxu0
      %v463 = vadd.f32 0.0, %v462
      %v464 = vpop.f32.mrf.mxu0
      %v465 = vadd.f32 0.0, %v464
      %466 = vmatmul.bf16.gmra.mxu0 %v387
      %v467 = vpop.f32.mrf.mxu0
      %v468 = vadd.f32 0.0, %v467
      %v469 = vpop.f32.mrf.mxu0
      %v470 = vadd.f32 0.0, %v469
      %471 = vmatmul.bf16.gmra.mxu0 %v390
      %v472 = vpop.f32.mrf.mxu0
      %v473 = vadd.f32 0.0, %v472
      %v474 = vpop.f32.mrf.mxu0
      %v475 = vadd.f32 0.0, %v474
      %476 = vmatmul.bf16.gmra.mxu0 %v393
      %v477 = vpop.f32.mrf.mxu0
      %v478 = vadd.f32 0.0, %v477
      %v479 = vpop.f32.mrf.mxu0
      %v480 = vadd.f32 0.0, %v479
      %481 = vmatmul.bf16.gmra.mxu0 %v396
      %v482 = vpop.f32.mrf.mxu0
      %v483 = vadd.f32 0.0, %v482
      %v484 = vpop.f32.mrf.mxu0
      %v485 = vadd.f32 0.0, %v484
      %486 = vmatmul.bf16.gmra.mxu0 %v399
      %v487 = vpop.f32.mrf.mxu0
      %v488 = vadd.f32 0.0, %v487
      %v489 = vpop.f32.mrf.mxu0
      %v490 = vadd.f32 0.0, %v489
      %491 = vmatmul.bf16.gmra.mxu0 %v402
      %v492 = vpop.f32.mrf.mxu0
      %v493 = vadd.f32 0.0, %v492
      %v494 = vpop.f32.mrf.mxu0
      %v495 = vadd.f32 0.0, %v494
      %496 = vmatmul.bf16.gmra.mxu0 %v405
      %v497 = vpop.f32.mrf.mxu0
      %v498 = vadd.f32 0.0, %v497
      %v499 = vpop.f32.mrf.mxu0
      %v500 = vadd.f32 0.0, %v499
      %501 = vmatmul.bf16.gmra.mxu0 %v408
      %v502 = vpop.f32.mrf.mxu0
      %v503 = vadd.f32 0.0, %v502
      %v504 = vpop.f32.mrf.mxu0
      %v505 = vadd.f32 0.0, %v504
      %506 = vmatmul.bf16.gmra.mxu0 %v411
      %v507 = vpop.f32.mrf.mxu0
      %v508 = vadd.f32 0.0, %v507
      %v509 = vpop.f32.mrf.mxu0
      %v510 = vadd.f32 0.0, %v509
      %511 = vmatmul.bf16.gmra.mxu0 %v414
      %v512 = vpop.f32.mrf.mxu0
      %v513 = vadd.f32 0.0, %v512
      %v514 = vpop.f32.mrf.mxu0
      %v515 = vadd.f32 0.0, %v514
      %516 = vmatmul.bf16.gmra.mxu0 %v417
      %v517 = vpop.f32.mrf.mxu0
      %v518 = vadd.f32 0.0, %v517
      %v519 = vpop.f32.mrf.mxu0
      %v520 = vadd.f32 0.0, %v519
      %521 = vdwg.mxu0
      %v523 = vsel %vm364, %v289, 0
      %v526 = vsel %vm364, %v290, 0
      %v529 = vsel %vm364, %v291, 0
      %v532 = vsel %vm364, %v292, 0
      %v535 = vsel %vm364, %v293, 0
      %v538 = vsel %vm364, %v294, 0
      %v541 = vsel %vm364, %v295, 0
      %v544 = vsel %vm364, %v296, 0
      %v547 = vsel %vm364, %v297, 0
      %v550 = vsel %vm364, %v298, 0
      %v553 = vsel %vm364, %v299, 0
      %v556 = vsel %vm364, %v300, 0
      %v559 = vsel %vm364, %v301, 0
      %v562 = vsel %vm364, %v302, 0
      %v565 = vsel %vm364, %v303, 0
      %v568 = vsel %vm364, %v304, 0
      %v571 = vsel %vm364, %v305, 0
      %v574 = vsel %vm364, %v306, 0
      %v577 = vsel %vm419, %v307, 0
      %579 = vmatpush.bf16.msra.mxu0 0
      %580 = vmatpush.bf16.msra.mxu0 0
      %581 = vmatpush.bf16.msra.mxu0 0
      %582 = vmatpush.bf16.msra.mxu0 0
      %583 = vmatpush.bf16.msra.mxu0 0
      %584 = vmatpush.bf16.msra.mxu0 0
      %585 = vmatpush.bf16.msra.mxu0 0
      %586 = vmatpush.bf16.msra.mxu0 %v577
      %587 = vmatmul.bf16.gmra.mxu0 %v523
      %v588 = vpop.f32.mrf.mxu0
      %v589 = vadd.f32 %v433, %v588
      %v590 = vpop.f32.mrf.mxu0
      %v591 = vadd.f32 %v435, %v590
      %592 = vmatmul.bf16.gmra.mxu0 %v526
      %v593 = vpop.f32.mrf.mxu0
      %v594 = vadd.f32 %v438, %v593
      %v595 = vpop.f32.mrf.mxu0
      %v596 = vadd.f32 %v440, %v595
      %597 = vmatmul.bf16.gmra.mxu0 %v529
      %v598 = vpop.f32.mrf.mxu0
      %v599 = vadd.f32 %v443, %v598
      %v600 = vpop.f32.mrf.mxu0
      %v601 = vadd.f32 %v445, %v600
      %602 = vmatmul.bf16.gmra.mxu0 %v532
      %v603 = vpop.f32.mrf.mxu0
      %v604 = vadd.f32 %v448, %v603
      %v605 = vpop.f32.mrf.mxu0
      %v606 = vadd.f32 %v450, %v605
      %607 = vmatmul.bf16.gmra.mxu0 %v535
      %v608 = vpop.f32.mrf.mxu0
      %v609 = vadd.f32 %v453, %v608
      %v610 = vpop.f32.mrf.mxu0
      %v611 = vadd.f32 %v455, %v610
      %612 = vmatmul.bf16.gmra.mxu0 %v538
      %v613 = vpop.f32.mrf.mxu0
      %v614 = vadd.f32 %v458, %v613
      %v615 = vpop.f32.mrf.mxu0
      %v616 = vadd.f32 %v460, %v615
      %617 = vmatmul.bf16.gmra.mxu0 %v541
      %v618 = vpop.f32.mrf.mxu0
      %v619 = vadd.f32 %v463, %v618
      %v620 = vpop.f32.mrf.mxu0
      %v621 = vadd.f32 %v465, %v620
      %622 = vmatmul.bf16.gmra.mxu0 %v544
      %v623 = vpop.f32.mrf.mxu0
      %v624 = vadd.f32 %v468, %v623
      %v625 = vpop.f32.mrf.mxu0
      %v626 = vadd.f32 %v470, %v625
      %627 = vmatmul.bf16.gmra.mxu0 %v547
      %v628 = vpop.f32.mrf.mxu0
      %v629 = vadd.f32 %v473, %v628
      %v630 = vpop.f32.mrf.mxu0
      %v631 = vadd.f32 %v475, %v630
      %632 = vmatmul.bf16.gmra.mxu0 %v550
      %v633 = vpop.f32.mrf.mxu0
      %v634 = vadd.f32 %v478, %v633
      %v635 = vpop.f32.mrf.mxu0
      %v636 = vadd.f32 %v480, %v635
      %637 = vmatmul.bf16.gmra.mxu0 %v553
      %v638 = vpop.f32.mrf.mxu0
      %v639 = vadd.f32 %v483, %v638
      %v640 = vpop.f32.mrf.mxu0
      %v641 = vadd.f32 %v485, %v640
      %642 = vmatmul.bf16.gmra.mxu0 %v556
      %v643 = vpop.f32.mrf.mxu0
      %v644 = vadd.f32 %v488, %v643
      %v645 = vpop.f32.mrf.mxu0
      %v646 = vadd.f32 %v490, %v645
      %647 = vmatmul.bf16.gmra.mxu0 %v559
      %v648 = vpop.f32.mrf.mxu0
      %v649 = vadd.f32 %v493, %v648
      %v650 = vpop.f32.mrf.mxu0
      %v651 = vadd.f32 %v495, %v650
      %652 = vmatmul.bf16.gmra.mxu0 %v562
      %v653 = vpop.f32.mrf.mxu0
      %v654 = vadd.f32 %v498, %v653
      %v655 = vpop.f32.mrf.mxu0
      %v656 = vadd.f32 %v500, %v655
      %657 = vmatmul.bf16.gmra.mxu0 %v565
      %v658 = vpop.f32.mrf.mxu0
      %v659 = vadd.f32 %v503, %v658
      %v660 = vpop.f32.mrf.mxu0
      %v661 = vadd.f32 %v505, %v660
      %662 = vmatmul.bf16.gmra.mxu0 %v568
      %v663 = vpop.f32.mrf.mxu0
      %v664 = vadd.f32 %v508, %v663
      %v665 = vpop.f32.mrf.mxu0
      %v666 = vadd.f32 %v510, %v665
      %667 = vmatmul.bf16.gmra.mxu0 %v571
      %v668 = vpop.f32.mrf.mxu0
      %v669 = vadd.f32 %v513, %v668
      %v670 = vpop.f32.mrf.mxu0
      %v671 = vadd.f32 %v515, %v670
      %672 = vmatmul.bf16.gmra.mxu0 %v574
      %v673 = vpop.f32.mrf.mxu0
      %v674 = vadd.f32 %v518, %v673
      %v675 = vpop.f32.mrf.mxu0
      %v676 = vadd.f32 %v520, %v675
      %677 = vdwg.mxu0
      %v678 = vld [vmem:[%s246 + $0x2] sm:$0xff]
      %v679 = vld [vmem:[%s246 + $0xa] sm:$0xff]
      %v680 = vld [vmem:[%s246 + $0x12] sm:$0xff]
      %v681 = vld [vmem:[%s246 + $0x1a] sm:$0xff]
      %v682 = vld [vmem:[%s246 + $0x22] sm:$0xff]
      %v683 = vld [vmem:[%s246 + $0x2a] sm:$0xff]
      %v684 = vld [vmem:[%s246 + $0x32] sm:$0xff]
      %v685 = vld [vmem:[%s246 + $0x3a] sm:$0xff]
      %v686 = vld [vmem:[%s246 + $0x42] sm:$0xff]
      %v687 = vld [vmem:[%s246 + $0x4a] sm:$0xff]
      %v688 = vld [vmem:[%s246 + $0x52] sm:$0xff]
      %v689 = vld [vmem:[%s246 + $0x5a] sm:$0xff]
      %v690 = vld [vmem:[%s246 + $0x62] sm:$0xff]
      %v691 = vld [vmem:[%s246 + $0x6a] sm:$0xff]
      %v692 = vld [vmem:[%s246 + $0x72] sm:$0xff]
      %v693 = vld [vmem:[%s246 + $0x7a] sm:$0xff]
      %v694 = vld [vmem:[%s246 + $0x82] sm:$0xff]
      %v695 = vld [vmem:[%s246 + $0x8a] sm:$0xff]
      %v696 = vld [vmem:[%s246 + $0x92] sm:$0xff]
      %v697 = vld [vmem:[%s246 + $0x9a] sm:$0xff]
      %v698 = vld [vmem:[%s246 + $0xa2] sm:$0xff]
      %v699 = vld [vmem:[%s246 + $0xaa] sm:$0xff]
      %v700 = vld [vmem:[%s246 + $0xb2] sm:$0xff]
      %v701 = vld [vmem:[%s246 + $0xba] sm:$0xff]
      %v702 = vld [vmem:[%s246 + $0xc2] sm:$0xff]
      %v703 = vld [vmem:[%s246 + $0xca] sm:$0xff]
      %v704 = vld [vmem:[%s246 + $0xd2] sm:$0xff]
      %v705 = vld [vmem:[%s246 + $0xda] sm:$0xff]
      %v706 = vld [vmem:[%s246 + $0xe2] sm:$0xff]
      %v707 = vld [vmem:[%s246 + $0xea] sm:$0xff]
      %v708 = vld [vmem:[%s246 + $0xf2] sm:$0xff]
      %v709 = vld [vmem:[%s246 + $0xfa] sm:$0xff]
      %v710 = vld [vmem:[%s246 + $0x102] sm:$0xff]
      %v711 = vld [vmem:[%s246 + $0x10a] sm:$0xff]
      %v712 = vld [vmem:[%s246 + $0x112] sm:$0xff]
      %v713 = vld [vmem:[%s246 + $0x11a] sm:$0x3f]
      %v714 = vpack.c.bf16 %v679, %v678
      %v715 = vpack.c.bf16 %v681, %v680
      %v716 = vpack.c.bf16 %v683, %v682
      %v717 = vpack.c.bf16 %v685, %v684
      %v718 = vpack.c.bf16 %v687, %v686
      %v719 = vpack.c.bf16 %v689, %v688
      %v720 = vpack.c.bf16 %v691, %v690
      %v721 = vpack.c.bf16 %v693, %v692
      %v722 = vpack.c.bf16 %v695, %v694
      %v723 = vpack.c.bf16 %v697, %v696
      %v724 = vpack.c.bf16 %v699, %v698
      %v725 = vpack.c.bf16 %v701, %v700
      %v726 = vpack.c.bf16 %v703, %v702
      %v727 = vpack.c.bf16 %v705, %v704
      %v728 = vpack.c.bf16 %v707, %v706
      %v729 = vpack.c.bf16 %v709, %v708
      %v730 = vpack.c.bf16 %v711, %v710
      %v731 = vpack.c.bf16 %v713, %v712
      %s732 = scalar_lea.vmem %s1, 4
      %v733 = vld [vmem:[%s732] sm:$0x3]
      %v735 = vsel %vm364, %v714, 0
      %v738 = vsel %vm364, %v715, 0
      %v741 = vsel %vm364, %v716, 0
      %v744 = vsel %vm364, %v717, 0
      %v747 = vsel %vm364, %v718, 0
      %v750 = vsel %vm364, %v719, 0
      %v753 = vsel %vm364, %v720, 0
      %v756 = vsel %vm364, %v721, 0
      %v759 = vsel %vm364, %v722, 0
      %v762 = vsel %vm364, %v723, 0
      %v765 = vsel %vm364, %v724, 0
      %v768 = vsel %vm364, %v725, 0
      %v771 = vsel %vm364, %v726, 0
      %v774 = vsel %vm364, %v727, 0
      %v777 = vsel %vm364, %v728, 0
      %v780 = vsel %vm364, %v729, 0
      %v783 = vsel %vm364, %v730, 0
      %v786 = vsel %vm364, %v731, 0
      %v789 = vsel %vm419, %v733, 0
      %791 = vmatpush.bf16.msra.mxu0 0
      %792 = vmatpush.bf16.msra.mxu0 0
      %793 = vmatpush.bf16.msra.mxu0 0
      %794 = vmatpush.bf16.msra.mxu0 0
      %795 = vmatpush.bf16.msra.mxu0 0
      %796 = vmatpush.bf16.msra.mxu0 0
      %797 = vmatpush.bf16.msra.mxu0 0
      %798 = vmatpush.bf16.msra.mxu0 %v789
      %799 = vmatmul.bf16.gmra.mxu0 %v735
      %v800 = vpop.f32.mrf.mxu0
      %v801 = vadd.f32 0.0, %v800
      %v802 = vpop.f32.mrf.mxu0
      %v803 = vadd.f32 0.0, %v802
      %804 = vmatmul.bf16.gmra.mxu0 %v738
      %v805 = vpop.f32.mrf.mxu0
      %v806 = vadd.f32 0.0, %v805
      %v807 = vpop.f32.mrf.mxu0
      %v808 = vadd.f32 0.0, %v807
      %809 = vmatmul.bf16.gmra.mxu0 %v741
      %v810 = vpop.f32.mrf.mxu0
      %v811 = vadd.f32 0.0, %v810
      %v812 = vpop.f32.mrf.mxu0
      %v813 = vadd.f32 0.0, %v812
      %814 = vmatmul.bf16.gmra.mxu0 %v744
      %v815 = vpop.f32.mrf.mxu0
      %v816 = vadd.f32 0.0, %v815
      %v817 = vpop.f32.mrf.mxu0
      %v818 = vadd.f32 0.0, %v817
      %819 = vmatmul.bf16.gmra.mxu0 %v747
      %v820 = vpop.f32.mrf.mxu0
      %v821 = vadd.f32 0.0, %v820
      %v822 = vpop.f32.mrf.mxu0
      %v823 = vadd.f32 0.0, %v822
      %824 = vmatmul.bf16.gmra.mxu0 %v750
      %v825 = vpop.f32.mrf.mxu0
      %v826 = vadd.f32 0.0, %v825
      %v827 = vpop.f32.mrf.mxu0
      %v828 = vadd.f32 0.0, %v827
      %829 = vmatmul.bf16.gmra.mxu0 %v753
      %v830 = vpop.f32.mrf.mxu0
      %v831 = vadd.f32 0.0, %v830
      %v832 = vpop.f32.mrf.mxu0
      %v833 = vadd.f32 0.0, %v832
      %834 = vmatmul.bf16.gmra.mxu0 %v756
      %v835 = vpop.f32.mrf.mxu0
      %v836 = vadd.f32 0.0, %v835
      %v837 = vpop.f32.mrf.mxu0
      %v838 = vadd.f32 0.0, %v837
      %839 = vmatmul.bf16.gmra.mxu0 %v759
      %v840 = vpop.f32.mrf.mxu0
      %v841 = vadd.f32 0.0, %v840
      %v842 = vpop.f32.mrf.mxu0
      %v843 = vadd.f32 0.0, %v842
      %844 = vmatmul.bf16.gmra.mxu0 %v762
      %v845 = vpop.f32.mrf.mxu0
      %v846 = vadd.f32 0.0, %v845
      %v847 = vpop.f32.mrf.mxu0
      %v848 = vadd.f32 0.0, %v847
      %849 = vmatmul.bf16.gmra.mxu0 %v765
      %v850 = vpop.f32.mrf.mxu0
      %v851 = vadd.f32 0.0, %v850
      %v852 = vpop.f32.mrf.mxu0
      %v853 = vadd.f32 0.0, %v852
      %854 = vmatmul.bf16.gmra.mxu0 %v768
      %v855 = vpop.f32.mrf.mxu0
      %v856 = vadd.f32 0.0, %v855
      %v857 = vpop.f32.mrf.mxu0
      %v858 = vadd.f32 0.0, %v857
      %859 = vmatmul.bf16.gmra.mxu0 %v771
      %v860 = vpop.f32.mrf.mxu0
      %v861 = vadd.f32 0.0, %v860
      %v862 = vpop.f32.mrf.mxu0
      %v863 = vadd.f32 0.0, %v862
      %864 = vmatmul.bf16.gmra.mxu0 %v774
      %v865 = vpop.f32.mrf.mxu0
      %v866 = vadd.f32 0.0, %v865
      %v867 = vpop.f32.mrf.mxu0
      %v868 = vadd.f32 0.0, %v867
      %869 = vmatmul.bf16.gmra.mxu0 %v777
      %v870 = vpop.f32.mrf.mxu0
      %v871 = vadd.f32 0.0, %v870
      %v872 = vpop.f32.mrf.mxu0
      %v873 = vadd.f32 0.0, %v872
      %874 = vmatmul.bf16.gmra.mxu0 %v780
      %v875 = vpop.f32.mrf.mxu0
      %v876 = vadd.f32 0.0, %v875
      %v877 = vpop.f32.mrf.mxu0
      %v878 = vadd.f32 0.0, %v877
      %879 = vmatmul.bf16.gmra.mxu0 %v783
      %v880 = vpop.f32.mrf.mxu0
      %v881 = vadd.f32 0.0, %v880
      %v882 = vpop.f32.mrf.mxu0
      %v883 = vadd.f32 0.0, %v882
      %884 = vmatmul.bf16.gmra.mxu0 %v786
      %v885 = vpop.f32.mrf.mxu0
      %v886 = vadd.f32 0.0, %v885
      %v887 = vpop.f32.mrf.mxu0
      %v888 = vadd.f32 0.0, %v887
      %889 = vdwg.mxu0
      %v890 = vadd.f32 %v589, %v801
      %v891 = vadd.f32 %v591, %v803
      %v892 = vadd.f32 %v594, %v806
      %v893 = vadd.f32 %v596, %v808
      %v894 = vadd.f32 %v599, %v811
      %v895 = vadd.f32 %v601, %v813
      %v896 = vadd.f32 %v604, %v816
      %v897 = vadd.f32 %v606, %v818
      %v898 = vadd.f32 %v609, %v821
      %v899 = vadd.f32 %v611, %v823
      %v900 = vadd.f32 %v614, %v826
      %v901 = vadd.f32 %v616, %v828
      %v902 = vadd.f32 %v619, %v831
      %v903 = vadd.f32 %v621, %v833
      %v904 = vadd.f32 %v624, %v836
      %v905 = vadd.f32 %v626, %v838
      %v906 = vadd.f32 %v629, %v841
      %v907 = vadd.f32 %v631, %v843
      %v908 = vadd.f32 %v634, %v846
      %v909 = vadd.f32 %v636, %v848
      %v910 = vadd.f32 %v639, %v851
      %v911 = vadd.f32 %v641, %v853
      %v912 = vadd.f32 %v644, %v856
      %v913 = vadd.f32 %v646, %v858
      %v914 = vadd.f32 %v649, %v861
      %v915 = vadd.f32 %v651, %v863
      %v916 = vadd.f32 %v654, %v866
      %v917 = vadd.f32 %v656, %v868
      %v918 = vadd.f32 %v659, %v871
      %v919 = vadd.f32 %v661, %v873
      %v920 = vadd.f32 %v664, %v876
      %v921 = vadd.f32 %v666, %v878
      %v922 = vadd.f32 %v669, %v881
      %v923 = vadd.f32 %v671, %v883
      %v924 = vadd.f32 %v674, %v886
      %v925 = vadd.f32 %v676, %v888
      %v926 = vld [vmem:[%s246 + $0x12] sm:$0xff]
      %v927 = vld [vmem:[%s246 + $0x1a] sm:$0xff]
      %v928 = vld [vmem:[%s246 + $0x22] sm:$0xff]
      %v929 = vld [vmem:[%s246 + $0x2a] sm:$0xff]
      %v930 = vld [vmem:[%s246 + $0x32] sm:$0xff]
      %v931 = vld [vmem:[%s246 + $0x3a] sm:$0xff]
      %v932 = vld [vmem:[%s246 + $0x42] sm:$0xff]
      %v933 = vld [vmem:[%s246 + $0x4a] sm:$0xff]
      %v934 = vld [vmem:[%s246 + $0x52] sm:$0xff]
      %v935 = vld [vmem:[%s246 + $0x5a] sm:$0xff]
      %v936 = vld [vmem:[%s246 + $0x62] sm:$0xff]
      %v937 = vld [vmem:[%s246 + $0x6a] sm:$0xff]
      %v938 = vld [vmem:[%s246 + $0x72] sm:$0xff]
      %v939 = vld [vmem:[%s246 + $0x7a] sm:$0xff]
      %v940 = vld [vmem:[%s246 + $0x82] sm:$0xff]
      %v941 = vld [vmem:[%s246 + $0x8a] sm:$0xff]
      %v942 = vld [vmem:[%s246 + $0x92] sm:$0xff]
      %v943 = vld [vmem:[%s246 + $0x9a] sm:$0xff]
      %v944 = vld [vmem:[%s246 + $0xa2] sm:$0xff]
      %v945 = vld [vmem:[%s246 + $0xaa] sm:$0xff]
      %v946 = vld [vmem:[%s246 + $0xb2] sm:$0xff]
      %v947 = vld [vmem:[%s246 + $0xba] sm:$0xff]
      %v948 = vld [vmem:[%s246 + $0xc2] sm:$0xff]
      %v949 = vld [vmem:[%s246 + $0xca] sm:$0xff]
      %v950 = vld [vmem:[%s246 + $0xd2] sm:$0xff]
      %v951 = vld [vmem:[%s246 + $0xda] sm:$0xff]
      %v952 = vld [vmem:[%s246 + $0xe2] sm:$0xff]
      %v953 = vld [vmem:[%s246 + $0xea] sm:$0xff]
      %v954 = vld [vmem:[%s246 + $0xf2] sm:$0xff]
      %v955 = vld [vmem:[%s246 + $0xfa] sm:$0xff]
      %v956 = vld [vmem:[%s246 + $0x102] sm:$0xff]
      %v957 = vld [vmem:[%s246 + $0x10a] sm:$0xff]
      %v958 = vld [vmem:[%s246 + $0x112] sm:$0xff]
      %v959 = vld [vmem:[%s246 + $0x11a] sm:$0xff]
      %v960 = vld [vmem:[%s246 + $0x122] sm:$0xff]
      %v961 = vld [vmem:[%s246 + $0x12a] sm:$0x3f]
      %v962 = vpack.c.bf16 %v927, %v926
      %v963 = vpack.c.bf16 %v929, %v928
      %v964 = vpack.c.bf16 %v931, %v930
      %v965 = vpack.c.bf16 %v933, %v932
      %v966 = vpack.c.bf16 %v935, %v934
      %v967 = vpack.c.bf16 %v937, %v936
      %v968 = vpack.c.bf16 %v939, %v938
      %v969 = vpack.c.bf16 %v941, %v940
      %v970 = vpack.c.bf16 %v943, %v942
      %v971 = vpack.c.bf16 %v945, %v944
      %v972 = vpack.c.bf16 %v947, %v946
      %v973 = vpack.c.bf16 %v949, %v948
      %v974 = vpack.c.bf16 %v951, %v950
      %v975 = vpack.c.bf16 %v953, %v952
      %v976 = vpack.c.bf16 %v955, %v954
      %v977 = vpack.c.bf16 %v957, %v956
      %v978 = vpack.c.bf16 %v959, %v958
      %v979 = vpack.c.bf16 %v961, %v960
      %s980 = scalar_lea.vmem %s1, 6
      %v981 = vld [vmem:[%s980] sm:$0x3]
      %v983 = vsel %vm364, %v962, 0
      %v986 = vsel %vm364, %v963, 0
      %v989 = vsel %vm364, %v964, 0
      %v992 = vsel %vm364, %v965, 0
      %v995 = vsel %vm364, %v966, 0
      %v998 = vsel %vm364, %v967, 0
      %v1001 = vsel %vm364, %v968, 0
      %v1004 = vsel %vm364, %v969, 0
      %v1007 = vsel %vm364, %v970, 0
      %v1010 = vsel %vm364, %v971, 0
      %v1013 = vsel %vm364, %v972, 0
      %v1016 = vsel %vm364, %v973, 0
      %v1019 = vsel %vm364, %v974, 0
      %v1022 = vsel %vm364, %v975, 0
      %v1025 = vsel %vm364, %v976, 0
      %v1028 = vsel %vm364, %v977, 0
      %v1031 = vsel %vm364, %v978, 0
      %v1034 = vsel %vm364, %v979, 0
      %v1037 = vsel %vm419, %v981, 0
      %1039 = vmatpush.bf16.msra.mxu0 0
      %1040 = vmatpush.bf16.msra.mxu0 0
      %1041 = vmatpush.bf16.msra.mxu0 0
      %1042 = vmatpush.bf16.msra.mxu0 0
      %1043 = vmatpush.bf16.msra.mxu0 0
      %1044 = vmatpush.bf16.msra.mxu0 0
      %1045 = vmatpush.bf16.msra.mxu0 0
      %1046 = vmatpush.bf16.msra.mxu0 %v1037
      %1047 = vmatmul.bf16.gmra.mxu0 %v983
      %v1048 = vpop.f32.mrf.mxu0
      %v1049 = vadd.f32 0.0, %v1048
      %v1050 = vpop.f32.mrf.mxu0
      %v1051 = vadd.f32 0.0, %v1050
      %1052 = vmatmul.bf16.gmra.mxu0 %v986
      %v1053 = vpop.f32.mrf.mxu0
      %v1054 = vadd.f32 0.0, %v1053
      %v1055 = vpop.f32.mrf.mxu0
      %v1056 = vadd.f32 0.0, %v1055
      %1057 = vmatmul.bf16.gmra.mxu0 %v989
      %v1058 = vpop.f32.mrf.mxu0
      %v1059 = vadd.f32 0.0, %v1058
      %v1060 = vpop.f32.mrf.mxu0
      %v1061 = vadd.f32 0.0, %v1060
      %1062 = vmatmul.bf16.gmra.mxu0 %v992
      %v1063 = vpop.f32.mrf.mxu0
      %v1064 = vadd.f32 0.0, %v1063
      %v1065 = vpop.f32.mrf.mxu0
      %v1066 = vadd.f32 0.0, %v1065
      %1067 = vmatmul.bf16.gmra.mxu0 %v995
      %v1068 = vpop.f32.mrf.mxu0
      %v1069 = vadd.f32 0.0, %v1068
      %v1070 = vpop.f32.mrf.mxu0
      %v1071 = vadd.f32 0.0, %v1070
      %1072 = vmatmul.bf16.gmra.mxu0 %v998
      %v1073 = vpop.f32.mrf.mxu0
      %v1074 = vadd.f32 0.0, %v1073
      %v1075 = vpop.f32.mrf.mxu0
      %v1076 = vadd.f32 0.0, %v1075
      %1077 = vmatmul.bf16.gmra.mxu0 %v1001
      %v1078 = vpop.f32.mrf.mxu0
      %v1079 = vadd.f32 0.0, %v1078
      %v1080 = vpop.f32.mrf.mxu0
      %v1081 = vadd.f32 0.0, %v1080
      %1082 = vmatmul.bf16.gmra.mxu0 %v1004
      %v1083 = vpop.f32.mrf.mxu0
      %v1084 = vadd.f32 0.0, %v1083
      %v1085 = vpop.f32.mrf.mxu0
      %v1086 = vadd.f32 0.0, %v1085
      %1087 = vmatmul.bf16.gmra.mxu0 %v1007
      %v1088 = vpop.f32.mrf.mxu0
      %v1089 = vadd.f32 0.0, %v1088
      %v1090 = vpop.f32.mrf.mxu0
      %v1091 = vadd.f32 0.0, %v1090
      %1092 = vmatmul.bf16.gmra.mxu0 %v1010
      %v1093 = vpop.f32.mrf.mxu0
      %v1094 = vadd.f32 0.0, %v1093
      %v1095 = vpop.f32.mrf.mxu0
      %v1096 = vadd.f32 0.0, %v1095
      %1097 = vmatmul.bf16.gmra.mxu0 %v1013
      %v1098 = vpop.f32.mrf.mxu0
      %v1099 = vadd.f32 0.0, %v1098
      %v1100 = vpop.f32.mrf.mxu0
      %v1101 = vadd.f32 0.0, %v1100
      %1102 = vmatmul.bf16.gmra.mxu0 %v1016
      %v1103 = vpop.f32.mrf.mxu0
      %v1104 = vadd.f32 0.0, %v1103
      %v1105 = vpop.f32.mrf.mxu0
      %v1106 = vadd.f32 0.0, %v1105
      %1107 = vmatmul.bf16.gmra.mxu0 %v1019
      %v1108 = vpop.f32.mrf.mxu0
      %v1109 = vadd.f32 0.0, %v1108
      %v1110 = vpop.f32.mrf.mxu0
      %v1111 = vadd.f32 0.0, %v1110
      %1112 = vmatmul.bf16.gmra.mxu0 %v1022
      %v1113 = vpop.f32.mrf.mxu0
      %v1114 = vadd.f32 0.0, %v1113
      %v1115 = vpop.f32.mrf.mxu0
      %v1116 = vadd.f32 0.0, %v1115
      %1117 = vmatmul.bf16.gmra.mxu0 %v1025
      %v1118 = vpop.f32.mrf.mxu0
      %v1119 = vadd.f32 0.0, %v1118
      %v1120 = vpop.f32.mrf.mxu0
      %v1121 = vadd.f32 0.0, %v1120
      %1122 = vmatmul.bf16.gmra.mxu0 %v1028
      %v1123 = vpop.f32.mrf.mxu0
      %v1124 = vadd.f32 0.0, %v1123
      %v1125 = vpop.f32.mrf.mxu0
      %v1126 = vadd.f32 0.0, %v1125
      %1127 = vmatmul.bf16.gmra.mxu0 %v1031
      %v1128 = vpop.f32.mrf.mxu0
      %v1129 = vadd.f32 0.0, %v1128
      %v1130 = vpop.f32.mrf.mxu0
      %v1131 = vadd.f32 0.0, %v1130
      %1132 = vmatmul.bf16.gmra.mxu0 %v1034
      %v1133 = vpop.f32.mrf.mxu0
      %v1134 = vadd.f32 0.0, %v1133
      %v1135 = vpop.f32.mrf.mxu0
      %v1136 = vadd.f32 0.0, %v1135
      %1137 = vdwg.mxu0
      %v1138 = vadd.f32 %v890, %v1049
      %v1139 = vadd.f32 %v891, %v1051
      %v1140 = vadd.f32 %v892, %v1054
      %v1141 = vadd.f32 %v893, %v1056
      %v1142 = vadd.f32 %v894, %v1059
      %v1143 = vadd.f32 %v895, %v1061
      %v1144 = vadd.f32 %v896, %v1064
      %v1145 = vadd.f32 %v897, %v1066
      %v1146 = vadd.f32 %v898, %v1069
      %v1147 = vadd.f32 %v899, %v1071
      %v1148 = vadd.f32 %v900, %v1074
      %v1149 = vadd.f32 %v901, %v1076
      %v1150 = vadd.f32 %v902, %v1079
      %v1151 = vadd.f32 %v903, %v1081
      %v1152 = vadd.f32 %v904, %v1084
      %v1153 = vadd.f32 %v905, %v1086
      %v1154 = vadd.f32 %v906, %v1089
      %v1155 = vadd.f32 %v907, %v1091
      %v1156 = vadd.f32 %v908, %v1094
      %v1157 = vadd.f32 %v909, %v1096
      %v1158 = vadd.f32 %v910, %v1099
      %v1159 = vadd.f32 %v911, %v1101
      %v1160 = vadd.f32 %v912, %v1104
      %v1161 = vadd.f32 %v913, %v1106
      %v1162 = vadd.f32 %v914, %v1109
      %v1163 = vadd.f32 %v915, %v1111
      %v1164 = vadd.f32 %v916, %v1114
      %v1165 = vadd.f32 %v917, %v1116
      %v1166 = vadd.f32 %v918, %v1119
      %v1167 = vadd.f32 %v919, %v1121
      %v1168 = vadd.f32 %v920, %v1124
      %v1169 = vadd.f32 %v921, %v1126
      %v1170 = vadd.f32 %v922, %v1129
      %v1171 = vadd.f32 %v923, %v1131
      %v1172 = vadd.f32 %v924, %v1134
      %v1173 = vadd.f32 %v925, %v1136
      %v1174 = vld [vmem:[%s246 + $0x13] sm:$0xff]
      %v1175 = vld [vmem:[%s246 + $0x1b] sm:$0xff]
      %v1176 = vld [vmem:[%s246 + $0x23] sm:$0xff]
      %v1177 = vld [vmem:[%s246 + $0x2b] sm:$0xff]
      %v1178 = vld [vmem:[%s246 + $0x33] sm:$0xff]
      %v1179 = vld [vmem:[%s246 + $0x3b] sm:$0xff]
      %v1180 = vld [vmem:[%s246 + $0x43] sm:$0xff]
      %v1181 = vld [vmem:[%s246 + $0x4b] sm:$0xff]
      %v1182 = vld [vmem:[%s246 + $0x53] sm:$0xff]
      %v1183 = vld [vmem:[%s246 + $0x5b] sm:$0xff]
      %v1184 = vld [vmem:[%s246 + $0x63] sm:$0xff]
      %v1185 = vld [vmem:[%s246 + $0x6b] sm:$0xff]
      %v1186 = vld [vmem:[%s246 + $0x73] sm:$0xff]
      %v1187 = vld [vmem:[%s246 + $0x7b] sm:$0xff]
      %v1188 = vld [vmem:[%s246 + $0x83] sm:$0xff]
      %v1189 = vld [vmem:[%s246 + $0x8b] sm:$0xff]
      %v1190 = vld [vmem:[%s246 + $0x93] sm:$0xff]
      %v1191 = vld [vmem:[%s246 + $0x9b] sm:$0xff]
      %v1192 = vld [vmem:[%s246 + $0xa3] sm:$0xff]
      %v1193 = vld [vmem:[%s246 + $0xab] sm:$0xff]
      %v1194 = vld [vmem:[%s246 + $0xb3] sm:$0xff]
      %v1195 = vld [vmem:[%s246 + $0xbb] sm:$0xff]
      %v1196 = vld [vmem:[%s246 + $0xc3] sm:$0xff]
      %v1197 = vld [vmem:[%s246 + $0xcb] sm:$0xff]
      %v1198 = vld [vmem:[%s246 + $0xd3] sm:$0xff]
      %v1199 = vld [vmem:[%s246 + $0xdb] sm:$0xff]
      %v1200 = vld [vmem:[%s246 + $0xe3] sm:$0xff]
      %v1201 = vld [vmem:[%s246 + $0xeb] sm:$0xff]
      %v1202 = vld [vmem:[%s246 + $0xf3] sm:$0xff]
      %v1203 = vld [vmem:[%s246 + $0xfb] sm:$0xff]
      %v1204 = vld [vmem:[%s246 + $0x103] sm:$0xff]
      %v1205 = vld [vmem:[%s246 + $0x10b] sm:$0xff]
      %v1206 = vld [vmem:[%s246 + $0x113] sm:$0xff]
      %v1207 = vld [vmem:[%s246 + $0x11b] sm:$0xff]
      %v1208 = vld [vmem:[%s246 + $0x123] sm:$0xff]
      %v1209 = vld [vmem:[%s246 + $0x12b] sm:$0x3f]
      %v1210 = vpack.c.bf16 %v1175, %v1174
      %v1211 = vpack.c.bf16 %v1177, %v1176
      %v1212 = vpack.c.bf16 %v1179, %v1178
      %v1213 = vpack.c.bf16 %v1181, %v1180
      %v1214 = vpack.c.bf16 %v1183, %v1182
      %v1215 = vpack.c.bf16 %v1185, %v1184
      %v1216 = vpack.c.bf16 %v1187, %v1186
      %v1217 = vpack.c.bf16 %v1189, %v1188
      %v1218 = vpack.c.bf16 %v1191, %v1190
      %v1219 = vpack.c.bf16 %v1193, %v1192
      %v1220 = vpack.c.bf16 %v1195, %v1194
      %v1221 = vpack.c.bf16 %v1197, %v1196
      %v1222 = vpack.c.bf16 %v1199, %v1198
      %v1223 = vpack.c.bf16 %v1201, %v1200
      %v1224 = vpack.c.bf16 %v1203, %v1202
      %v1225 = vpack.c.bf16 %v1205, %v1204
      %v1226 = vpack.c.bf16 %v1207, %v1206
      %v1227 = vpack.c.bf16 %v1209, %v1208
      %s1228 = scalar_lea.vmem %s1, 8
      %v1229 = vld [vmem:[%s1228] sm:$0x3]
      %v1231 = vsel %vm364, %v1210, 0
      %v1234 = vsel %vm364, %v1211, 0
      %v1237 = vsel %vm364, %v1212, 0
      %v1240 = vsel %vm364, %v1213, 0
      %v1243 = vsel %vm364, %v1214, 0
      %v1246 = vsel %vm364, %v1215, 0
      %v1249 = vsel %vm364, %v1216, 0
      %v1252 = vsel %vm364, %v1217, 0
      %v1255 = vsel %vm364, %v1218, 0
      %v1258 = vsel %vm364, %v1219, 0
      %v1261 = vsel %vm364, %v1220, 0
      %v1264 = vsel %vm364, %v1221, 0
      %v1267 = vsel %vm364, %v1222, 0
      %v1270 = vsel %vm364, %v1223, 0
      %v1273 = vsel %vm364, %v1224, 0
      %v1276 = vsel %vm364, %v1225, 0
      %v1279 = vsel %vm364, %v1226, 0
      %v1282 = vsel %vm364, %v1227, 0
      %v1285 = vsel %vm419, %v1229, 0
      %1287 = vmatpush.bf16.msra.mxu0 0
      %1288 = vmatpush.bf16.msra.mxu0 0
      %1289 = vmatpush.bf16.msra.mxu0 0
      %1290 = vmatpush.bf16.msra.mxu0 0
      %1291 = vmatpush.bf16.msra.mxu0 0
      %1292 = vmatpush.bf16.msra.mxu0 0
      %1293 = vmatpush.bf16.msra.mxu0 0
      %1294 = vmatpush.bf16.msra.mxu0 %v1285
      %1295 = vmatmul.bf16.gmra.mxu0 %v1231
      %v1296 = vpop.f32.mrf.mxu0
      %v1297 = vadd.f32 0.0, %v1296
      %v1298 = vpop.f32.mrf.mxu0
      %v1299 = vadd.f32 0.0, %v1298
      %1300 = vmatmul.bf16.gmra.mxu0 %v1234
      %v1301 = vpop.f32.mrf.mxu0
      %v1302 = vadd.f32 0.0, %v1301
      %v1303 = vpop.f32.mrf.mxu0
      %v1304 = vadd.f32 0.0, %v1303
      %1305 = vmatmul.bf16.gmra.mxu0 %v1237
      %v1306 = vpop.f32.mrf.mxu0
      %v1307 = vadd.f32 0.0, %v1306
      %v1308 = vpop.f32.mrf.mxu0
      %v1309 = vadd.f32 0.0, %v1308
      %1310 = vmatmul.bf16.gmra.mxu0 %v1240
      %v1311 = vpop.f32.mrf.mxu0
      %v1312 = vadd.f32 0.0, %v1311
      %v1313 = vpop.f32.mrf.mxu0
      %v1314 = vadd.f32 0.0, %v1313
      %1315 = vmatmul.bf16.gmra.mxu0 %v1243
      %v1316 = vpop.f32.mrf.mxu0
      %v1317 = vadd.f32 0.0, %v1316
      %v1318 = vpop.f32.mrf.mxu0
      %v1319 = vadd.f32 0.0, %v1318
      %1320 = vmatmul.bf16.gmra.mxu0 %v1246
      %v1321 = vpop.f32.mrf.mxu0
      %v1322 = vadd.f32 0.0, %v1321
      %v1323 = vpop.f32.mrf.mxu0
      %v1324 = vadd.f32 0.0, %v1323
      %1325 = vmatmul.bf16.gmra.mxu0 %v1249
      %v1326 = vpop.f32.mrf.mxu0
      %v1327 = vadd.f32 0.0, %v1326
      %v1328 = vpop.f32.mrf.mxu0
      %v1329 = vadd.f32 0.0, %v1328
      %1330 = vmatmul.bf16.gmra.mxu0 %v1252
      %v1331 = vpop.f32.mrf.mxu0
      %v1332 = vadd.f32 0.0, %v1331
      %v1333 = vpop.f32.mrf.mxu0
      %v1334 = vadd.f32 0.0, %v1333
      %1335 = vmatmul.bf16.gmra.mxu0 %v1255
      %v1336 = vpop.f32.mrf.mxu0
      %v1337 = vadd.f32 0.0, %v1336
      %v1338 = vpop.f32.mrf.mxu0
      %v1339 = vadd.f32 0.0, %v1338
      %1340 = vmatmul.bf16.gmra.mxu0 %v1258
      %v1341 = vpop.f32.mrf.mxu0
      %v1342 = vadd.f32 0.0, %v1341
      %v1343 = vpop.f32.mrf.mxu0
      %v1344 = vadd.f32 0.0, %v1343
      %1345 = vmatmul.bf16.gmra.mxu0 %v1261
      %v1346 = vpop.f32.mrf.mxu0
      %v1347 = vadd.f32 0.0, %v1346
      %v1348 = vpop.f32.mrf.mxu0
      %v1349 = vadd.f32 0.0, %v1348
      %1350 = vmatmul.bf16.gmra.mxu0 %v1264
      %v1351 = vpop.f32.mrf.mxu0
      %v1352 = vadd.f32 0.0, %v1351
      %v1353 = vpop.f32.mrf.mxu0
      %v1354 = vadd.f32 0.0, %v1353
      %1355 = vmatmul.bf16.gmra.mxu0 %v1267
      %v1356 = vpop.f32.mrf.mxu0
      %v1357 = vadd.f32 0.0, %v1356
      %v1358 = vpop.f32.mrf.mxu0
      %v1359 = vadd.f32 0.0, %v1358
      %1360 = vmatmul.bf16.gmra.mxu0 %v1270
      %v1361 = vpop.f32.mrf.mxu0
      %v1362 = vadd.f32 0.0, %v1361
      %v1363 = vpop.f32.mrf.mxu0
      %v1364 = vadd.f32 0.0, %v1363
      %1365 = vmatmul.bf16.gmra.mxu0 %v1273
      %v1366 = vpop.f32.mrf.mxu0
      %v1367 = vadd.f32 0.0, %v1366
      %v1368 = vpop.f32.mrf.mxu0
      %v1369 = vadd.f32 0.0, %v1368
      %1370 = vmatmul.bf16.gmra.mxu0 %v1276
      %v1371 = vpop.f32.mrf.mxu0
      %v1372 = vadd.f32 0.0, %v1371
      %v1373 = vpop.f32.mrf.mxu0
      %v1374 = vadd.f32 0.0, %v1373
      %1375 = vmatmul.bf16.gmra.mxu0 %v1279
      %v1376 = vpop.f32.mrf.mxu0
      %v1377 = vadd.f32 0.0, %v1376
      %v1378 = vpop.f32.mrf.mxu0
      %v1379 = vadd.f32 0.0, %v1378
      %1380 = vmatmul.bf16.gmra.mxu0 %v1282
      %v1381 = vpop.f32.mrf.mxu0
      %v1382 = vadd.f32 0.0, %v1381
      %v1383 = vpop.f32.mrf.mxu0
      %v1384 = vadd.f32 0.0, %v1383
      %1385 = vdwg.mxu0
      %v1386 = vadd.f32 %v1138, %v1297
      %v1387 = vadd.f32 %v1139, %v1299
      %v1388 = vadd.f32 %v1140, %v1302
      %v1389 = vadd.f32 %v1141, %v1304
      %v1390 = vadd.f32 %v1142, %v1307
      %v1391 = vadd.f32 %v1143, %v1309
      %v1392 = vadd.f32 %v1144, %v1312
      %v1393 = vadd.f32 %v1145, %v1314
      %v1394 = vadd.f32 %v1146, %v1317
      %v1395 = vadd.f32 %v1147, %v1319
      %v1396 = vadd.f32 %v1148, %v1322
      %v1397 = vadd.f32 %v1149, %v1324
      %v1398 = vadd.f32 %v1150, %v1327
      %v1399 = vadd.f32 %v1151, %v1329
      %v1400 = vadd.f32 %v1152, %v1332
      %v1401 = vadd.f32 %v1153, %v1334
      %v1402 = vadd.f32 %v1154, %v1337
      %v1403 = vadd.f32 %v1155, %v1339
      %v1404 = vadd.f32 %v1156, %v1342
      %v1405 = vadd.f32 %v1157, %v1344
      %v1406 = vadd.f32 %v1158, %v1347
      %v1407 = vadd.f32 %v1159, %v1349
      %v1408 = vadd.f32 %v1160, %v1352
      %v1409 = vadd.f32 %v1161, %v1354
      %v1410 = vadd.f32 %v1162, %v1357
      %v1411 = vadd.f32 %v1163, %v1359
      %v1412 = vadd.f32 %v1164, %v1362
      %v1413 = vadd.f32 %v1165, %v1364
      %v1414 = vadd.f32 %v1166, %v1367
      %v1415 = vadd.f32 %v1167, %v1369
      %v1416 = vadd.f32 %v1168, %v1372
      %v1417 = vadd.f32 %v1169, %v1374
      %v1418 = vadd.f32 %v1170, %v1377
      %v1419 = vadd.f32 %v1171, %v1379
      %v1420 = vadd.f32 %v1172, %v1382
      %v1421 = vadd.f32 %v1173, %v1384
      %v1422 = vld [vmem:[%s246 + $0x14] sm:$0xff]
      %v1423 = vld [vmem:[%s246 + $0x1c] sm:$0xff]
      %v1424 = vld [vmem:[%s246 + $0x24] sm:$0xff]
      %v1425 = vld [vmem:[%s246 + $0x2c] sm:$0xff]
      %v1426 = vld [vmem:[%s246 + $0x34] sm:$0xff]
      %v1427 = vld [vmem:[%s246 + $0x3c] sm:$0xff]
      %v1428 = vld [vmem:[%s246 + $0x44] sm:$0xff]
      %v1429 = vld [vmem:[%s246 + $0x4c] sm:$0xff]
      %v1430 = vld [vmem:[%s246 + $0x54] sm:$0xff]
      %v1431 = vld [vmem:[%s246 + $0x5c] sm:$0xff]
      %v1432 = vld [vmem:[%s246 + $0x64] sm:$0xff]
      %v1433 = vld [vmem:[%s246 + $0x6c] sm:$0xff]
      %v1434 = vld [vmem:[%s246 + $0x74] sm:$0xff]
      %v1435 = vld [vmem:[%s246 + $0x7c] sm:$0xff]
      %v1436 = vld [vmem:[%s246 + $0x84] sm:$0xff]
      %v1437 = vld [vmem:[%s246 + $0x8c] sm:$0xff]
      %v1438 = vld [vmem:[%s246 + $0x94] sm:$0xff]
      %v1439 = vld [vmem:[%s246 + $0x9c] sm:$0xff]
      %v1440 = vld [vmem:[%s246 + $0xa4] sm:$0xff]
      %v1441 = vld [vmem:[%s246 + $0xac] sm:$0xff]
      %v1442 = vld [vmem:[%s246 + $0xb4] sm:$0xff]
      %v1443 = vld [vmem:[%s246 + $0xbc] sm:$0xff]
      %v1444 = vld [vmem:[%s246 + $0xc4] sm:$0xff]
      %v1445 = vld [vmem:[%s246 + $0xcc] sm:$0xff]
      %v1446 = vld [vmem:[%s246 + $0xd4] sm:$0xff]
      %v1447 = vld [vmem:[%s246 + $0xdc] sm:$0xff]
      %v1448 = vld [vmem:[%s246 + $0xe4] sm:$0xff]
      %v1449 = vld [vmem:[%s246 + $0xec] sm:$0xff]
      %v1450 = vld [vmem:[%s246 + $0xf4] sm:$0xff]
      %v1451 = vld [vmem:[%s246 + $0xfc] sm:$0xff]
      %v1452 = vld [vmem:[%s246 + $0x104] sm:$0xff]
      %v1453 = vld [vmem:[%s246 + $0x10c] sm:$0xff]
      %v1454 = vld [vmem:[%s246 + $0x114] sm:$0xff]
      %v1455 = vld [vmem:[%s246 + $0x11c] sm:$0xff]
      %v1456 = vld [vmem:[%s246 + $0x124] sm:$0xff]
      %v1457 = vld [vmem:[%s246 + $0x12c] sm:$0x3f]
      %v1458 = vpack.c.bf16 %v1423, %v1422
      %v1459 = vpack.c.bf16 %v1425, %v1424
      %v1460 = vpack.c.bf16 %v1427, %v1426
      %v1461 = vpack.c.bf16 %v1429, %v1428
      %v1462 = vpack.c.bf16 %v1431, %v1430
      %v1463 = vpack.c.bf16 %v1433, %v1432
      %v1464 = vpack.c.bf16 %v1435, %v1434
      %v1465 = vpack.c.bf16 %v1437, %v1436
      %v1466 = vpack.c.bf16 %v1439, %v1438
      %v1467 = vpack.c.bf16 %v1441, %v1440
      %v1468 = vpack.c.bf16 %v1443, %v1442
      %v1469 = vpack.c.bf16 %v1445, %v1444
      %v1470 = vpack.c.bf16 %v1447, %v1446
      %v1471 = vpack.c.bf16 %v1449, %v1448
      %v1472 = vpack.c.bf16 %v1451, %v1450
      %v1473 = vpack.c.bf16 %v1453, %v1452
      %v1474 = vpack.c.bf16 %v1455, %v1454
      %v1475 = vpack.c.bf16 %v1457, %v1456
      %s1476 = scalar_lea.vmem %s1, 10
      %v1477 = vld [vmem:[%s1476] sm:$0x3]
      %v1479 = vsel %vm364, %v1458, 0
      %v1482 = vsel %vm364, %v1459, 0
      %v1485 = vsel %vm364, %v1460, 0
      %v1488 = vsel %vm364, %v1461, 0
      %v1491 = vsel %vm364, %v1462, 0
      %v1494 = vsel %vm364, %v1463, 0
      %v1497 = vsel %vm364, %v1464, 0
      %v1500 = vsel %vm364, %v1465, 0
      %v1503 = vsel %vm364, %v1466, 0
      %v1506 = vsel %vm364, %v1467, 0
      %v1509 = vsel %vm364, %v1468, 0
      %v1512 = vsel %vm364, %v1469, 0
      %v1515 = vsel %vm364, %v1470, 0
      %v1518 = vsel %vm364, %v1471, 0
      %v1521 = vsel %vm364, %v1472, 0
      %v1524 = vsel %vm364, %v1473, 0
      %v1527 = vsel %vm364, %v1474, 0
      %v1530 = vsel %vm364, %v1475, 0
      %v1533 = vsel %vm419, %v1477, 0
      %1535 = vmatpush.bf16.msra.mxu0 0
      %1536 = vmatpush.bf16.msra.mxu0 0
      %1537 = vmatpush.bf16.msra.mxu0 0
      %1538 = vmatpush.bf16.msra.mxu0 0
      %1539 = vmatpush.bf16.msra.mxu0 0
      %1540 = vmatpush.bf16.msra.mxu0 0
      %1541 = vmatpush.bf16.msra.mxu0 0
      %1542 = vmatpush.bf16.msra.mxu0 %v1533
      %1543 = vmatmul.bf16.gmra.mxu0 %v1479
      %v1544 = vpop.f32.mrf.mxu0
      %v1545 = vadd.f32 0.0, %v1544
      %v1546 = vpop.f32.mrf.mxu0
      %v1547 = vadd.f32 0.0, %v1546
      %1548 = vmatmul.bf16.gmra.mxu0 %v1482
      %v1549 = vpop.f32.mrf.mxu0
      %v1550 = vadd.f32 0.0, %v1549
      %v1551 = vpop.f32.mrf.mxu0
      %v1552 = vadd.f32 0.0, %v1551
      %1553 = vmatmul.bf16.gmra.mxu0 %v1485
      %v1554 = vpop.f32.mrf.mxu0
      %v1555 = vadd.f32 0.0, %v1554
      %v1556 = vpop.f32.mrf.mxu0
      %v1557 = vadd.f32 0.0, %v1556
      %1558 = vmatmul.bf16.gmra.mxu0 %v1488
      %v1559 = vpop.f32.mrf.mxu0
      %v1560 = vadd.f32 0.0, %v1559
      %v1561 = vpop.f32.mrf.mxu0
      %v1562 = vadd.f32 0.0, %v1561
      %1563 = vmatmul.bf16.gmra.mxu0 %v1491
      %v1564 = vpop.f32.mrf.mxu0
      %v1565 = vadd.f32 0.0, %v1564
      %v1566 = vpop.f32.mrf.mxu0
      %v1567 = vadd.f32 0.0, %v1566
      %1568 = vmatmul.bf16.gmra.mxu0 %v1494
      %v1569 = vpop.f32.mrf.mxu0
      %v1570 = vadd.f32 0.0, %v1569
      %v1571 = vpop.f32.mrf.mxu0
      %v1572 = vadd.f32 0.0, %v1571
      %1573 = vmatmul.bf16.gmra.mxu0 %v1497
      %v1574 = vpop.f32.mrf.mxu0
      %v1575 = vadd.f32 0.0, %v1574
      %v1576 = vpop.f32.mrf.mxu0
      %v1577 = vadd.f32 0.0, %v1576
      %1578 = vmatmul.bf16.gmra.mxu0 %v1500
      %v1579 = vpop.f32.mrf.mxu0
      %v1580 = vadd.f32 0.0, %v1579
      %v1581 = vpop.f32.mrf.mxu0
      %v1582 = vadd.f32 0.0, %v1581
      %1583 = vmatmul.bf16.gmra.mxu0 %v1503
      %v1584 = vpop.f32.mrf.mxu0
      %v1585 = vadd.f32 0.0, %v1584
      %v1586 = vpop.f32.mrf.mxu0
      %v1587 = vadd.f32 0.0, %v1586
      %1588 = vmatmul.bf16.gmra.mxu0 %v1506
      %v1589 = vpop.f32.mrf.mxu0
      %v1590 = vadd.f32 0.0, %v1589
      %v1591 = vpop.f32.mrf.mxu0
      %v1592 = vadd.f32 0.0, %v1591
      %1593 = vmatmul.bf16.gmra.mxu0 %v1509
      %v1594 = vpop.f32.mrf.mxu0
      %v1595 = vadd.f32 0.0, %v1594
      %v1596 = vpop.f32.mrf.mxu0
      %v1597 = vadd.f32 0.0, %v1596
      %1598 = vmatmul.bf16.gmra.mxu0 %v1512
      %v1599 = vpop.f32.mrf.mxu0
      %v1600 = vadd.f32 0.0, %v1599
      %v1601 = vpop.f32.mrf.mxu0
      %v1602 = vadd.f32 0.0, %v1601
      %1603 = vmatmul.bf16.gmra.mxu0 %v1515
      %v1604 = vpop.f32.mrf.mxu0
      %v1605 = vadd.f32 0.0, %v1604
      %v1606 = vpop.f32.mrf.mxu0
      %v1607 = vadd.f32 0.0, %v1606
      %1608 = vmatmul.bf16.gmra.mxu0 %v1518
      %v1609 = vpop.f32.mrf.mxu0
      %v1610 = vadd.f32 0.0, %v1609
      %v1611 = vpop.f32.mrf.mxu0
      %v1612 = vadd.f32 0.0, %v1611
      %1613 = vmatmul.bf16.gmra.mxu0 %v1521
      %v1614 = vpop.f32.mrf.mxu0
      %v1615 = vadd.f32 0.0, %v1614
      %v1616 = vpop.f32.mrf.mxu0
      %v1617 = vadd.f32 0.0, %v1616
      %1618 = vmatmul.bf16.gmra.mxu0 %v1524
      %v1619 = vpop.f32.mrf.mxu0
      %v1620 = vadd.f32 0.0, %v1619
      %v1621 = vpop.f32.mrf.mxu0
      %v1622 = vadd.f32 0.0, %v1621
      %1623 = vmatmul.bf16.gmra.mxu0 %v1527
      %v1624 = vpop.f32.mrf.mxu0
      %v1625 = vadd.f32 0.0, %v1624
      %v1626 = vpop.f32.mrf.mxu0
      %v1627 = vadd.f32 0.0, %v1626
      %1628 = vmatmul.bf16.gmra.mxu0 %v1530
      %v1629 = vpop.f32.mrf.mxu0
      %v1630 = vadd.f32 0.0, %v1629
      %v1631 = vpop.f32.mrf.mxu0
      %v1632 = vadd.f32 0.0, %v1631
      %1633 = vdwg.mxu0
      %v1634 = vadd.f32 %v1386, %v1545
      %v1635 = vadd.f32 %v1387, %v1547
      %v1636 = vadd.f32 %v1388, %v1550
      %v1637 = vadd.f32 %v1389, %v1552
      %v1638 = vadd.f32 %v1390, %v1555
      %v1639 = vadd.f32 %v1391, %v1557
      %v1640 = vadd.f32 %v1392, %v1560
      %v1641 = vadd.f32 %v1393, %v1562
      %v1642 = vadd.f32 %v1394, %v1565
      %v1643 = vadd.f32 %v1395, %v1567
      %v1644 = vadd.f32 %v1396, %v1570
      %v1645 = vadd.f32 %v1397, %v1572
      %v1646 = vadd.f32 %v1398, %v1575
      %v1647 = vadd.f32 %v1399, %v1577
      %v1648 = vadd.f32 %v1400, %v1580
      %v1649 = vadd.f32 %v1401, %v1582
      %v1650 = vadd.f32 %v1402, %v1585
      %v1651 = vadd.f32 %v1403, %v1587
      %v1652 = vadd.f32 %v1404, %v1590
      %v1653 = vadd.f32 %v1405, %v1592
      %v1654 = vadd.f32 %v1406, %v1595
      %v1655 = vadd.f32 %v1407, %v1597
      %v1656 = vadd.f32 %v1408, %v1600
      %v1657 = vadd.f32 %v1409, %v1602
      %v1658 = vadd.f32 %v1410, %v1605
      %v1659 = vadd.f32 %v1411, %v1607
      %v1660 = vadd.f32 %v1412, %v1610
      %v1661 = vadd.f32 %v1413, %v1612
      %v1662 = vadd.f32 %v1414, %v1615
      %v1663 = vadd.f32 %v1415, %v1617
      %v1664 = vadd.f32 %v1416, %v1620
      %v1665 = vadd.f32 %v1417, %v1622
      %v1666 = vadd.f32 %v1418, %v1625
      %v1667 = vadd.f32 %v1419, %v1627
      %v1668 = vadd.f32 %v1420, %v1630
      %v1669 = vadd.f32 %v1421, %v1632
      %v1670 = vld [vmem:[%s246 + $0x24] sm:$0xff]
      %v1671 = vld [vmem:[%s246 + $0x2c] sm:$0xff]
      %v1672 = vld [vmem:[%s246 + $0x34] sm:$0xff]
      %v1673 = vld [vmem:[%s246 + $0x3c] sm:$0xff]
      %v1674 = vld [vmem:[%s246 + $0x44] sm:$0xff]
      %v1675 = vld [vmem:[%s246 + $0x4c] sm:$0xff]
      %v1676 = vld [vmem:[%s246 + $0x54] sm:$0xff]
      %v1677 = vld [vmem:[%s246 + $0x5c] sm:$0xff]
      %v1678 = vld [vmem:[%s246 + $0x64] sm:$0xff]
      %v1679 = vld [vmem:[%s246 + $0x6c] sm:$0xff]
      %v1680 = vld [vmem:[%s246 + $0x74] sm:$0xff]
      %v1681 = vld [vmem:[%s246 + $0x7c] sm:$0xff]
      %v1682 = vld [vmem:[%s246 + $0x84] sm:$0xff]
      %v1683 = vld [vmem:[%s246 + $0x8c] sm:$0xff]
      %v1684 = vld [vmem:[%s246 + $0x94] sm:$0xff]
      %v1685 = vld [vmem:[%s246 + $0x9c] sm:$0xff]
      %v1686 = vld [vmem:[%s246 + $0xa4] sm:$0xff]
      %v1687 = vld [vmem:[%s246 + $0xac] sm:$0xff]
      %v1688 = vld [vmem:[%s246 + $0xb4] sm:$0xff]
      %v1689 = vld [vmem:[%s246 + $0xbc] sm:$0xff]
      %v1690 = vld [vmem:[%s246 + $0xc4] sm:$0xff]
      %v1691 = vld [vmem:[%s246 + $0xcc] sm:$0xff]
      %v1692 = vld [vmem:[%s246 + $0xd4] sm:$0xff]
      %v1693 = vld [vmem:[%s246 + $0xdc] sm:$0xff]
      %v1694 = vld [vmem:[%s246 + $0xe4] sm:$0xff]
      %v1695 = vld [vmem:[%s246 + $0xec] sm:$0xff]
      %v1696 = vld [vmem:[%s246 + $0xf4] sm:$0xff]
      %v1697 = vld [vmem:[%s246 + $0xfc] sm:$0xff]
      %v1698 = vld [vmem:[%s246 + $0x104] sm:$0xff]
      %v1699 = vld [vmem:[%s246 + $0x10c] sm:$0xff]
      %v1700 = vld [vmem:[%s246 + $0x114] sm:$0xff]
      %v1701 = vld [vmem:[%s246 + $0x11c] sm:$0xff]
      %v1702 = vld [vmem:[%s246 + $0x124] sm:$0xff]
      %v1703 = vld [vmem:[%s246 + $0x12c] sm:$0xff]
      %v1704 = vld [vmem:[%s246 + $0x134] sm:$0xff]
      %v1705 = vld [vmem:[%s246 + $0x13c] sm:$0x3f]
      %v1706 = vpack.c.bf16 %v1671, %v1670
      %v1707 = vpack.c.bf16 %v1673, %v1672
      %v1708 = vpack.c.bf16 %v1675, %v1674
      %v1709 = vpack.c.bf16 %v1677, %v1676
      %v1710 = vpack.c.bf16 %v1679, %v1678
      %v1711 = vpack.c.bf16 %v1681, %v1680
      %v1712 = vpack.c.bf16 %v1683, %v1682
      %v1713 = vpack.c.bf16 %v1685, %v1684
      %v1714 = vpack.c.bf16 %v1687, %v1686
      %v1715 = vpack.c.bf16 %v1689, %v1688
      %v1716 = vpack.c.bf16 %v1691, %v1690
      %v1717 = vpack.c.bf16 %v1693, %v1692
      %v1718 = vpack.c.bf16 %v1695, %v1694
      %v1719 = vpack.c.bf16 %v1697, %v1696
      %v1720 = vpack.c.bf16 %v1699, %v1698
      %v1721 = vpack.c.bf16 %v1701, %v1700
      %v1722 = vpack.c.bf16 %v1703, %v1702
      %v1723 = vpack.c.bf16 %v1705, %v1704
      %s1724 = scalar_lea.vmem %s1, 12
      %v1725 = vld [vmem:[%s1724] sm:$0x3]
      %v1727 = vsel %vm364, %v1706, 0
      %v1730 = vsel %vm364, %v1707, 0
      %v1733 = vsel %vm364, %v1708, 0
      %v1736 = vsel %vm364, %v1709, 0
      %v1739 = vsel %vm364, %v1710, 0
      %v1742 = vsel %vm364, %v1711, 0
      %v1745 = vsel %vm364, %v1712, 0
      %v1748 = vsel %vm364, %v1713, 0
      %v1751 = vsel %vm364, %v1714, 0
      %v1754 = vsel %vm364, %v1715, 0
      %v1757 = vsel %vm364, %v1716, 0
      %v1760 = vsel %vm364, %v1717, 0
      %v1763 = vsel %vm364, %v1718, 0
      %v1766 = vsel %vm364, %v1719, 0
      %v1769 = vsel %vm364, %v1720, 0
      %v1772 = vsel %vm364, %v1721, 0
      %v1775 = vsel %vm364, %v1722, 0
      %v1778 = vsel %vm364, %v1723, 0
      %v1781 = vsel %vm419, %v1725, 0
      %1783 = vmatpush.bf16.msra.mxu0 0
      %1784 = vmatpush.bf16.msra.mxu0 0
      %1785 = vmatpush.bf16.msra.mxu0 0
      %1786 = vmatpush.bf16.msra.mxu0 0
      %1787 = vmatpush.bf16.msra.mxu0 0
      %1788 = vmatpush.bf16.msra.mxu0 0
      %1789 = vmatpush.bf16.msra.mxu0 0
      %1790 = vmatpush.bf16.msra.mxu0 %v1781
      %1791 = vmatmul.bf16.gmra.mxu0 %v1727
      %v1792 = vpop.f32.mrf.mxu0
      %v1793 = vadd.f32 0.0, %v1792
      %v1794 = vpop.f32.mrf.mxu0
      %v1795 = vadd.f32 0.0, %v1794
      %1796 = vmatmul.bf16.gmra.mxu0 %v1730
      %v1797 = vpop.f32.mrf.mxu0
      %v1798 = vadd.f32 0.0, %v1797
      %v1799 = vpop.f32.mrf.mxu0
      %v1800 = vadd.f32 0.0, %v1799
      %1801 = vmatmul.bf16.gmra.mxu0 %v1733
      %v1802 = vpop.f32.mrf.mxu0
      %v1803 = vadd.f32 0.0, %v1802
      %v1804 = vpop.f32.mrf.mxu0
      %v1805 = vadd.f32 0.0, %v1804
      %1806 = vmatmul.bf16.gmra.mxu0 %v1736
      %v1807 = vpop.f32.mrf.mxu0
      %v1808 = vadd.f32 0.0, %v1807
      %v1809 = vpop.f32.mrf.mxu0
      %v1810 = vadd.f32 0.0, %v1809
      %1811 = vmatmul.bf16.gmra.mxu0 %v1739
      %v1812 = vpop.f32.mrf.mxu0
      %v1813 = vadd.f32 0.0, %v1812
      %v1814 = vpop.f32.mrf.mxu0
      %v1815 = vadd.f32 0.0, %v1814
      %1816 = vmatmul.bf16.gmra.mxu0 %v1742
      %v1817 = vpop.f32.mrf.mxu0
      %v1818 = vadd.f32 0.0, %v1817
      %v1819 = vpop.f32.mrf.mxu0
      %v1820 = vadd.f32 0.0, %v1819
      %1821 = vmatmul.bf16.gmra.mxu0 %v1745
      %v1822 = vpop.f32.mrf.mxu0
      %v1823 = vadd.f32 0.0, %v1822
      %v1824 = vpop.f32.mrf.mxu0
      %v1825 = vadd.f32 0.0, %v1824
      %1826 = vmatmul.bf16.gmra.mxu0 %v1748
      %v1827 = vpop.f32.mrf.mxu0
      %v1828 = vadd.f32 0.0, %v1827
      %v1829 = vpop.f32.mrf.mxu0
      %v1830 = vadd.f32 0.0, %v1829
      %1831 = vmatmul.bf16.gmra.mxu0 %v1751
      %v1832 = vpop.f32.mrf.mxu0
      %v1833 = vadd.f32 0.0, %v1832
      %v1834 = vpop.f32.mrf.mxu0
      %v1835 = vadd.f32 0.0, %v1834
      %1836 = vmatmul.bf16.gmra.mxu0 %v1754
      %v1837 = vpop.f32.mrf.mxu0
      %v1838 = vadd.f32 0.0, %v1837
      %v1839 = vpop.f32.mrf.mxu0
      %v1840 = vadd.f32 0.0, %v1839
      %1841 = vmatmul.bf16.gmra.mxu0 %v1757
      %v1842 = vpop.f32.mrf.mxu0
      %v1843 = vadd.f32 0.0, %v1842
      %v1844 = vpop.f32.mrf.mxu0
      %v1845 = vadd.f32 0.0, %v1844
      %1846 = vmatmul.bf16.gmra.mxu0 %v1760
      %v1847 = vpop.f32.mrf.mxu0
      %v1848 = vadd.f32 0.0, %v1847
      %v1849 = vpop.f32.mrf.mxu0
      %v1850 = vadd.f32 0.0, %v1849
      %1851 = vmatmul.bf16.gmra.mxu0 %v1763
      %v1852 = vpop.f32.mrf.mxu0
      %v1853 = vadd.f32 0.0, %v1852
      %v1854 = vpop.f32.mrf.mxu0
      %v1855 = vadd.f32 0.0, %v1854
      %1856 = vmatmul.bf16.gmra.mxu0 %v1766
      %v1857 = vpop.f32.mrf.mxu0
      %v1858 = vadd.f32 0.0, %v1857
      %v1859 = vpop.f32.mrf.mxu0
      %v1860 = vadd.f32 0.0, %v1859
      %1861 = vmatmul.bf16.gmra.mxu0 %v1769
      %v1862 = vpop.f32.mrf.mxu0
      %v1863 = vadd.f32 0.0, %v1862
      %v1864 = vpop.f32.mrf.mxu0
      %v1865 = vadd.f32 0.0, %v1864
      %1866 = vmatmul.bf16.gmra.mxu0 %v1772
      %v1867 = vpop.f32.mrf.mxu0
      %v1868 = vadd.f32 0.0, %v1867
      %v1869 = vpop.f32.mrf.mxu0
      %v1870 = vadd.f32 0.0, %v1869
      %1871 = vmatmul.bf16.gmra.mxu0 %v1775
      %v1872 = vpop.f32.mrf.mxu0
      %v1873 = vadd.f32 0.0, %v1872
      %v1874 = vpop.f32.mrf.mxu0
      %v1875 = vadd.f32 0.0, %v1874
      %1876 = vmatmul.bf16.gmra.mxu0 %v1778
      %v1877 = vpop.f32.mrf.mxu0
      %v1878 = vadd.f32 0.0, %v1877
      %v1879 = vpop.f32.mrf.mxu0
      %v1880 = vadd.f32 0.0, %v1879
      %1881 = vdwg.mxu0
      %v1882 = vadd.f32 %v1634, %v1793
      %v1883 = vadd.f32 %v1635, %v1795
      %v1884 = vadd.f32 %v1636, %v1798
      %v1885 = vadd.f32 %v1637, %v1800
      %v1886 = vadd.f32 %v1638, %v1803
      %v1887 = vadd.f32 %v1639, %v1805
      %v1888 = vadd.f32 %v1640, %v1808
      %v1889 = vadd.f32 %v1641, %v1810
      %v1890 = vadd.f32 %v1642, %v1813
      %v1891 = vadd.f32 %v1643, %v1815
      %v1892 = vadd.f32 %v1644, %v1818
      %v1893 = vadd.f32 %v1645, %v1820
      %v1894 = vadd.f32 %v1646, %v1823
      %v1895 = vadd.f32 %v1647, %v1825
      %v1896 = vadd.f32 %v1648, %v1828
      %v1897 = vadd.f32 %v1649, %v1830
      %v1898 = vadd.f32 %v1650, %v1833
      %v1899 = vadd.f32 %v1651, %v1835
      %v1900 = vadd.f32 %v1652, %v1838
      %v1901 = vadd.f32 %v1653, %v1840
      %v1902 = vadd.f32 %v1654, %v1843
      %v1903 = vadd.f32 %v1655, %v1845
      %v1904 = vadd.f32 %v1656, %v1848
      %v1905 = vadd.f32 %v1657, %v1850
      %v1906 = vadd.f32 %v1658, %v1853
      %v1907 = vadd.f32 %v1659, %v1855
      %v1908 = vadd.f32 %v1660, %v1858
      %v1909 = vadd.f32 %v1661, %v1860
      %v1910 = vadd.f32 %v1662, %v1863
      %v1911 = vadd.f32 %v1663, %v1865
      %v1912 = vadd.f32 %v1664, %v1868
      %v1913 = vadd.f32 %v1665, %v1870
      %v1914 = vadd.f32 %v1666, %v1873
      %v1915 = vadd.f32 %v1667, %v1875
      %v1916 = vadd.f32 %v1668, %v1878
      %v1917 = vadd.f32 %v1669, %v1880
      %v1918 = vld [vmem:[%s246 + $0x25] sm:$0xff]
      %v1919 = vld [vmem:[%s246 + $0x2d] sm:$0xff]
      %v1920 = vld [vmem:[%s246 + $0x35] sm:$0xff]
      %v1921 = vld [vmem:[%s246 + $0x3d] sm:$0xff]
      %v1922 = vld [vmem:[%s246 + $0x45] sm:$0xff]
      %v1923 = vld [vmem:[%s246 + $0x4d] sm:$0xff]
      %v1924 = vld [vmem:[%s246 + $0x55] sm:$0xff]
      %v1925 = vld [vmem:[%s246 + $0x5d] sm:$0xff]
      %v1926 = vld [vmem:[%s246 + $0x65] sm:$0xff]
      %v1927 = vld [vmem:[%s246 + $0x6d] sm:$0xff]
      %v1928 = vld [vmem:[%s246 + $0x75] sm:$0xff]
      %v1929 = vld [vmem:[%s246 + $0x7d] sm:$0xff]
      %v1930 = vld [vmem:[%s246 + $0x85] sm:$0xff]
      %v1931 = vld [vmem:[%s246 + $0x8d] sm:$0xff]
      %v1932 = vld [vmem:[%s246 + $0x95] sm:$0xff]
      %v1933 = vld [vmem:[%s246 + $0x9d] sm:$0xff]
      %v1934 = vld [vmem:[%s246 + $0xa5] sm:$0xff]
      %v1935 = vld [vmem:[%s246 + $0xad] sm:$0xff]
      %v1936 = vld [vmem:[%s246 + $0xb5] sm:$0xff]
      %v1937 = vld [vmem:[%s246 + $0xbd] sm:$0xff]
      %v1938 = vld [vmem:[%s246 + $0xc5] sm:$0xff]
      %v1939 = vld [vmem:[%s246 + $0xcd] sm:$0xff]
      %v1940 = vld [vmem:[%s246 + $0xd5] sm:$0xff]
      %v1941 = vld [vmem:[%s246 + $0xdd] sm:$0xff]
      %v1942 = vld [vmem:[%s246 + $0xe5] sm:$0xff]
      %v1943 = vld [vmem:[%s246 + $0xed] sm:$0xff]
      %v1944 = vld [vmem:[%s246 + $0xf5] sm:$0xff]
      %v1945 = vld [vmem:[%s246 + $0xfd] sm:$0xff]
      %v1946 = vld [vmem:[%s246 + $0x105] sm:$0xff]
      %v1947 = vld [vmem:[%s246 + $0x10d] sm:$0xff]
      %v1948 = vld [vmem:[%s246 + $0x115] sm:$0xff]
      %v1949 = vld [vmem:[%s246 + $0x11d] sm:$0xff]
      %v1950 = vld [vmem:[%s246 + $0x125] sm:$0xff]
      %v1951 = vld [vmem:[%s246 + $0x12d] sm:$0xff]
      %v1952 = vld [vmem:[%s246 + $0x135] sm:$0xff]
      %v1953 = vld [vmem:[%s246 + $0x13d] sm:$0x3f]
      %v1954 = vpack.c.bf16 %v1919, %v1918
      %v1955 = vpack.c.bf16 %v1921, %v1920
      %v1956 = vpack.c.bf16 %v1923, %v1922
      %v1957 = vpack.c.bf16 %v1925, %v1924
      %v1958 = vpack.c.bf16 %v1927, %v1926
      %v1959 = vpack.c.bf16 %v1929, %v1928
      %v1960 = vpack.c.bf16 %v1931, %v1930
      %v1961 = vpack.c.bf16 %v1933, %v1932
      %v1962 = vpack.c.bf16 %v1935, %v1934
      %v1963 = vpack.c.bf16 %v1937, %v1936
      %v1964 = vpack.c.bf16 %v1939, %v1938
      %v1965 = vpack.c.bf16 %v1941, %v1940
      %v1966 = vpack.c.bf16 %v1943, %v1942
      %v1967 = vpack.c.bf16 %v1945, %v1944
      %v1968 = vpack.c.bf16 %v1947, %v1946
      %v1969 = vpack.c.bf16 %v1949, %v1948
      %v1970 = vpack.c.bf16 %v1951, %v1950
      %v1971 = vpack.c.bf16 %v1953, %v1952
      %s1972 = scalar_lea.vmem %s1, 14
      %v1973 = vld [vmem:[%s1972] sm:$0x3]
      %v1975 = vsel %vm364, %v1954, 0
      %v1978 = vsel %vm364, %v1955, 0
      %v1981 = vsel %vm364, %v1956, 0
      %v1984 = vsel %vm364, %v1957, 0
      %v1987 = vsel %vm364, %v1958, 0
      %v1990 = vsel %vm364, %v1959, 0
      %v1993 = vsel %vm364, %v1960, 0
      %v1996 = vsel %vm364, %v1961, 0
      %v1999 = vsel %vm364, %v1962, 0
      %v2002 = vsel %vm364, %v1963, 0
      %v2005 = vsel %vm364, %v1964, 0
      %v2008 = vsel %vm364, %v1965, 0
      %v2011 = vsel %vm364, %v1966, 0
      %v2014 = vsel %vm364, %v1967, 0
      %v2017 = vsel %vm364, %v1968, 0
      %v2020 = vsel %vm364, %v1969, 0
      %v2023 = vsel %vm364, %v1970, 0
      %v2026 = vsel %vm364, %v1971, 0
      %v2029 = vsel %vm419, %v1973, 0
      %2031 = vmatpush.bf16.msra.mxu0 0
      %2032 = vmatpush.bf16.msra.mxu0 0
      %2033 = vmatpush.bf16.msra.mxu0 0
      %2034 = vmatpush.bf16.msra.mxu0 0
      %2035 = vmatpush.bf16.msra.mxu0 0
      %2036 = vmatpush.bf16.msra.mxu0 0
      %2037 = vmatpush.bf16.msra.mxu0 0
      %2038 = vmatpush.bf16.msra.mxu0 %v2029
      %2039 = vmatmul.bf16.gmra.mxu0 %v1975
      %v2040 = vpop.f32.mrf.mxu0
      %v2041 = vadd.f32 0.0, %v2040
      %v2042 = vpop.f32.mrf.mxu0
      %v2043 = vadd.f32 0.0, %v2042
      %2044 = vmatmul.bf16.gmra.mxu0 %v1978
      %v2045 = vpop.f32.mrf.mxu0
      %v2046 = vadd.f32 0.0, %v2045
      %v2047 = vpop.f32.mrf.mxu0
      %v2048 = vadd.f32 0.0, %v2047
      %2049 = vmatmul.bf16.gmra.mxu0 %v1981
      %v2050 = vpop.f32.mrf.mxu0
      %v2051 = vadd.f32 0.0, %v2050
      %v2052 = vpop.f32.mrf.mxu0
      %v2053 = vadd.f32 0.0, %v2052
      %2054 = vmatmul.bf16.gmra.mxu0 %v1984
      %v2055 = vpop.f32.mrf.mxu0
      %v2056 = vadd.f32 0.0, %v2055
      %v2057 = vpop.f32.mrf.mxu0
      %v2058 = vadd.f32 0.0, %v2057
      %2059 = vmatmul.bf16.gmra.mxu0 %v1987
      %v2060 = vpop.f32.mrf.mxu0
      %v2061 = vadd.f32 0.0, %v2060
      %v2062 = vpop.f32.mrf.mxu0
      %v2063 = vadd.f32 0.0, %v2062
      %2064 = vmatmul.bf16.gmra.mxu0 %v1990
      %v2065 = vpop.f32.mrf.mxu0
      %v2066 = vadd.f32 0.0, %v2065
      %v2067 = vpop.f32.mrf.mxu0
      %v2068 = vadd.f32 0.0, %v2067
      %2069 = vmatmul.bf16.gmra.mxu0 %v1993
      %v2070 = vpop.f32.mrf.mxu0
      %v2071 = vadd.f32 0.0, %v2070
      %v2072 = vpop.f32.mrf.mxu0
      %v2073 = vadd.f32 0.0, %v2072
      %2074 = vmatmul.bf16.gmra.mxu0 %v1996
      %v2075 = vpop.f32.mrf.mxu0
      %v2076 = vadd.f32 0.0, %v2075
      %v2077 = vpop.f32.mrf.mxu0
      %v2078 = vadd.f32 0.0, %v2077
      %2079 = vmatmul.bf16.gmra.mxu0 %v1999
      %v2080 = vpop.f32.mrf.mxu0
      %v2081 = vadd.f32 0.0, %v2080
      %v2082 = vpop.f32.mrf.mxu0
      %v2083 = vadd.f32 0.0, %v2082
      %2084 = vmatmul.bf16.gmra.mxu0 %v2002
      %v2085 = vpop.f32.mrf.mxu0
      %v2086 = vadd.f32 0.0, %v2085
      %v2087 = vpop.f32.mrf.mxu0
      %v2088 = vadd.f32 0.0, %v2087
      %2089 = vmatmul.bf16.gmra.mxu0 %v2005
      %v2090 = vpop.f32.mrf.mxu0
      %v2091 = vadd.f32 0.0, %v2090
      %v2092 = vpop.f32.mrf.mxu0
      %v2093 = vadd.f32 0.0, %v2092
      %2094 = vmatmul.bf16.gmra.mxu0 %v2008
      %v2095 = vpop.f32.mrf.mxu0
      %v2096 = vadd.f32 0.0, %v2095
      %v2097 = vpop.f32.mrf.mxu0
      %v2098 = vadd.f32 0.0, %v2097
      %2099 = vmatmul.bf16.gmra.mxu0 %v2011
      %v2100 = vpop.f32.mrf.mxu0
      %v2101 = vadd.f32 0.0, %v2100
      %v2102 = vpop.f32.mrf.mxu0
      %v2103 = vadd.f32 0.0, %v2102
      %2104 = vmatmul.bf16.gmra.mxu0 %v2014
      %v2105 = vpop.f32.mrf.mxu0
      %v2106 = vadd.f32 0.0, %v2105
      %v2107 = vpop.f32.mrf.mxu0
      %v2108 = vadd.f32 0.0, %v2107
      %2109 = vmatmul.bf16.gmra.mxu0 %v2017
      %v2110 = vpop.f32.mrf.mxu0
      %v2111 = vadd.f32 0.0, %v2110
      %v2112 = vpop.f32.mrf.mxu0
      %v2113 = vadd.f32 0.0, %v2112
      %2114 = vmatmul.bf16.gmra.mxu0 %v2020
      %v2115 = vpop.f32.mrf.mxu0
      %v2116 = vadd.f32 0.0, %v2115
      %v2117 = vpop.f32.mrf.mxu0
      %v2118 = vadd.f32 0.0, %v2117
      %2119 = vmatmul.bf16.gmra.mxu0 %v2023
      %v2120 = vpop.f32.mrf.mxu0
      %v2121 = vadd.f32 0.0, %v2120
      %v2122 = vpop.f32.mrf.mxu0
      %v2123 = vadd.f32 0.0, %v2122
      %2124 = vmatmul.bf16.gmra.mxu0 %v2026
      %v2125 = vpop.f32.mrf.mxu0
      %v2126 = vadd.f32 0.0, %v2125
      %v2127 = vpop.f32.mrf.mxu0
      %v2128 = vadd.f32 0.0, %v2127
      %2129 = vdwg.mxu0
      %v2130 = vadd.f32 %v1882, %v2041
      %v2131 = vadd.f32 %v1883, %v2043
      %v2132 = vadd.f32 %v1884, %v2046
      %v2133 = vadd.f32 %v1885, %v2048
      %v2134 = vadd.f32 %v1886, %v2051
      %v2135 = vadd.f32 %v1887, %v2053
      %v2136 = vadd.f32 %v1888, %v2056
      %v2137 = vadd.f32 %v1889, %v2058
      %v2138 = vadd.f32 %v1890, %v2061
      %v2139 = vadd.f32 %v1891, %v2063
      %v2140 = vadd.f32 %v1892, %v2066
      %v2141 = vadd.f32 %v1893, %v2068
      %v2142 = vadd.f32 %v1894, %v2071
      %v2143 = vadd.f32 %v1895, %v2073
      %v2144 = vadd.f32 %v1896, %v2076
      %v2145 = vadd.f32 %v1897, %v2078
      %v2146 = vadd.f32 %v1898, %v2081
      %v2147 = vadd.f32 %v1899, %v2083
      %v2148 = vadd.f32 %v1900, %v2086
      %v2149 = vadd.f32 %v1901, %v2088
      %v2150 = vadd.f32 %v1902, %v2091
      %v2151 = vadd.f32 %v1903, %v2093
      %v2152 = vadd.f32 %v1904, %v2096
      %v2153 = vadd.f32 %v1905, %v2098
      %v2154 = vadd.f32 %v1906, %v2101
      %v2155 = vadd.f32 %v1907, %v2103
      %v2156 = vadd.f32 %v1908, %v2106
      %v2157 = vadd.f32 %v1909, %v2108
      %v2158 = vadd.f32 %v1910, %v2111
      %v2159 = vadd.f32 %v1911, %v2113
      %v2160 = vadd.f32 %v1912, %v2116
      %v2161 = vadd.f32 %v1913, %v2118
      %v2162 = vadd.f32 %v1914, %v2121
      %v2163 = vadd.f32 %v1915, %v2123
      %v2164 = vadd.f32 %v1916, %v2126
      %v2165 = vadd.f32 %v1917, %v2128
      %v2166 = vld [vmem:[%s246 + $0x26] sm:$0xff]
      %v2167 = vld [vmem:[%s246 + $0x2e] sm:$0xff]
      %v2168 = vld [vmem:[%s246 + $0x36] sm:$0xff]
      %v2169 = vld [vmem:[%s246 + $0x3e] sm:$0xff]
      %v2170 = vld [vmem:[%s246 + $0x46] sm:$0xff]
      %v2171 = vld [vmem:[%s246 + $0x4e] sm:$0xff]
      %v2172 = vld [vmem:[%s246 + $0x56] sm:$0xff]
      %v2173 = vld [vmem:[%s246 + $0x5e] sm:$0xff]
      %v2174 = vld [vmem:[%s246 + $0x66] sm:$0xff]
      %v2175 = vld [vmem:[%s246 + $0x6e] sm:$0xff]
      %v2176 = vld [vmem:[%s246 + $0x76] sm:$0xff]
      %v2177 = vld [vmem:[%s246 + $0x7e] sm:$0xff]
      %v2178 = vld [vmem:[%s246 + $0x86] sm:$0xff]
      %v2179 = vld [vmem:[%s246 + $0x8e] sm:$0xff]
      %v2180 = vld [vmem:[%s246 + $0x96] sm:$0xff]
      %v2181 = vld [vmem:[%s246 + $0x9e] sm:$0xff]
      %v2182 = vld [vmem:[%s246 + $0xa6] sm:$0xff]
      %v2183 = vld [vmem:[%s246 + $0xae] sm:$0xff]
      %v2184 = vld [vmem:[%s246 + $0xb6] sm:$0xff]
      %v2185 = vld [vmem:[%s246 + $0xbe] sm:$0xff]
      %v2186 = vld [vmem:[%s246 + $0xc6] sm:$0xff]
      %v2187 = vld [vmem:[%s246 + $0xce] sm:$0xff]
      %v2188 = vld [vmem:[%s246 + $0xd6] sm:$0xff]
      %v2189 = vld [vmem:[%s246 + $0xde] sm:$0xff]
      %v2190 = vld [vmem:[%s246 + $0xe6] sm:$0xff]
      %v2191 = vld [vmem:[%s246 + $0xee] sm:$0xff]
      %v2192 = vld [vmem:[%s246 + $0xf6] sm:$0xff]
      %v2193 = vld [vmem:[%s246 + $0xfe] sm:$0xff]
      %v2194 = vld [vmem:[%s246 + $0x106] sm:$0xff]
      %v2195 = vld [vmem:[%s246 + $0x10e] sm:$0xff]
      %v2196 = vld [vmem:[%s246 + $0x116] sm:$0xff]
      %v2197 = vld [vmem:[%s246 + $0x11e] sm:$0xff]
      %v2198 = vld [vmem:[%s246 + $0x126] sm:$0xff]
      %v2199 = vld [vmem:[%s246 + $0x12e] sm:$0xff]
      %v2200 = vld [vmem:[%s246 + $0x136] sm:$0xff]
      %v2201 = vld [vmem:[%s246 + $0x13e] sm:$0x3f]
      %v2202 = vpack.c.bf16 %v2167, %v2166
      %v2203 = vpack.c.bf16 %v2169, %v2168
      %v2204 = vpack.c.bf16 %v2171, %v2170
      %v2205 = vpack.c.bf16 %v2173, %v2172
      %v2206 = vpack.c.bf16 %v2175, %v2174
      %v2207 = vpack.c.bf16 %v2177, %v2176
      %v2208 = vpack.c.bf16 %v2179, %v2178
      %v2209 = vpack.c.bf16 %v2181, %v2180
      %v2210 = vpack.c.bf16 %v2183, %v2182
      %v2211 = vpack.c.bf16 %v2185, %v2184
      %v2212 = vpack.c.bf16 %v2187, %v2186
      %v2213 = vpack.c.bf16 %v2189, %v2188
      %v2214 = vpack.c.bf16 %v2191, %v2190
      %v2215 = vpack.c.bf16 %v2193, %v2192
      %v2216 = vpack.c.bf16 %v2195, %v2194
      %v2217 = vpack.c.bf16 %v2197, %v2196
      %v2218 = vpack.c.bf16 %v2199, %v2198
      %v2219 = vpack.c.bf16 %v2201, %v2200
      %s2220 = scalar_lea.vmem %s1, 16
      %v2221 = vld [vmem:[%s2220] sm:$0x3]
      %v2223 = vsel %vm364, %v2202, 0
      %v2226 = vsel %vm364, %v2203, 0
      %v2229 = vsel %vm364, %v2204, 0
      %v2232 = vsel %vm364, %v2205, 0
      %v2235 = vsel %vm364, %v2206, 0
      %v2238 = vsel %vm364, %v2207, 0
      %v2241 = vsel %vm364, %v2208, 0
      %v2244 = vsel %vm364, %v2209, 0
      %v2247 = vsel %vm364, %v2210, 0
      %v2250 = vsel %vm364, %v2211, 0
      %v2253 = vsel %vm364, %v2212, 0
      %v2256 = vsel %vm364, %v2213, 0
      %v2259 = vsel %vm364, %v2214, 0
      %v2262 = vsel %vm364, %v2215, 0
      %v2265 = vsel %vm364, %v2216, 0
      %v2268 = vsel %vm364, %v2217, 0
      %v2271 = vsel %vm364, %v2218, 0
      %v2274 = vsel %vm364, %v2219, 0
      %v2277 = vsel %vm419, %v2221, 0
      %2279 = vmatpush.bf16.msra.mxu0 0
      %2280 = vmatpush.bf16.msra.mxu0 0
      %2281 = vmatpush.bf16.msra.mxu0 0
      %2282 = vmatpush.bf16.msra.mxu0 0
      %2283 = vmatpush.bf16.msra.mxu0 0
      %2284 = vmatpush.bf16.msra.mxu0 0
      %2285 = vmatpush.bf16.msra.mxu0 0
      %2286 = vmatpush.bf16.msra.mxu0 %v2277
      %2287 = vmatmul.bf16.gmra.mxu0 %v2223
      %v2288 = vpop.f32.mrf.mxu0
      %v2289 = vadd.f32 0.0, %v2288
      %v2290 = vpop.f32.mrf.mxu0
      %v2291 = vadd.f32 0.0, %v2290
      %2292 = vmatmul.bf16.gmra.mxu0 %v2226
      %v2293 = vpop.f32.mrf.mxu0
      %v2294 = vadd.f32 0.0, %v2293
      %v2295 = vpop.f32.mrf.mxu0
      %v2296 = vadd.f32 0.0, %v2295
      %2297 = vmatmul.bf16.gmra.mxu0 %v2229
      %v2298 = vpop.f32.mrf.mxu0
      %v2299 = vadd.f32 0.0, %v2298
      %v2300 = vpop.f32.mrf.mxu0
      %v2301 = vadd.f32 0.0, %v2300
      %2302 = vmatmul.bf16.gmra.mxu0 %v2232
      %v2303 = vpop.f32.mrf.mxu0
      %v2304 = vadd.f32 0.0, %v2303
      %v2305 = vpop.f32.mrf.mxu0
      %v2306 = vadd.f32 0.0, %v2305
      %2307 = vmatmul.bf16.gmra.mxu0 %v2235
      %v2308 = vpop.f32.mrf.mxu0
      %v2309 = vadd.f32 0.0, %v2308
      %v2310 = vpop.f32.mrf.mxu0
      %v2311 = vadd.f32 0.0, %v2310
      %2312 = vmatmul.bf16.gmra.mxu0 %v2238
      %v2313 = vpop.f32.mrf.mxu0
      %v2314 = vadd.f32 0.0, %v2313
      %v2315 = vpop.f32.mrf.mxu0
      %v2316 = vadd.f32 0.0, %v2315
      %2317 = vmatmul.bf16.gmra.mxu0 %v2241
      %v2318 = vpop.f32.mrf.mxu0
      %v2319 = vadd.f32 0.0, %v2318
      %v2320 = vpop.f32.mrf.mxu0
      %v2321 = vadd.f32 0.0, %v2320
      %2322 = vmatmul.bf16.gmra.mxu0 %v2244
      %v2323 = vpop.f32.mrf.mxu0
      %v2324 = vadd.f32 0.0, %v2323
      %v2325 = vpop.f32.mrf.mxu0
      %v2326 = vadd.f32 0.0, %v2325
      %2327 = vmatmul.bf16.gmra.mxu0 %v2247
      %v2328 = vpop.f32.mrf.mxu0
      %v2329 = vadd.f32 0.0, %v2328
      %v2330 = vpop.f32.mrf.mxu0
      %v2331 = vadd.f32 0.0, %v2330
      %2332 = vmatmul.bf16.gmra.mxu0 %v2250
      %v2333 = vpop.f32.mrf.mxu0
      %v2334 = vadd.f32 0.0, %v2333
      %v2335 = vpop.f32.mrf.mxu0
      %v2336 = vadd.f32 0.0, %v2335
      %2337 = vmatmul.bf16.gmra.mxu0 %v2253
      %v2338 = vpop.f32.mrf.mxu0
      %v2339 = vadd.f32 0.0, %v2338
      %v2340 = vpop.f32.mrf.mxu0
      %v2341 = vadd.f32 0.0, %v2340
      %2342 = vmatmul.bf16.gmra.mxu0 %v2256
      %v2343 = vpop.f32.mrf.mxu0
      %v2344 = vadd.f32 0.0, %v2343
      %v2345 = vpop.f32.mrf.mxu0
      %v2346 = vadd.f32 0.0, %v2345
      %2347 = vmatmul.bf16.gmra.mxu0 %v2259
      %v2348 = vpop.f32.mrf.mxu0
      %v2349 = vadd.f32 0.0, %v2348
      %v2350 = vpop.f32.mrf.mxu0
      %v2351 = vadd.f32 0.0, %v2350
      %2352 = vmatmul.bf16.gmra.mxu0 %v2262
      %v2353 = vpop.f32.mrf.mxu0
      %v2354 = vadd.f32 0.0, %v2353
      %v2355 = vpop.f32.mrf.mxu0
      %v2356 = vadd.f32 0.0, %v2355
      %2357 = vmatmul.bf16.gmra.mxu0 %v2265
      %v2358 = vpop.f32.mrf.mxu0
      %v2359 = vadd.f32 0.0, %v2358
      %v2360 = vpop.f32.mrf.mxu0
      %v2361 = vadd.f32 0.0, %v2360
      %2362 = vmatmul.bf16.gmra.mxu0 %v2268
      %v2363 = vpop.f32.mrf.mxu0
      %v2364 = vadd.f32 0.0, %v2363
      %v2365 = vpop.f32.mrf.mxu0
      %v2366 = vadd.f32 0.0, %v2365
      %2367 = vmatmul.bf16.gmra.mxu0 %v2271
      %v2368 = vpop.f32.mrf.mxu0
      %v2369 = vadd.f32 0.0, %v2368
      %v2370 = vpop.f32.mrf.mxu0
      %v2371 = vadd.f32 0.0, %v2370
      %2372 = vmatmul.bf16.gmra.mxu0 %v2274
      %v2373 = vpop.f32.mrf.mxu0
      %v2374 = vadd.f32 0.0, %v2373
      %v2375 = vpop.f32.mrf.mxu0
      %v2376 = vadd.f32 0.0, %v2375
      %2377 = vdwg.mxu0
      %v2378 = vadd.f32 %v2130, %v2289
      %v2379 = vadd.f32 %v2131, %v2291
      %v2380 = vadd.f32 %v2132, %v2294
      %v2381 = vadd.f32 %v2133, %v2296
      %v2382 = vadd.f32 %v2134, %v2299
      %v2383 = vadd.f32 %v2135, %v2301
      %v2384 = vadd.f32 %v2136, %v2304
      %v2385 = vadd.f32 %v2137, %v2306
      %v2386 = vadd.f32 %v2138, %v2309
      %v2387 = vadd.f32 %v2139, %v2311
      %v2388 = vadd.f32 %v2140, %v2314
      %v2389 = vadd.f32 %v2141, %v2316
      %v2390 = vadd.f32 %v2142, %v2319
      %v2391 = vadd.f32 %v2143, %v2321
      %v2392 = vadd.f32 %v2144, %v2324
      %v2393 = vadd.f32 %v2145, %v2326
      %v2394 = vadd.f32 %v2146, %v2329
      %v2395 = vadd.f32 %v2147, %v2331
      %v2396 = vadd.f32 %v2148, %v2334
      %v2397 = vadd.f32 %v2149, %v2336
      %v2398 = vadd.f32 %v2150, %v2339
      %v2399 = vadd.f32 %v2151, %v2341
      %v2400 = vadd.f32 %v2152, %v2344
      %v2401 = vadd.f32 %v2153, %v2346
      %v2402 = vadd.f32 %v2154, %v2349
      %v2403 = vadd.f32 %v2155, %v2351
      %v2404 = vadd.f32 %v2156, %v2354
      %v2405 = vadd.f32 %v2157, %v2356
      %v2406 = vadd.f32 %v2158, %v2359
      %v2407 = vadd.f32 %v2159, %v2361
      %v2408 = vadd.f32 %v2160, %v2364
      %v2409 = vadd.f32 %v2161, %v2366
      %v2410 = vadd.f32 %v2162, %v2369
      %v2411 = vadd.f32 %v2163, %v2371
      %v2412 = vadd.f32 %v2164, %v2374
      %v2413 = vadd.f32 %v2165, %v2376
      %v2414 = vld [vmem:[%s2] sm:$0x1]
      %v2416 = vperm.slane %v2414, 0
      %v2418 = vadd.f32 %v2378, %v2416
      %v2419 = vadd.f32 %v2379, %v2416
      %v2420 = vadd.f32 %v2380, %v2416
      %v2421 = vadd.f32 %v2381, %v2416
      %v2422 = vadd.f32 %v2382, %v2416
      %v2423 = vadd.f32 %v2383, %v2416
      %v2424 = vadd.f32 %v2384, %v2416
      %v2425 = vadd.f32 %v2385, %v2416
      %v2426 = vadd.f32 %v2386, %v2416
      %v2427 = vadd.f32 %v2387, %v2416
      %v2428 = vadd.f32 %v2388, %v2416
      %v2429 = vadd.f32 %v2389, %v2416
      %v2430 = vadd.f32 %v2390, %v2416
      %v2431 = vadd.f32 %v2391, %v2416
      %v2432 = vadd.f32 %v2392, %v2416
      %v2433 = vadd.f32 %v2393, %v2416
      %v2434 = vadd.f32 %v2394, %v2416
      %v2435 = vadd.f32 %v2395, %v2416
      %v2436 = vadd.f32 %v2396, %v2416
      %v2437 = vadd.f32 %v2397, %v2416
      %v2438 = vadd.f32 %v2398, %v2416
      %v2439 = vadd.f32 %v2399, %v2416
      %v2440 = vadd.f32 %v2400, %v2416
      %v2441 = vadd.f32 %v2401, %v2416
      %v2442 = vadd.f32 %v2402, %v2416
      %v2443 = vadd.f32 %v2403, %v2416
      %v2444 = vadd.f32 %v2404, %v2416
      %v2445 = vadd.f32 %v2405, %v2416
      %v2446 = vadd.f32 %v2406, %v2416
      %v2447 = vadd.f32 %v2407, %v2416
      %v2448 = vadd.f32 %v2408, %v2416
      %v2449 = vadd.f32 %v2409, %v2416
      %v2450 = vadd.f32 %v2410, %v2416
      %v2451 = vadd.f32 %v2411, %v2416
      %v2452 = vadd.f32 %v2412, %v2416
      %v2453 = vadd.f32 %v2413, %v2416
      %v2454 = vmax.f32 %v2418, 0.0
      %v2455 = vmax.f32 %v2419, 0.0
      %v2456 = vmax.f32 %v2420, 0.0
      %v2457 = vmax.f32 %v2421, 0.0
      %v2458 = vmax.f32 %v2422, 0.0
      %v2459 = vmax.f32 %v2423, 0.0
      %v2460 = vmax.f32 %v2424, 0.0
      %v2461 = vmax.f32 %v2425, 0.0
      %v2462 = vmax.f32 %v2426, 0.0
      %v2463 = vmax.f32 %v2427, 0.0
      %v2464 = vmax.f32 %v2428, 0.0
      %v2465 = vmax.f32 %v2429, 0.0
      %v2466 = vmax.f32 %v2430, 0.0
      %v2467 = vmax.f32 %v2431, 0.0
      %v2468 = vmax.f32 %v2432, 0.0
      %v2469 = vmax.f32 %v2433, 0.0
      %v2470 = vmax.f32 %v2434, 0.0
      %v2471 = vmax.f32 %v2435, 0.0
      %v2472 = vmax.f32 %v2436, 0.0
      %v2473 = vmax.f32 %v2437, 0.0
      %v2474 = vmax.f32 %v2438, 0.0
      %v2475 = vmax.f32 %v2439, 0.0
      %v2476 = vmax.f32 %v2440, 0.0
      %v2477 = vmax.f32 %v2441, 0.0
      %v2478 = vmax.f32 %v2442, 0.0
      %v2479 = vmax.f32 %v2443, 0.0
      %v2480 = vmax.f32 %v2444, 0.0
      %v2481 = vmax.f32 %v2445, 0.0
      %v2482 = vmax.f32 %v2446, 0.0
      %v2483 = vmax.f32 %v2447, 0.0
      %v2484 = vmax.f32 %v2448, 0.0
      %v2485 = vmax.f32 %v2449, 0.0
      %v2486 = vmax.f32 %v2450, 0.0
      %v2487 = vmax.f32 %v2451, 0.0
      %v2488 = vmax.f32 %v2452, 0.0
      %v2489 = vmax.f32 %v2453, 0.0
      %v2490 = vld [vmem:[%s5] sm:$0xff]
      %v2491 = vld [vmem:[%s5 + $0x8] sm:$0xff]
      %v2492 = vld [vmem:[%s5 + $0x10] sm:$0xff]
      %v2493 = vld [vmem:[%s5 + $0x18] sm:$0xff]
      %v2494 = vld [vmem:[%s5 + $0x20] sm:$0xff]
      %v2495 = vld [vmem:[%s5 + $0x28] sm:$0xff]
      %v2496 = vld [vmem:[%s5 + $0x30] sm:$0xff]
      %v2497 = vld [vmem:[%s5 + $0x38] sm:$0xff]
      %v2498 = vld [vmem:[%s5 + $0x40] sm:$0xff]
      %v2499 = vld [vmem:[%s5 + $0x48] sm:$0xff]
      %v2500 = vld [vmem:[%s5 + $0x50] sm:$0xff]
      %v2501 = vld [vmem:[%s5 + $0x58] sm:$0xff]
      %v2502 = vld [vmem:[%s5 + $0x60] sm:$0xff]
      %v2503 = vld [vmem:[%s5 + $0x68] sm:$0xff]
      %v2504 = vld [vmem:[%s5 + $0x70] sm:$0xff]
      %v2505 = vld [vmem:[%s5 + $0x78] sm:$0xff]
      %v2506 = vld [vmem:[%s5 + $0x80] sm:$0xff]
      %v2507 = vld [vmem:[%s5 + $0x88] sm:$0xff]
      %v2508 = vld [vmem:[%s5 + $0x90] sm:$0xff]
      %v2509 = vld [vmem:[%s5 + $0x98] sm:$0xff]
      %v2510 = vld [vmem:[%s5 + $0xa0] sm:$0xff]
      %v2511 = vld [vmem:[%s5 + $0xa8] sm:$0xff]
      %v2512 = vld [vmem:[%s5 + $0xb0] sm:$0xff]
      %v2513 = vld [vmem:[%s5 + $0xb8] sm:$0xff]
      %v2514 = vld [vmem:[%s5 + $0xc0] sm:$0xff]
      %v2515 = vld [vmem:[%s5 + $0xc8] sm:$0xff]
      %v2516 = vld [vmem:[%s5 + $0xd0] sm:$0xff]
      %v2517 = vld [vmem:[%s5 + $0xd8] sm:$0xff]
      %v2518 = vld [vmem:[%s5 + $0xe0] sm:$0xff]
      %v2519 = vld [vmem:[%s5 + $0xe8] sm:$0xff]
      %v2520 = vld [vmem:[%s5 + $0xf0] sm:$0xff]
      %v2521 = vld [vmem:[%s5 + $0xf8] sm:$0xff]
      %v2522 = vld [vmem:[%s5 + $0x100] sm:$0xff]
      %v2523 = vld [vmem:[%s5 + $0x108] sm:$0xff]
      %v2524 = vld [vmem:[%s5 + $0x110] sm:$0xff]
      %v2525 = vld [vmem:[%s5 + $0x118] sm:$0x3f]
      %2527 = vset.pattern.permute.xlu0 0
      %2528 = vperm.xlu0 %2527, %v2490
      %v2529 = vpop.permute.xlu0 %2528
      %2532 = vset.pattern.permute.xlu0 0
      %2533 = vperm.xlu0 %2532, %v2491
      %v2534 = vpop.permute.xlu0 %2533
      %2537 = vset.pattern.permute.xlu0 0
      %2538 = vperm.xlu0 %2537, %v2492
      %v2539 = vpop.permute.xlu0 %2538
      %2542 = vset.pattern.permute.xlu0 0
      %2543 = vperm.xlu0 %2542, %v2493
      %v2544 = vpop.permute.xlu0 %2543
      %2547 = vset.pattern.permute.xlu0 0
      %2548 = vperm.xlu0 %2547, %v2494
      %v2549 = vpop.permute.xlu0 %2548
      %2552 = vset.pattern.permute.xlu0 0
      %2553 = vperm.xlu0 %2552, %v2495
      %v2554 = vpop.permute.xlu0 %2553
      %2557 = vset.pattern.permute.xlu0 0
      %2558 = vperm.xlu0 %2557, %v2496
      %v2559 = vpop.permute.xlu0 %2558
      %2562 = vset.pattern.permute.xlu0 0
      %2563 = vperm.xlu0 %2562, %v2497
      %v2564 = vpop.permute.xlu0 %2563
      %2567 = vset.pattern.permute.xlu0 0
      %2568 = vperm.xlu0 %2567, %v2498
      %v2569 = vpop.permute.xlu0 %2568
      %2572 = vset.pattern.permute.xlu0 0
      %2573 = vperm.xlu0 %2572, %v2499
      %v2574 = vpop.permute.xlu0 %2573
      %2577 = vset.pattern.permute.xlu0 0
      %2578 = vperm.xlu0 %2577, %v2500
      %v2579 = vpop.permute.xlu0 %2578
      %2582 = vset.pattern.permute.xlu0 0
      %2583 = vperm.xlu0 %2582, %v2501
      %v2584 = vpop.permute.xlu0 %2583
      %2587 = vset.pattern.permute.xlu0 0
      %2588 = vperm.xlu0 %2587, %v2502
      %v2589 = vpop.permute.xlu0 %2588
      %2592 = vset.pattern.permute.xlu0 0
      %2593 = vperm.xlu0 %2592, %v2503
      %v2594 = vpop.permute.xlu0 %2593
      %2597 = vset.pattern.permute.xlu0 0
      %2598 = vperm.xlu0 %2597, %v2504
      %v2599 = vpop.permute.xlu0 %2598
      %2602 = vset.pattern.permute.xlu0 0
      %2603 = vperm.xlu0 %2602, %v2505
      %v2604 = vpop.permute.xlu0 %2603
      %2607 = vset.pattern.permute.xlu0 0
      %2608 = vperm.xlu0 %2607, %v2506
      %v2609 = vpop.permute.xlu0 %2608
      %2612 = vset.pattern.permute.xlu0 0
      %2613 = vperm.xlu0 %2612, %v2507
      %v2614 = vpop.permute.xlu0 %2613
      %2617 = vset.pattern.permute.xlu0 0
      %2618 = vperm.xlu0 %2617, %v2508
      %v2619 = vpop.permute.xlu0 %2618
      %2622 = vset.pattern.permute.xlu0 0
      %2623 = vperm.xlu0 %2622, %v2509
      %v2624 = vpop.permute.xlu0 %2623
      %2627 = vset.pattern.permute.xlu0 0
      %2628 = vperm.xlu0 %2627, %v2510
      %v2629 = vpop.permute.xlu0 %2628
      %2632 = vset.pattern.permute.xlu0 0
      %2633 = vperm.xlu0 %2632, %v2511
      %v2634 = vpop.permute.xlu0 %2633
      %2637 = vset.pattern.permute.xlu0 0
      %2638 = vperm.xlu0 %2637, %v2512
      %v2639 = vpop.permute.xlu0 %2638
      %2642 = vset.pattern.permute.xlu0 0
      %2643 = vperm.xlu0 %2642, %v2513
      %v2644 = vpop.permute.xlu0 %2643
      %2647 = vset.pattern.permute.xlu0 0
      %2648 = vperm.xlu0 %2647, %v2514
      %v2649 = vpop.permute.xlu0 %2648
      %2652 = vset.pattern.permute.xlu0 0
      %2653 = vperm.xlu0 %2652, %v2515
      %v2654 = vpop.permute.xlu0 %2653
      %2657 = vset.pattern.permute.xlu0 0
      %2658 = vperm.xlu0 %2657, %v2516
      %v2659 = vpop.permute.xlu0 %2658
      %2662 = vset.pattern.permute.xlu0 0
      %2663 = vperm.xlu0 %2662, %v2517
      %v2664 = vpop.permute.xlu0 %2663
      %2667 = vset.pattern.permute.xlu0 0
      %2668 = vperm.xlu0 %2667, %v2518
      %v2669 = vpop.permute.xlu0 %2668
      %2672 = vset.pattern.permute.xlu0 0
      %2673 = vperm.xlu0 %2672, %v2519
      %v2674 = vpop.permute.xlu0 %2673
      %2677 = vset.pattern.permute.xlu0 0
      %2678 = vperm.xlu0 %2677, %v2520
      %v2679 = vpop.permute.xlu0 %2678
      %2682 = vset.pattern.permute.xlu0 0
      %2683 = vperm.xlu0 %2682, %v2521
      %v2684 = vpop.permute.xlu0 %2683
      %2687 = vset.pattern.permute.xlu0 0
      %2688 = vperm.xlu0 %2687, %v2522
      %v2689 = vpop.permute.xlu0 %2688
      %2692 = vset.pattern.permute.xlu0 0
      %2693 = vperm.xlu0 %2692, %v2523
      %v2694 = vpop.permute.xlu0 %2693
      %2697 = vset.pattern.permute.xlu0 0
      %2698 = vperm.xlu0 %2697, %v2524
      %v2699 = vpop.permute.xlu0 %2698
      %2702 = vset.pattern.permute.xlu0 0
      %2703 = vperm.xlu0 %2702, %v2525
      %v2704 = vpop.permute.xlu0 %2703
      %v2706 = vmul.f32 %v2454, %v2529
      %v2707 = vmul.f32 %v2455, %v2534
      %v2708 = vmul.f32 %v2456, %v2539
      %v2709 = vmul.f32 %v2457, %v2544
      %v2710 = vmul.f32 %v2458, %v2549
      %v2711 = vmul.f32 %v2459, %v2554
      %v2712 = vmul.f32 %v2460, %v2559
      %v2713 = vmul.f32 %v2461, %v2564
      %v2714 = vmul.f32 %v2462, %v2569
      %v2715 = vmul.f32 %v2463, %v2574
      %v2716 = vmul.f32 %v2464, %v2579
      %v2717 = vmul.f32 %v2465, %v2584
      %v2718 = vmul.f32 %v2466, %v2589
      %v2719 = vmul.f32 %v2467, %v2594
      %v2720 = vmul.f32 %v2468, %v2599
      %v2721 = vmul.f32 %v2469, %v2604
      %v2722 = vmul.f32 %v2470, %v2609
      %v2723 = vmul.f32 %v2471, %v2614
      %v2724 = vmul.f32 %v2472, %v2619
      %v2725 = vmul.f32 %v2473, %v2624
      %v2726 = vmul.f32 %v2474, %v2629
      %v2727 = vmul.f32 %v2475, %v2634
      %v2728 = vmul.f32 %v2476, %v2639
      %v2729 = vmul.f32 %v2477, %v2644
      %v2730 = vmul.f32 %v2478, %v2649
      %v2731 = vmul.f32 %v2479, %v2654
      %v2732 = vmul.f32 %v2480, %v2659
      %v2733 = vmul.f32 %v2481, %v2664
      %v2734 = vmul.f32 %v2482, %v2669
      %v2735 = vmul.f32 %v2483, %v2674
      %v2736 = vmul.f32 %v2484, %v2679
      %v2737 = vmul.f32 %v2485, %v2684
      %v2738 = vmul.f32 %v2486, %v2689
      %v2739 = vmul.f32 %v2487, %v2694
      %v2740 = vmul.f32 %v2488, %v2699
      %v2741 = vmul.f32 %v2489, %v2704
      %2742 = vst.msk [vmem:[#allocation2] sm:$0xff] %vm364, 0.0
      %2743 = vst.msk [vmem:[#allocation2 + $0x8] sm:$0xff] %vm364, 0.0
      %2744 = vst.msk [vmem:[#allocation2 + $0x10] sm:$0xff] %vm364, 0.0
      %2745 = vst.msk [vmem:[#allocation2 + $0x18] sm:$0xff] %vm364, 0.0
      %2746 = vst.msk [vmem:[#allocation2 + $0x20] sm:$0xff] %vm364, 0.0
      %2747 = vst.msk [vmem:[#allocation2 + $0x28] sm:$0xff] %vm364, 0.0
      %2748 = vst.msk [vmem:[#allocation2 + $0x30] sm:$0xff] %vm364, 0.0
      %2749 = vst.msk [vmem:[#allocation2 + $0x38] sm:$0xff] %vm364, 0.0
      %2750 = vst.msk [vmem:[#allocation2 + $0x40] sm:$0xff] %vm364, 0.0
      %2751 = vst.msk [vmem:[#allocation2 + $0x48] sm:$0xff] %vm364, 0.0
      %2752 = vst.msk [vmem:[#allocation2 + $0x50] sm:$0xff] %vm364, 0.0
      %2753 = vst.msk [vmem:[#allocation2 + $0x58] sm:$0xff] %vm364, 0.0
      %2754 = vst.msk [vmem:[#allocation2 + $0x60] sm:$0xff] %vm364, 0.0
      %2755 = vst.msk [vmem:[#allocation2 + $0x68] sm:$0xff] %vm364, 0.0
      %2756 = vst.msk [vmem:[#allocation2 + $0x70] sm:$0xff] %vm364, 0.0
      %2757 = vst.msk [vmem:[#allocation2 + $0x78] sm:$0xff] %vm364, 0.0
      %2758 = vst.msk [vmem:[#allocation2 + $0x80] sm:$0xff] %vm364, 0.0
      %2759 = vst.msk [vmem:[#allocation2 + $0x88] sm:$0xff] %vm364, 0.0
      %2760 = vst.msk [vmem:[#allocation2 + $0x90] sm:$0xff] %vm364, 0.0
      %2761 = vst.msk [vmem:[#allocation2 + $0x98] sm:$0xff] %vm364, 0.0
      %2762 = vst.msk [vmem:[#allocation2 + $0xa0] sm:$0xff] %vm364, 0.0
      %2763 = vst.msk [vmem:[#allocation2 + $0xa8] sm:$0xff] %vm364, 0.0
      %2764 = vst.msk [vmem:[#allocation2 + $0xb0] sm:$0xff] %vm364, 0.0
      %2765 = vst.msk [vmem:[#allocation2 + $0xb8] sm:$0xff] %vm364, 0.0
      %2766 = vst.msk [vmem:[#allocation2 + $0xc0] sm:$0xff] %vm364, 0.0
      %2767 = vst.msk [vmem:[#allocation2 + $0xc8] sm:$0xff] %vm364, 0.0
      %2768 = vst.msk [vmem:[#allocation2 + $0xd0] sm:$0xff] %vm364, 0.0
      %2769 = vst.msk [vmem:[#allocation2 + $0xd8] sm:$0xff] %vm364, 0.0
      %2770 = vst.msk [vmem:[#allocation2 + $0xe0] sm:$0xff] %vm364, 0.0
      %2771 = vst.msk [vmem:[#allocation2 + $0xe8] sm:$0xff] %vm364, 0.0
      %2772 = vst.msk [vmem:[#allocation2 + $0xf0] sm:$0xff] %vm364, 0.0
      %2773 = vst.msk [vmem:[#allocation2 + $0xf8] sm:$0xff] %vm364, 0.0
      %2774 = vst.msk [vmem:[#allocation2 + $0x100] sm:$0xff] %vm364, 0.0
      %2775 = vst.msk [vmem:[#allocation2 + $0x108] sm:$0xff] %vm364, 0.0
      %2776 = vst.msk [vmem:[#allocation2 + $0x110] sm:$0xff] %vm364, 0.0
      %2777 = vst.msk [vmem:[#allocation2 + $0x118] sm:$0xff] %vm364, 0.0
      %2778 = vst.msk [vmem:[#allocation2 + $0x120] sm:$0xff] %vm364, 0.0
      %2779 = vst.msk [vmem:[#allocation2 + $0x128] sm:$0xff] %vm364, 0.0
      %2780 = vst.msk [vmem:[#allocation2 + $0x130] sm:$0xff] %vm364, 0.0
      %2781 = vst.msk [vmem:[#allocation2 + $0x138] sm:$0xff] %vm364, 0.0
      %vm2782 = vcmask 27648
      %2783 = vst.msk [vmem:[#allocation2 + $0x140] sm:$0xf] %vm2782, 0.0
      %2784 = vst.msk [vmem:[#allocation2 + $0x13] sm:$0xff] %vm364, %v2706
      %2785 = vst.msk [vmem:[#allocation2 + $0x1b] sm:$0xff] %vm364, %v2707
      %2786 = vst.msk [vmem:[#allocation2 + $0x23] sm:$0xff] %vm364, %v2708
      %2787 = vst.msk [vmem:[#allocation2 + $0x2b] sm:$0xff] %vm364, %v2709
      %2788 = vst.msk [vmem:[#allocation2 + $0x33] sm:$0xff] %vm364, %v2710
      %2789 = vst.msk [vmem:[#allocation2 + $0x3b] sm:$0xff] %vm364, %v2711
      %2790 = vst.msk [vmem:[#allocation2 + $0x43] sm:$0xff] %vm364, %v2712
      %2791 = vst.msk [vmem:[#allocation2 + $0x4b] sm:$0xff] %vm364, %v2713
      %2792 = vst.msk [vmem:[#allocation2 + $0x53] sm:$0xff] %vm364, %v2714
      %2793 = vst.msk [vmem:[#allocation2 + $0x5b] sm:$0xff] %vm364, %v2715
      %2794 = vst.msk [vmem:[#allocation2 + $0x63] sm:$0xff] %vm364, %v2716
      %2795 = vst.msk [vmem:[#allocation2 + $0x6b] sm:$0xff] %vm364, %v2717
      %2796 = vst.msk [vmem:[#allocation2 + $0x73] sm:$0xff] %vm364, %v2718
      %2797 = vst.msk [vmem:[#allocation2 + $0x7b] sm:$0xff] %vm364, %v2719
      %2798 = vst.msk [vmem:[#allocation2 + $0x83] sm:$0xff] %vm364, %v2720
      %2799 = vst.msk [vmem:[#allocation2 + $0x8b] sm:$0xff] %vm364, %v2721
      %2800 = vst.msk [vmem:[#allocation2 + $0x93] sm:$0xff] %vm364, %v2722
      %2801 = vst.msk [vmem:[#allocation2 + $0x9b] sm:$0xff] %vm364, %v2723
      %2802 = vst.msk [vmem:[#allocation2 + $0xa3] sm:$0xff] %vm364, %v2724
      %2803 = vst.msk [vmem:[#allocation2 + $0xab] sm:$0xff] %vm364, %v2725
      %2804 = vst.msk [vmem:[#allocation2 + $0xb3] sm:$0xff] %vm364, %v2726
      %2805 = vst.msk [vmem:[#allocation2 + $0xbb] sm:$0xff] %vm364, %v2727
      %2806 = vst.msk [vmem:[#allocation2 + $0xc3] sm:$0xff] %vm364, %v2728
      %2807 = vst.msk [vmem:[#allocation2 + $0xcb] sm:$0xff] %vm364, %v2729
      %2808 = vst.msk [vmem:[#allocation2 + $0xd3] sm:$0xff] %vm364, %v2730
      %2809 = vst.msk [vmem:[#allocation2 + $0xdb] sm:$0xff] %vm364, %v2731
      %2810 = vst.msk [vmem:[#allocation2 + $0xe3] sm:$0xff] %vm364, %v2732
      %2811 = vst.msk [vmem:[#allocation2 + $0xeb] sm:$0xff] %vm364, %v2733
      %2812 = vst.msk [vmem:[#allocation2 + $0xf3] sm:$0xff] %vm364, %v2734
      %2813 = vst.msk [vmem:[#allocation2 + $0xfb] sm:$0xff] %vm364, %v2735
      %2814 = vst.msk [vmem:[#allocation2 + $0x103] sm:$0xff] %vm364, %v2736
      %2815 = vst.msk [vmem:[#allocation2 + $0x10b] sm:$0xff] %vm364, %v2737
      %2816 = vst.msk [vmem:[#allocation2 + $0x113] sm:$0xff] %vm364, %v2738
      %2817 = vst.msk [vmem:[#allocation2 + $0x11b] sm:$0xff] %vm364, %v2739
      %2818 = vst.msk [vmem:[#allocation2 + $0x123] sm:$0xff] %vm364, %v2740
      %vm2819 = vcmask 29696
      %2820 = vst.msk [vmem:[#allocation2 + $0x12b] sm:$0x3f] %vm2819, %v2741
      %v2821 = vld [vmem:[#allocation2] sm:$0xff]
      %v2822 = vld [vmem:[#allocation2 + $0x8] sm:$0xff]
      %v2823 = vld [vmem:[#allocation2 + $0x10] sm:$0xff]
      %v2824 = vld [vmem:[#allocation2 + $0x18] sm:$0xff]
      %v2825 = vld [vmem:[#allocation2 + $0x20] sm:$0xff]
      %v2826 = vld [vmem:[#allocation2 + $0x28] sm:$0xff]
      %v2827 = vld [vmem:[#allocation2 + $0x30] sm:$0xff]
      %v2828 = vld [vmem:[#allocation2 + $0x38] sm:$0xff]
      %v2829 = vld [vmem:[#allocation2 + $0x40] sm:$0xff]
      %v2830 = vld [vmem:[#allocation2 + $0x48] sm:$0xff]
      %v2831 = vld [vmem:[#allocation2 + $0x50] sm:$0xff]
      %v2832 = vld [vmem:[#allocation2 + $0x58] sm:$0xff]
      %v2833 = vld [vmem:[#allocation2 + $0x60] sm:$0xff]
      %v2834 = vld [vmem:[#allocation2 + $0x68] sm:$0xff]
      %v2835 = vld [vmem:[#allocation2 + $0x70] sm:$0xff]
      %v2836 = vld [vmem:[#allocation2 + $0x78] sm:$0xff]
      %v2837 = vld [vmem:[#allocation2 + $0x80] sm:$0xff]
      %v2838 = vld [vmem:[#allocation2 + $0x88] sm:$0xff]
      %v2839 = vld [vmem:[#allocation2 + $0x90] sm:$0xff]
      %v2840 = vld [vmem:[#allocation2 + $0x98] sm:$0xff]
      %v2841 = vld [vmem:[#allocation2 + $0xa0] sm:$0xff]
      %v2842 = vld [vmem:[#allocation2 + $0xa8] sm:$0xff]
      %v2843 = vld [vmem:[#allocation2 + $0xb0] sm:$0xff]
      %v2844 = vld [vmem:[#allocation2 + $0xb8] sm:$0xff]
      %v2845 = vld [vmem:[#allocation2 + $0xc0] sm:$0xff]
      %v2846 = vld [vmem:[#allocation2 + $0xc8] sm:$0xff]
      %v2847 = vld [vmem:[#allocation2 + $0xd0] sm:$0xff]
      %v2848 = vld [vmem:[#allocation2 + $0xd8] sm:$0xff]
      %v2849 = vld [vmem:[#allocation2 + $0xe0] sm:$0xff]
      %v2850 = vld [vmem:[#allocation2 + $0xe8] sm:$0xff]
      %v2851 = vld [vmem:[#allocation2 + $0xf0] sm:$0xff]
      %v2852 = vld [vmem:[#allocation2 + $0xf8] sm:$0xff]
      %v2853 = vld [vmem:[#allocation2 + $0x100] sm:$0xff]
      %v2854 = vld [vmem:[#allocation2 + $0x108] sm:$0xff]
      %v2855 = vld [vmem:[#allocation2 + $0x110] sm:$0xff]
      %v2856 = vld [vmem:[#allocation2 + $0x118] sm:$0x3f]
      %v2857 = vpack.c.bf16 %v2822, %v2821
      %v2858 = vpack.c.bf16 %v2824, %v2823
      %v2859 = vpack.c.bf16 %v2826, %v2825
      %v2860 = vpack.c.bf16 %v2828, %v2827
      %v2861 = vpack.c.bf16 %v2830, %v2829
      %v2862 = vpack.c.bf16 %v2832, %v2831
      %v2863 = vpack.c.bf16 %v2834, %v2833
      %v2864 = vpack.c.bf16 %v2836, %v2835
      %v2865 = vpack.c.bf16 %v2838, %v2837
      %v2866 = vpack.c.bf16 %v2840, %v2839
      %v2867 = vpack.c.bf16 %v2842, %v2841
      %v2868 = vpack.c.bf16 %v2844, %v2843
      %v2869 = vpack.c.bf16 %v2846, %v2845
      %v2870 = vpack.c.bf16 %v2848, %v2847
      %v2871 = vpack.c.bf16 %v2850, %v2849
      %v2872 = vpack.c.bf16 %v2852, %v2851
      %v2873 = vpack.c.bf16 %v2854, %v2853
      %v2874 = vpack.c.bf16 %v2856, %v2855
      %v2875 = vld [vmem:[%s3] sm:$0x3]
      %v2876 = vld [vmem:[#allocation2 + $0x1] sm:$0xff]
      %v2877 = vld [vmem:[#allocation2 + $0x9] sm:$0xff]
      %v2878 = vld [vmem:[#allocation2 + $0x11] sm:$0xff]
      %v2879 = vld [vmem:[#allocation2 + $0x19] sm:$0xff]
      %v2880 = vld [vmem:[#allocation2 + $0x21] sm:$0xff]
      %v2881 = vld [vmem:[#allocation2 + $0x29] sm:$0xff]
      %v2882 = vld [vmem:[#allocation2 + $0x31] sm:$0xff]
      %v2883 = vld [vmem:[#allocation2 + $0x39] sm:$0xff]
      %v2884 = vld [vmem:[#allocation2 + $0x41] sm:$0xff]
      %v2885 = vld [vmem:[#allocation2 + $0x49] sm:$0xff]
      %v2886 = vld [vmem:[#allocation2 + $0x51] sm:$0xff]
      %v2887 = vld [vmem:[#allocation2 + $0x59] sm:$0xff]
      %v2888 = vld [vmem:[#allocation2 + $0x61] sm:$0xff]
      %v2889 = vld [vmem:[#allocation2 + $0x69] sm:$0xff]
      %v2890 = vld [vmem:[#allocation2 + $0x71] sm:$0xff]
      %v2891 = vld [vmem:[#allocation2 + $0x79] sm:$0xff]
      %v2892 = vld [vmem:[#allocation2 + $0x81] sm:$0xff]
      %v2893 = vld [vmem:[#allocation2 + $0x89] sm:$0xff]
      %v2894 = vld [vmem:[#allocation2 + $0x91] sm:$0xff]
      %v2895 = vld [vmem:[#allocation2 + $0x99] sm:$0xff]
      %v2896 = vld [vmem:[#allocation2 + $0xa1] sm:$0xff]
      %v2897 = vld [vmem:[#allocation2 + $0xa9] sm:$0xff]
      %v2898 = vld [vmem:[#allocation2 + $0xb1] sm:$0xff]
      %v2899 = vld [vmem:[#allocation2 + $0xb9] sm:$0xff]
      %v2900 = vld [vmem:[#allocation2 + $0xc1] sm:$0xff]
      %v2901 = vld [vmem:[#allocation2 + $0xc9] sm:$0xff]
      %v2902 = vld [vmem:[#allocation2 + $0xd1] sm:$0xff]
      %v2903 = vld [vmem:[#allocation2 + $0xd9] sm:$0xff]
      %v2904 = vld [vmem:[#allocation2 + $0xe1] sm:$0xff]
      %v2905 = vld [vmem:[#allocation2 + $0xe9] sm:$0xff]
      %v2906 = vld [vmem:[#allocation2 + $0xf1] sm:$0xff]
      %v2907 = vld [vmem:[#allocation2 + $0xf9] sm:$0xff]
      %v2908 = vld [vmem:[#allocation2 + $0x101] sm:$0xff]
      %v2909 = vld [vmem:[#allocation2 + $0x109] sm:$0xff]
      %v2910 = vld [vmem:[#allocation2 + $0x111] sm:$0xff]
      %v2911 = vld [vmem:[#allocation2 + $0x119] sm:$0x3f]
      %v2912 = vpack.c.bf16 %v2877, %v2876
      %v2913 = vpack.c.bf16 %v2879, %v2878
      %v2914 = vpack.c.bf16 %v2881, %v2880
      %v2915 = vpack.c.bf16 %v2883, %v2882
      %v2916 = vpack.c.bf16 %v2885, %v2884
      %v2917 = vpack.c.bf16 %v2887, %v2886
      %v2918 = vpack.c.bf16 %v2889, %v2888
      %v2919 = vpack.c.bf16 %v2891, %v2890
      %v2920 = vpack.c.bf16 %v2893, %v2892
      %v2921 = vpack.c.bf16 %v2895, %v2894
      %v2922 = vpack.c.bf16 %v2897, %v2896
      %v2923 = vpack.c.bf16 %v2899, %v2898
      %v2924 = vpack.c.bf16 %v2901, %v2900
      %v2925 = vpack.c.bf16 %v2903, %v2902
      %v2926 = vpack.c.bf16 %v2905, %v2904
      %v2927 = vpack.c.bf16 %v2907, %v2906
      %v2928 = vpack.c.bf16 %v2909, %v2908
      %v2929 = vpack.c.bf16 %v2911, %v2910
      %s2930 = scalar_lea.vmem %s3, 2
      %v2931 = vld [vmem:[%s2930] sm:$0x3]
      %v2933 = vsel %vm364, %v2912, 0
      %v2936 = vsel %vm364, %v2913, 0
      %v2939 = vsel %vm364, %v2914, 0
      %v2942 = vsel %vm364, %v2915, 0
      %v2945 = vsel %vm364, %v2916, 0
      %v2948 = vsel %vm364, %v2917, 0
      %v2951 = vsel %vm364, %v2918, 0
      %v2954 = vsel %vm364, %v2919, 0
      %v2957 = vsel %vm364, %v2920, 0
      %v2960 = vsel %vm364, %v2921, 0
      %v2963 = vsel %vm364, %v2922, 0
      %v2966 = vsel %vm364, %v2923, 0
      %v2969 = vsel %vm364, %v2924, 0
      %v2972 = vsel %vm364, %v2925, 0
      %v2975 = vsel %vm364, %v2926, 0
      %v2978 = vsel %vm364, %v2927, 0
      %v2981 = vsel %vm364, %v2928, 0
      %v2984 = vsel %vm364, %v2929, 0
      %v2987 = vsel %vm419, %v2931, 0
      %2989 = vmatpush.bf16.msra.mxu0 0
      %2990 = vmatpush.bf16.msra.mxu0 0
      %2991 = vmatpush.bf16.msra.mxu0 0
      %2992 = vmatpush.bf16.msra.mxu0 0
      %2993 = vmatpush.bf16.msra.mxu0 0
      %2994 = vmatpush.bf16.msra.mxu0 0
      %2995 = vmatpush.bf16.msra.mxu0 0
      %2996 = vmatpush.bf16.msra.mxu0 %v2987
      %2997 = vmatmul.bf16.gmra.mxu0 %v2933
      %v2998 = vpop.f32.mrf.mxu0
      %v2999 = vadd.f32 0.0, %v2998
      %v3000 = vpop.f32.mrf.mxu0
      %v3001 = vadd.f32 0.0, %v3000
      %3002 = vmatmul.bf16.gmra.mxu0 %v2936
      %v3003 = vpop.f32.mrf.mxu0
      %v3004 = vadd.f32 0.0, %v3003
      %v3005 = vpop.f32.mrf.mxu0
      %v3006 = vadd.f32 0.0, %v3005
      %3007 = vmatmul.bf16.gmra.mxu0 %v2939
      %v3008 = vpop.f32.mrf.mxu0
      %v3009 = vadd.f32 0.0, %v3008
      %v3010 = vpop.f32.mrf.mxu0
      %v3011 = vadd.f32 0.0, %v3010
      %3012 = vmatmul.bf16.gmra.mxu0 %v2942
      %v3013 = vpop.f32.mrf.mxu0
      %v3014 = vadd.f32 0.0, %v3013
      %v3015 = vpop.f32.mrf.mxu0
      %v3016 = vadd.f32 0.0, %v3015
      %3017 = vmatmul.bf16.gmra.mxu0 %v2945
      %v3018 = vpop.f32.mrf.mxu0
      %v3019 = vadd.f32 0.0, %v3018
      %v3020 = vpop.f32.mrf.mxu0
      %v3021 = vadd.f32 0.0, %v3020
      %3022 = vmatmul.bf16.gmra.mxu0 %v2948
      %v3023 = vpop.f32.mrf.mxu0
      %v3024 = vadd.f32 0.0, %v3023
      %v3025 = vpop.f32.mrf.mxu0
      %v3026 = vadd.f32 0.0, %v3025
      %3027 = vmatmul.bf16.gmra.mxu0 %v2951
      %v3028 = vpop.f32.mrf.mxu0
      %v3029 = vadd.f32 0.0, %v3028
      %v3030 = vpop.f32.mrf.mxu0
      %v3031 = vadd.f32 0.0, %v3030
      %3032 = vmatmul.bf16.gmra.mxu0 %v2954
      %v3033 = vpop.f32.mrf.mxu0
      %v3034 = vadd.f32 0.0, %v3033
      %v3035 = vpop.f32.mrf.mxu0
      %v3036 = vadd.f32 0.0, %v3035
      %3037 = vmatmul.bf16.gmra.mxu0 %v2957
      %v3038 = vpop.f32.mrf.mxu0
      %v3039 = vadd.f32 0.0, %v3038
      %v3040 = vpop.f32.mrf.mxu0
      %v3041 = vadd.f32 0.0, %v3040
      %3042 = vmatmul.bf16.gmra.mxu0 %v2960
      %v3043 = vpop.f32.mrf.mxu0
      %v3044 = vadd.f32 0.0, %v3043
      %v3045 = vpop.f32.mrf.mxu0
      %v3046 = vadd.f32 0.0, %v3045
      %3047 = vmatmul.bf16.gmra.mxu0 %v2963
      %v3048 = vpop.f32.mrf.mxu0
      %v3049 = vadd.f32 0.0, %v3048
      %v3050 = vpop.f32.mrf.mxu0
      %v3051 = vadd.f32 0.0, %v3050
      %3052 = vmatmul.bf16.gmra.mxu0 %v2966
      %v3053 = vpop.f32.mrf.mxu0
      %v3054 = vadd.f32 0.0, %v3053
      %v3055 = vpop.f32.mrf.mxu0
      %v3056 = vadd.f32 0.0, %v3055
      %3057 = vmatmul.bf16.gmra.mxu0 %v2969
      %v3058 = vpop.f32.mrf.mxu0
      %v3059 = vadd.f32 0.0, %v3058
      %v3060 = vpop.f32.mrf.mxu0
      %v3061 = vadd.f32 0.0, %v3060
      %3062 = vmatmul.bf16.gmra.mxu0 %v2972
      %v3063 = vpop.f32.mrf.mxu0
      %v3064 = vadd.f32 0.0, %v3063
      %v3065 = vpop.f32.mrf.mxu0
      %v3066 = vadd.f32 0.0, %v3065
      %3067 = vmatmul.bf16.gmra.mxu0 %v2975
      %v3068 = vpop.f32.mrf.mxu0
      %v3069 = vadd.f32 0.0, %v3068
      %v3070 = vpop.f32.mrf.mxu0
      %v3071 = vadd.f32 0.0, %v3070
      %3072 = vmatmul.bf16.gmra.mxu0 %v2978
      %v3073 = vpop.f32.mrf.mxu0
      %v3074 = vadd.f32 0.0, %v3073
      %v3075 = vpop.f32.mrf.mxu0
      %v3076 = vadd.f32 0.0, %v3075
      %3077 = vmatmul.bf16.gmra.mxu0 %v2981
      %v3078 = vpop.f32.mrf.mxu0
      %v3079 = vadd.f32 0.0, %v3078
      %v3080 = vpop.f32.mrf.mxu0
      %v3081 = vadd.f32 0.0, %v3080
      %3082 = vmatmul.bf16.gmra.mxu0 %v2984
      %v3083 = vpop.f32.mrf.mxu0
      %v3084 = vadd.f32 0.0, %v3083
      %v3085 = vpop.f32.mrf.mxu0
      %v3086 = vadd.f32 0.0, %v3085
      %3087 = vdwg.mxu0
      %v3089 = vsel %vm364, %v2857, 0
      %v3092 = vsel %vm364, %v2858, 0
      %v3095 = vsel %vm364, %v2859, 0
      %v3098 = vsel %vm364, %v2860, 0
      %v3101 = vsel %vm364, %v2861, 0
      %v3104 = vsel %vm364, %v2862, 0
      %v3107 = vsel %vm364, %v2863, 0
      %v3110 = vsel %vm364, %v2864, 0
      %v3113 = vsel %vm364, %v2865, 0
      %v3116 = vsel %vm364, %v2866, 0
      %v3119 = vsel %vm364, %v2867, 0
      %v3122 = vsel %vm364, %v2868, 0
      %v3125 = vsel %vm364, %v2869, 0
      %v3128 = vsel %vm364, %v2870, 0
      %v3131 = vsel %vm364, %v2871, 0
      %v3134 = vsel %vm364, %v2872, 0
      %v3137 = vsel %vm364, %v2873, 0
      %v3140 = vsel %vm364, %v2874, 0
      %v3143 = vsel %vm419, %v2875, 0
      %3145 = vmatpush.bf16.msra.mxu0 0
      %3146 = vmatpush.bf16.msra.mxu0 0
      %3147 = vmatpush.bf16.msra.mxu0 0
      %3148 = vmatpush.bf16.msra.mxu0 0
      %3149 = vmatpush.bf16.msra.mxu0 0
      %3150 = vmatpush.bf16.msra.mxu0 0
      %3151 = vmatpush.bf16.msra.mxu0 0
      %3152 = vmatpush.bf16.msra.mxu0 %v3143
      %3153 = vmatmul.bf16.gmra.mxu0 %v3089
      %v3154 = vpop.f32.mrf.mxu0
      %v3155 = vadd.f32 %v2999, %v3154
      %v3156 = vpop.f32.mrf.mxu0
      %v3157 = vadd.f32 %v3001, %v3156
      %3158 = vmatmul.bf16.gmra.mxu0 %v3092
      %v3159 = vpop.f32.mrf.mxu0
      %v3160 = vadd.f32 %v3004, %v3159
      %v3161 = vpop.f32.mrf.mxu0
      %v3162 = vadd.f32 %v3006, %v3161
      %3163 = vmatmul.bf16.gmra.mxu0 %v3095
      %v3164 = vpop.f32.mrf.mxu0
      %v3165 = vadd.f32 %v3009, %v3164
      %v3166 = vpop.f32.mrf.mxu0
      %v3167 = vadd.f32 %v3011, %v3166
      %3168 = vmatmul.bf16.gmra.mxu0 %v3098
      %v3169 = vpop.f32.mrf.mxu0
      %v3170 = vadd.f32 %v3014, %v3169
      %v3171 = vpop.f32.mrf.mxu0
      %v3172 = vadd.f32 %v3016, %v3171
      %3173 = vmatmul.bf16.gmra.mxu0 %v3101
      %v3174 = vpop.f32.mrf.mxu0
      %v3175 = vadd.f32 %v3019, %v3174
      %v3176 = vpop.f32.mrf.mxu0
      %v3177 = vadd.f32 %v3021, %v3176
      %3178 = vmatmul.bf16.gmra.mxu0 %v3104
      %v3179 = vpop.f32.mrf.mxu0
      %v3180 = vadd.f32 %v3024, %v3179
      %v3181 = vpop.f32.mrf.mxu0
      %v3182 = vadd.f32 %v3026, %v3181
      %3183 = vmatmul.bf16.gmra.mxu0 %v3107
      %v3184 = vpop.f32.mrf.mxu0
      %v3185 = vadd.f32 %v3029, %v3184
      %v3186 = vpop.f32.mrf.mxu0
      %v3187 = vadd.f32 %v3031, %v3186
      %3188 = vmatmul.bf16.gmra.mxu0 %v3110
      %v3189 = vpop.f32.mrf.mxu0
      %v3190 = vadd.f32 %v3034, %v3189
      %v3191 = vpop.f32.mrf.mxu0
      %v3192 = vadd.f32 %v3036, %v3191
      %3193 = vmatmul.bf16.gmra.mxu0 %v3113
      %v3194 = vpop.f32.mrf.mxu0
      %v3195 = vadd.f32 %v3039, %v3194
      %v3196 = vpop.f32.mrf.mxu0
      %v3197 = vadd.f32 %v3041, %v3196
      %3198 = vmatmul.bf16.gmra.mxu0 %v3116
      %v3199 = vpop.f32.mrf.mxu0
      %v3200 = vadd.f32 %v3044, %v3199
      %v3201 = vpop.f32.mrf.mxu0
      %v3202 = vadd.f32 %v3046, %v3201
      %3203 = vmatmul.bf16.gmra.mxu0 %v3119
      %v3204 = vpop.f32.mrf.mxu0
      %v3205 = vadd.f32 %v3049, %v3204
      %v3206 = vpop.f32.mrf.mxu0
      %v3207 = vadd.f32 %v3051, %v3206
      %3208 = vmatmul.bf16.gmra.mxu0 %v3122
      %v3209 = vpop.f32.mrf.mxu0
      %v3210 = vadd.f32 %v3054, %v3209
      %v3211 = vpop.f32.mrf.mxu0
      %v3212 = vadd.f32 %v3056, %v3211
      %3213 = vmatmul.bf16.gmra.mxu0 %v3125
      %v3214 = vpop.f32.mrf.mxu0
      %v3215 = vadd.f32 %v3059, %v3214
      %v3216 = vpop.f32.mrf.mxu0
      %v3217 = vadd.f32 %v3061, %v3216
      %3218 = vmatmul.bf16.gmra.mxu0 %v3128
      %v3219 = vpop.f32.mrf.mxu0
      %v3220 = vadd.f32 %v3064, %v3219
      %v3221 = vpop.f32.mrf.mxu0
      %v3222 = vadd.f32 %v3066, %v3221
      %3223 = vmatmul.bf16.gmra.mxu0 %v3131
      %v3224 = vpop.f32.mrf.mxu0
      %v3225 = vadd.f32 %v3069, %v3224
      %v3226 = vpop.f32.mrf.mxu0
      %v3227 = vadd.f32 %v3071, %v3226
      %3228 = vmatmul.bf16.gmra.mxu0 %v3134
      %v3229 = vpop.f32.mrf.mxu0
      %v3230 = vadd.f32 %v3074, %v3229
      %v3231 = vpop.f32.mrf.mxu0
      %v3232 = vadd.f32 %v3076, %v3231
      %3233 = vmatmul.bf16.gmra.mxu0 %v3137
      %v3234 = vpop.f32.mrf.mxu0
      %v3235 = vadd.f32 %v3079, %v3234
      %v3236 = vpop.f32.mrf.mxu0
      %v3237 = vadd.f32 %v3081, %v3236
      %3238 = vmatmul.bf16.gmra.mxu0 %v3140
      %v3239 = vpop.f32.mrf.mxu0
      %v3240 = vadd.f32 %v3084, %v3239
      %v3241 = vpop.f32.mrf.mxu0
      %v3242 = vadd.f32 %v3086, %v3241
      %3243 = vdwg.mxu0
      %v3244 = vld [vmem:[#allocation2 + $0x2] sm:$0xff]
      %v3245 = vld [vmem:[#allocation2 + $0xa] sm:$0xff]
      %v3246 = vld [vmem:[#allocation2 + $0x12] sm:$0xff]
      %v3247 = vld [vmem:[#allocation2 + $0x1a] sm:$0xff]
      %v3248 = vld [vmem:[#allocation2 + $0x22] sm:$0xff]
      %v3249 = vld [vmem:[#allocation2 + $0x2a] sm:$0xff]
      %v3250 = vld [vmem:[#allocation2 + $0x32] sm:$0xff]
      %v3251 = vld [vmem:[#allocation2 + $0x3a] sm:$0xff]
      %v3252 = vld [vmem:[#allocation2 + $0x42] sm:$0xff]
      %v3253 = vld [vmem:[#allocation2 + $0x4a] sm:$0xff]
      %v3254 = vld [vmem:[#allocation2 + $0x52] sm:$0xff]
      %v3255 = vld [vmem:[#allocation2 + $0x5a] sm:$0xff]
      %v3256 = vld [vmem:[#allocation2 + $0x62] sm:$0xff]
      %v3257 = vld [vmem:[#allocation2 + $0x6a] sm:$0xff]
      %v3258 = vld [vmem:[#allocation2 + $0x72] sm:$0xff]
      %v3259 = vld [vmem:[#allocation2 + $0x7a] sm:$0xff]
      %v3260 = vld [vmem:[#allocation2 + $0x82] sm:$0xff]
      %v3261 = vld [vmem:[#allocation2 + $0x8a] sm:$0xff]
      %v3262 = vld [vmem:[#allocation2 + $0x92] sm:$0xff]
      %v3263 = vld [vmem:[#allocation2 + $0x9a] sm:$0xff]
      %v3264 = vld [vmem:[#allocation2 + $0xa2] sm:$0xff]
      %v3265 = vld [vmem:[#allocation2 + $0xaa] sm:$0xff]
      %v3266 = vld [vmem:[#allocation2 + $0xb2] sm:$0xff]
      %v3267 = vld [vmem:[#allocation2 + $0xba] sm:$0xff]
      %v3268 = vld [vmem:[#allocation2 + $0xc2] sm:$0xff]
      %v3269 = vld [vmem:[#allocation2 + $0xca] sm:$0xff]
      %v3270 = vld [vmem:[#allocation2 + $0xd2] sm:$0xff]
      %v3271 = vld [vmem:[#allocation2 + $0xda] sm:$0xff]
      %v3272 = vld [vmem:[#allocation2 + $0xe2] sm:$0xff]
      %v3273 = vld [vmem:[#allocation2 + $0xea] sm:$0xff]
      %v3274 = vld [vmem:[#allocation2 + $0xf2] sm:$0xff]
      %v3275 = vld [vmem:[#allocation2 + $0xfa] sm:$0xff]
      %v3276 = vld [vmem:[#allocation2 + $0x102] sm:$0xff]
      %v3277 = vld [vmem:[#allocation2 + $0x10a] sm:$0xff]
      %v3278 = vld [vmem:[#allocation2 + $0x112] sm:$0xff]
      %v3279 = vld [vmem:[#allocation2 + $0x11a] sm:$0x3f]
      %v3280 = vpack.c.bf16 %v3245, %v3244
      %v3281 = vpack.c.bf16 %v3247, %v3246
      %v3282 = vpack.c.bf16 %v3249, %v3248
      %v3283 = vpack.c.bf16 %v3251, %v3250
      %v3284 = vpack.c.bf16 %v3253, %v3252
      %v3285 = vpack.c.bf16 %v3255, %v3254
      %v3286 = vpack.c.bf16 %v3257, %v3256
      %v3287 = vpack.c.bf16 %v3259, %v3258
      %v3288 = vpack.c.bf16 %v3261, %v3260
      %v3289 = vpack.c.bf16 %v3263, %v3262
      %v3290 = vpack.c.bf16 %v3265, %v3264
      %v3291 = vpack.c.bf16 %v3267, %v3266
      %v3292 = vpack.c.bf16 %v3269, %v3268
      %v3293 = vpack.c.bf16 %v3271, %v3270
      %v3294 = vpack.c.bf16 %v3273, %v3272
      %v3295 = vpack.c.bf16 %v3275, %v3274
      %v3296 = vpack.c.bf16 %v3277, %v3276
      %v3297 = vpack.c.bf16 %v3279, %v3278
      %s3298 = scalar_lea.vmem %s3, 4
      %v3299 = vld [vmem:[%s3298] sm:$0x3]
      %v3301 = vsel %vm364, %v3280, 0
      %v3304 = vsel %vm364, %v3281, 0
      %v3307 = vsel %vm364, %v3282, 0
      %v3310 = vsel %vm364, %v3283, 0
      %v3313 = vsel %vm364, %v3284, 0
      %v3316 = vsel %vm364, %v3285, 0
      %v3319 = vsel %vm364, %v3286, 0
      %v3322 = vsel %vm364, %v3287, 0
      %v3325 = vsel %vm364, %v3288, 0
      %v3328 = vsel %vm364, %v3289, 0
      %v3331 = vsel %vm364, %v3290, 0
      %v3334 = vsel %vm364, %v3291, 0
      %v3337 = vsel %vm364, %v3292, 0
      %v3340 = vsel %vm364, %v3293, 0
      %v3343 = vsel %vm364, %v3294, 0
      %v3346 = vsel %vm364, %v3295, 0
      %v3349 = vsel %vm364, %v3296, 0
      %v3352 = vsel %vm364, %v3297, 0
      %v3355 = vsel %vm419, %v3299, 0
      %3357 = vmatpush.bf16.msra.mxu0 0
      %3358 = vmatpush.bf16.msra.mxu0 0
      %3359 = vmatpush.bf16.msra.mxu0 0
      %3360 = vmatpush.bf16.msra.mxu0 0
      %3361 = vmatpush.bf16.msra.mxu0 0
      %3362 = vmatpush.bf16.msra.mxu0 0
      %3363 = vmatpush.bf16.msra.mxu0 0
      %3364 = vmatpush.bf16.msra.mxu0 %v3355
      %3365 = vmatmul.bf16.gmra.mxu0 %v3301
      %v3366 = vpop.f32.mrf.mxu0
      %v3367 = vadd.f32 0.0, %v3366
      %v3368 = vpop.f32.mrf.mxu0
      %v3369 = vadd.f32 0.0, %v3368
      %3370 = vmatmul.bf16.gmra.mxu0 %v3304
      %v3371 = vpop.f32.mrf.mxu0
      %v3372 = vadd.f32 0.0, %v3371
      %v3373 = vpop.f32.mrf.mxu0
      %v3374 = vadd.f32 0.0, %v3373
      %3375 = vmatmul.bf16.gmra.mxu0 %v3307
      %v3376 = vpop.f32.mrf.mxu0
      %v3377 = vadd.f32 0.0, %v3376
      %v3378 = vpop.f32.mrf.mxu0
      %v3379 = vadd.f32 0.0, %v3378
      %3380 = vmatmul.bf16.gmra.mxu0 %v3310
      %v3381 = vpop.f32.mrf.mxu0
      %v3382 = vadd.f32 0.0, %v3381
      %v3383 = vpop.f32.mrf.mxu0
      %v3384 = vadd.f32 0.0, %v3383
      %3385 = vmatmul.bf16.gmra.mxu0 %v3313
      %v3386 = vpop.f32.mrf.mxu0
      %v3387 = vadd.f32 0.0, %v3386
      %v3388 = vpop.f32.mrf.mxu0
      %v3389 = vadd.f32 0.0, %v3388
      %3390 = vmatmul.bf16.gmra.mxu0 %v3316
      %v3391 = vpop.f32.mrf.mxu0
      %v3392 = vadd.f32 0.0, %v3391
      %v3393 = vpop.f32.mrf.mxu0
      %v3394 = vadd.f32 0.0, %v3393
      %3395 = vmatmul.bf16.gmra.mxu0 %v3319
      %v3396 = vpop.f32.mrf.mxu0
      %v3397 = vadd.f32 0.0, %v3396
      %v3398 = vpop.f32.mrf.mxu0
      %v3399 = vadd.f32 0.0, %v3398
      %3400 = vmatmul.bf16.gmra.mxu0 %v3322
      %v3401 = vpop.f32.mrf.mxu0
      %v3402 = vadd.f32 0.0, %v3401
      %v3403 = vpop.f32.mrf.mxu0
      %v3404 = vadd.f32 0.0, %v3403
      %3405 = vmatmul.bf16.gmra.mxu0 %v3325
      %v3406 = vpop.f32.mrf.mxu0
      %v3407 = vadd.f32 0.0, %v3406
      %v3408 = vpop.f32.mrf.mxu0
      %v3409 = vadd.f32 0.0, %v3408
      %3410 = vmatmul.bf16.gmra.mxu0 %v3328
      %v3411 = vpop.f32.mrf.mxu0
      %v3412 = vadd.f32 0.0, %v3411
      %v3413 = vpop.f32.mrf.mxu0
      %v3414 = vadd.f32 0.0, %v3413
      %3415 = vmatmul.bf16.gmra.mxu0 %v3331
      %v3416 = vpop.f32.mrf.mxu0
      %v3417 = vadd.f32 0.0, %v3416
      %v3418 = vpop.f32.mrf.mxu0
      %v3419 = vadd.f32 0.0, %v3418
      %3420 = vmatmul.bf16.gmra.mxu0 %v3334
      %v3421 = vpop.f32.mrf.mxu0
      %v3422 = vadd.f32 0.0, %v3421
      %v3423 = vpop.f32.mrf.mxu0
      %v3424 = vadd.f32 0.0, %v3423
      %3425 = vmatmul.bf16.gmra.mxu0 %v3337
      %v3426 = vpop.f32.mrf.mxu0
      %v3427 = vadd.f32 0.0, %v3426
      %v3428 = vpop.f32.mrf.mxu0
      %v3429 = vadd.f32 0.0, %v3428
      %3430 = vmatmul.bf16.gmra.mxu0 %v3340
      %v3431 = vpop.f32.mrf.mxu0
      %v3432 = vadd.f32 0.0, %v3431
      %v3433 = vpop.f32.mrf.mxu0
      %v3434 = vadd.f32 0.0, %v3433
      %3435 = vmatmul.bf16.gmra.mxu0 %v3343
      %v3436 = vpop.f32.mrf.mxu0
      %v3437 = vadd.f32 0.0, %v3436
      %v3438 = vpop.f32.mrf.mxu0
      %v3439 = vadd.f32 0.0, %v3438
      %3440 = vmatmul.bf16.gmra.mxu0 %v3346
      %v3441 = vpop.f32.mrf.mxu0
      %v3442 = vadd.f32 0.0, %v3441
      %v3443 = vpop.f32.mrf.mxu0
      %v3444 = vadd.f32 0.0, %v3443
      %3445 = vmatmul.bf16.gmra.mxu0 %v3349
      %v3446 = vpop.f32.mrf.mxu0
      %v3447 = vadd.f32 0.0, %v3446
      %v3448 = vpop.f32.mrf.mxu0
      %v3449 = vadd.f32 0.0, %v3448
      %3450 = vmatmul.bf16.gmra.mxu0 %v3352
      %v3451 = vpop.f32.mrf.mxu0
      %v3452 = vadd.f32 0.0, %v3451
      %v3453 = vpop.f32.mrf.mxu0
      %v3454 = vadd.f32 0.0, %v3453
      %3455 = vdwg.mxu0
      %v3456 = vadd.f32 %v3155, %v3367
      %v3457 = vadd.f32 %v3157, %v3369
      %v3458 = vadd.f32 %v3160, %v3372
      %v3459 = vadd.f32 %v3162, %v3374
      %v3460 = vadd.f32 %v3165, %v3377
      %v3461 = vadd.f32 %v3167, %v3379
      %v3462 = vadd.f32 %v3170, %v3382
      %v3463 = vadd.f32 %v3172, %v3384
      %v3464 = vadd.f32 %v3175, %v3387
      %v3465 = vadd.f32 %v3177, %v3389
      %v3466 = vadd.f32 %v3180, %v3392
      %v3467 = vadd.f32 %v3182, %v3394
      %v3468 = vadd.f32 %v3185, %v3397
      %v3469 = vadd.f32 %v3187, %v3399
      %v3470 = vadd.f32 %v3190, %v3402
      %v3471 = vadd.f32 %v3192, %v3404
      %v3472 = vadd.f32 %v3195, %v3407
      %v3473 = vadd.f32 %v3197, %v3409
      %v3474 = vadd.f32 %v3200, %v3412
      %v3475 = vadd.f32 %v3202, %v3414
      %v3476 = vadd.f32 %v3205, %v3417
      %v3477 = vadd.f32 %v3207, %v3419
      %v3478 = vadd.f32 %v3210, %v3422
      %v3479 = vadd.f32 %v3212, %v3424
      %v3480 = vadd.f32 %v3215, %v3427
      %v3481 = vadd.f32 %v3217, %v3429
      %v3482 = vadd.f32 %v3220, %v3432
      %v3483 = vadd.f32 %v3222, %v3434
      %v3484 = vadd.f32 %v3225, %v3437
      %v3485 = vadd.f32 %v3227, %v3439
      %v3486 = vadd.f32 %v3230, %v3442
      %v3487 = vadd.f32 %v3232, %v3444
      %v3488 = vadd.f32 %v3235, %v3447
      %v3489 = vadd.f32 %v3237, %v3449
      %v3490 = vadd.f32 %v3240, %v3452
      %v3491 = vadd.f32 %v3242, %v3454
      %v3492 = vld [vmem:[#allocation2 + $0x12] sm:$0xff]
      %v3493 = vld [vmem:[#allocation2 + $0x1a] sm:$0xff]
      %v3494 = vld [vmem:[#allocation2 + $0x22] sm:$0xff]
      %v3495 = vld [vmem:[#allocation2 + $0x2a] sm:$0xff]
      %v3496 = vld [vmem:[#allocation2 + $0x32] sm:$0xff]
      %v3497 = vld [vmem:[#allocation2 + $0x3a] sm:$0xff]
      %v3498 = vld [vmem:[#allocation2 + $0x42] sm:$0xff]
      %v3499 = vld [vmem:[#allocation2 + $0x4a] sm:$0xff]
      %v3500 = vld [vmem:[#allocation2 + $0x52] sm:$0xff]
      %v3501 = vld [vmem:[#allocation2 + $0x5a] sm:$0xff]
      %v3502 = vld [vmem:[#allocation2 + $0x62] sm:$0xff]
      %v3503 = vld [vmem:[#allocation2 + $0x6a] sm:$0xff]
      %v3504 = vld [vmem:[#allocation2 + $0x72] sm:$0xff]
      %v3505 = vld [vmem:[#allocation2 + $0x7a] sm:$0xff]
      %v3506 = vld [vmem:[#allocation2 + $0x82] sm:$0xff]
      %v3507 = vld [vmem:[#allocation2 + $0x8a] sm:$0xff]
      %v3508 = vld [vmem:[#allocation2 + $0x92] sm:$0xff]
      %v3509 = vld [vmem:[#allocation2 + $0x9a] sm:$0xff]
      %v3510 = vld [vmem:[#allocation2 + $0xa2] sm:$0xff]
      %v3511 = vld [vmem:[#allocation2 + $0xaa] sm:$0xff]
      %v3512 = vld [vmem:[#allocation2 + $0xb2] sm:$0xff]
      %v3513 = vld [vmem:[#allocation2 + $0xba] sm:$0xff]
      %v3514 = vld [vmem:[#allocation2 + $0xc2] sm:$0xff]
      %v3515 = vld [vmem:[#allocation2 + $0xca] sm:$0xff]
      %v3516 = vld [vmem:[#allocation2 + $0xd2] sm:$0xff]
      %v3517 = vld [vmem:[#allocation2 + $0xda] sm:$0xff]
      %v3518 = vld [vmem:[#allocation2 + $0xe2] sm:$0xff]
      %v3519 = vld [vmem:[#allocation2 + $0xea] sm:$0xff]
      %v3520 = vld [vmem:[#allocation2 + $0xf2] sm:$0xff]
      %v3521 = vld [vmem:[#allocation2 + $0xfa] sm:$0xff]
      %v3522 = vld [vmem:[#allocation2 + $0x102] sm:$0xff]
      %v3523 = vld [vmem:[#allocation2 + $0x10a] sm:$0xff]
      %v3524 = vld [vmem:[#allocation2 + $0x112] sm:$0xff]
      %v3525 = vld [vmem:[#allocation2 + $0x11a] sm:$0xff]
      %v3526 = vld [vmem:[#allocation2 + $0x122] sm:$0xff]
      %v3527 = vld [vmem:[#allocation2 + $0x12a] sm:$0x3f]
      %v3528 = vpack.c.bf16 %v3493, %v3492
      %v3529 = vpack.c.bf16 %v3495, %v3494
      %v3530 = vpack.c.bf16 %v3497, %v3496
      %v3531 = vpack.c.bf16 %v3499, %v3498
      %v3532 = vpack.c.bf16 %v3501, %v3500
      %v3533 = vpack.c.bf16 %v3503, %v3502
      %v3534 = vpack.c.bf16 %v3505, %v3504
      %v3535 = vpack.c.bf16 %v3507, %v3506
      %v3536 = vpack.c.bf16 %v3509, %v3508
      %v3537 = vpack.c.bf16 %v3511, %v3510
      %v3538 = vpack.c.bf16 %v3513, %v3512
      %v3539 = vpack.c.bf16 %v3515, %v3514
      %v3540 = vpack.c.bf16 %v3517, %v3516
      %v3541 = vpack.c.bf16 %v3519, %v3518
      %v3542 = vpack.c.bf16 %v3521, %v3520
      %v3543 = vpack.c.bf16 %v3523, %v3522
      %v3544 = vpack.c.bf16 %v3525, %v3524
      %v3545 = vpack.c.bf16 %v3527, %v3526
      %s3546 = scalar_lea.vmem %s3, 6
      %v3547 = vld [vmem:[%s3546] sm:$0x3]
      %v3549 = vsel %vm364, %v3528, 0
      %v3552 = vsel %vm364, %v3529, 0
      %v3555 = vsel %vm364, %v3530, 0
      %v3558 = vsel %vm364, %v3531, 0
      %v3561 = vsel %vm364, %v3532, 0
      %v3564 = vsel %vm364, %v3533, 0
      %v3567 = vsel %vm364, %v3534, 0
      %v3570 = vsel %vm364, %v3535, 0
      %v3573 = vsel %vm364, %v3536, 0
      %v3576 = vsel %vm364, %v3537, 0
      %v3579 = vsel %vm364, %v3538, 0
      %v3582 = vsel %vm364, %v3539, 0
      %v3585 = vsel %vm364, %v3540, 0
      %v3588 = vsel %vm364, %v3541, 0
      %v3591 = vsel %vm364, %v3542, 0
      %v3594 = vsel %vm364, %v3543, 0
      %v3597 = vsel %vm364, %v3544, 0
      %v3600 = vsel %vm364, %v3545, 0
      %v3603 = vsel %vm419, %v3547, 0
      %3605 = vmatpush.bf16.msra.mxu0 0
      %3606 = vmatpush.bf16.msra.mxu0 0
      %3607 = vmatpush.bf16.msra.mxu0 0
      %3608 = vmatpush.bf16.msra.mxu0 0
      %3609 = vmatpush.bf16.msra.mxu0 0
      %3610 = vmatpush.bf16.msra.mxu0 0
      %3611 = vmatpush.bf16.msra.mxu0 0
      %3612 = vmatpush.bf16.msra.mxu0 %v3603
      %3613 = vmatmul.bf16.gmra.mxu0 %v3549
      %v3614 = vpop.f32.mrf.mxu0
      %v3615 = vadd.f32 0.0, %v3614
      %v3616 = vpop.f32.mrf.mxu0
      %v3617 = vadd.f32 0.0, %v3616
      %3618 = vmatmul.bf16.gmra.mxu0 %v3552
      %v3619 = vpop.f32.mrf.mxu0
      %v3620 = vadd.f32 0.0, %v3619
      %v3621 = vpop.f32.mrf.mxu0
      %v3622 = vadd.f32 0.0, %v3621
      %3623 = vmatmul.bf16.gmra.mxu0 %v3555
      %v3624 = vpop.f32.mrf.mxu0
      %v3625 = vadd.f32 0.0, %v3624
      %v3626 = vpop.f32.mrf.mxu0
      %v3627 = vadd.f32 0.0, %v3626
      %3628 = vmatmul.bf16.gmra.mxu0 %v3558
      %v3629 = vpop.f32.mrf.mxu0
      %v3630 = vadd.f32 0.0, %v3629
      %v3631 = vpop.f32.mrf.mxu0
      %v3632 = vadd.f32 0.0, %v3631
      %3633 = vmatmul.bf16.gmra.mxu0 %v3561
      %v3634 = vpop.f32.mrf.mxu0
      %v3635 = vadd.f32 0.0, %v3634
      %v3636 = vpop.f32.mrf.mxu0
      %v3637 = vadd.f32 0.0, %v3636
      %3638 = vmatmul.bf16.gmra.mxu0 %v3564
      %v3639 = vpop.f32.mrf.mxu0
      %v3640 = vadd.f32 0.0, %v3639
      %v3641 = vpop.f32.mrf.mxu0
      %v3642 = vadd.f32 0.0, %v3641
      %3643 = vmatmul.bf16.gmra.mxu0 %v3567
      %v3644 = vpop.f32.mrf.mxu0
      %v3645 = vadd.f32 0.0, %v3644
      %v3646 = vpop.f32.mrf.mxu0
      %v3647 = vadd.f32 0.0, %v3646
      %3648 = vmatmul.bf16.gmra.mxu0 %v3570
      %v3649 = vpop.f32.mrf.mxu0
      %v3650 = vadd.f32 0.0, %v3649
      %v3651 = vpop.f32.mrf.mxu0
      %v3652 = vadd.f32 0.0, %v3651
      %3653 = vmatmul.bf16.gmra.mxu0 %v3573
      %v3654 = vpop.f32.mrf.mxu0
      %v3655 = vadd.f32 0.0, %v3654
      %v3656 = vpop.f32.mrf.mxu0
      %v3657 = vadd.f32 0.0, %v3656
      %3658 = vmatmul.bf16.gmra.mxu0 %v3576
      %v3659 = vpop.f32.mrf.mxu0
      %v3660 = vadd.f32 0.0, %v3659
      %v3661 = vpop.f32.mrf.mxu0
      %v3662 = vadd.f32 0.0, %v3661
      %3663 = vmatmul.bf16.gmra.mxu0 %v3579
      %v3664 = vpop.f32.mrf.mxu0
      %v3665 = vadd.f32 0.0, %v3664
      %v3666 = vpop.f32.mrf.mxu0
      %v3667 = vadd.f32 0.0, %v3666
      %3668 = vmatmul.bf16.gmra.mxu0 %v3582
      %v3669 = vpop.f32.mrf.mxu0
      %v3670 = vadd.f32 0.0, %v3669
      %v3671 = vpop.f32.mrf.mxu0
      %v3672 = vadd.f32 0.0, %v3671
      %3673 = vmatmul.bf16.gmra.mxu0 %v3585
      %v3674 = vpop.f32.mrf.mxu0
      %v3675 = vadd.f32 0.0, %v3674
      %v3676 = vpop.f32.mrf.mxu0
      %v3677 = vadd.f32 0.0, %v3676
      %3678 = vmatmul.bf16.gmra.mxu0 %v3588
      %v3679 = vpop.f32.mrf.mxu0
      %v3680 = vadd.f32 0.0, %v3679
      %v3681 = vpop.f32.mrf.mxu0
      %v3682 = vadd.f32 0.0, %v3681
      %3683 = vmatmul.bf16.gmra.mxu0 %v3591
      %v3684 = vpop.f32.mrf.mxu0
      %v3685 = vadd.f32 0.0, %v3684
      %v3686 = vpop.f32.mrf.mxu0
      %v3687 = vadd.f32 0.0, %v3686
      %3688 = vmatmul.bf16.gmra.mxu0 %v3594
      %v3689 = vpop.f32.mrf.mxu0
      %v3690 = vadd.f32 0.0, %v3689
      %v3691 = vpop.f32.mrf.mxu0
      %v3692 = vadd.f32 0.0, %v3691
      %3693 = vmatmul.bf16.gmra.mxu0 %v3597
      %v3694 = vpop.f32.mrf.mxu0
      %v3695 = vadd.f32 0.0, %v3694
      %v3696 = vpop.f32.mrf.mxu0
      %v3697 = vadd.f32 0.0, %v3696
      %3698 = vmatmul.bf16.gmra.mxu0 %v3600
      %v3699 = vpop.f32.mrf.mxu0
      %v3700 = vadd.f32 0.0, %v3699
      %v3701 = vpop.f32.mrf.mxu0
      %v3702 = vadd.f32 0.0, %v3701
      %3703 = vdwg.mxu0
      %v3704 = vadd.f32 %v3456, %v3615
      %v3705 = vadd.f32 %v3457, %v3617
      %v3706 = vadd.f32 %v3458, %v3620
      %v3707 = vadd.f32 %v3459, %v3622
      %v3708 = vadd.f32 %v3460, %v3625
      %v3709 = vadd.f32 %v3461, %v3627
      %v3710 = vadd.f32 %v3462, %v3630
      %v3711 = vadd.f32 %v3463, %v3632
      %v3712 = vadd.f32 %v3464, %v3635
      %v3713 = vadd.f32 %v3465, %v3637
      %v3714 = vadd.f32 %v3466, %v3640
      %v3715 = vadd.f32 %v3467, %v3642
      %v3716 = vadd.f32 %v3468, %v3645
      %v3717 = vadd.f32 %v3469, %v3647
      %v3718 = vadd.f32 %v3470, %v3650
      %v3719 = vadd.f32 %v3471, %v3652
      %v3720 = vadd.f32 %v3472, %v3655
      %v3721 = vadd.f32 %v3473, %v3657
      %v3722 = vadd.f32 %v3474, %v3660
      %v3723 = vadd.f32 %v3475, %v3662
      %v3724 = vadd.f32 %v3476, %v3665
      %v3725 = vadd.f32 %v3477, %v3667
      %v3726 = vadd.f32 %v3478, %v3670
      %v3727 = vadd.f32 %v3479, %v3672
      %v3728 = vadd.f32 %v3480, %v3675
      %v3729 = vadd.f32 %v3481, %v3677
      %v3730 = vadd.f32 %v3482, %v3680
      %v3731 = vadd.f32 %v3483, %v3682
      %v3732 = vadd.f32 %v3484, %v3685
      %v3733 = vadd.f32 %v3485, %v3687
      %v3734 = vadd.f32 %v3486, %v3690
      %v3735 = vadd.f32 %v3487, %v3692
      %v3736 = vadd.f32 %v3488, %v3695
      %v3737 = vadd.f32 %v3489, %v3697
      %v3738 = vadd.f32 %v3490, %v3700
      %v3739 = vadd.f32 %v3491, %v3702
      %v3740 = vld [vmem:[#allocation2 + $0x13] sm:$0xff]
      %v3741 = vld [vmem:[#allocation2 + $0x1b] sm:$0xff]
      %v3742 = vld [vmem:[#allocation2 + $0x23] sm:$0xff]
      %v3743 = vld [vmem:[#allocation2 + $0x2b] sm:$0xff]
      %v3744 = vld [vmem:[#allocation2 + $0x33] sm:$0xff]
      %v3745 = vld [vmem:[#allocation2 + $0x3b] sm:$0xff]
      %v3746 = vld [vmem:[#allocation2 + $0x43] sm:$0xff]
      %v3747 = vld [vmem:[#allocation2 + $0x4b] sm:$0xff]
      %v3748 = vld [vmem:[#allocation2 + $0x53] sm:$0xff]
      %v3749 = vld [vmem:[#allocation2 + $0x5b] sm:$0xff]
      %v3750 = vld [vmem:[#allocation2 + $0x63] sm:$0xff]
      %v3751 = vld [vmem:[#allocation2 + $0x6b] sm:$0xff]
      %v3752 = vld [vmem:[#allocation2 + $0x73] sm:$0xff]
      %v3753 = vld [vmem:[#allocation2 + $0x7b] sm:$0xff]
      %v3754 = vld [vmem:[#allocation2 + $0x83] sm:$0xff]
      %v3755 = vld [vmem:[#allocation2 + $0x8b] sm:$0xff]
      %v3756 = vld [vmem:[#allocation2 + $0x93] sm:$0xff]
      %v3757 = vld [vmem:[#allocation2 + $0x9b] sm:$0xff]
      %v3758 = vld [vmem:[#allocation2 + $0xa3] sm:$0xff]
      %v3759 = vld [vmem:[#allocation2 + $0xab] sm:$0xff]
      %v3760 = vld [vmem:[#allocation2 + $0xb3] sm:$0xff]
      %v3761 = vld [vmem:[#allocation2 + $0xbb] sm:$0xff]
      %v3762 = vld [vmem:[#allocation2 + $0xc3] sm:$0xff]
      %v3763 = vld [vmem:[#allocation2 + $0xcb] sm:$0xff]
      %v3764 = vld [vmem:[#allocation2 + $0xd3] sm:$0xff]
      %v3765 = vld [vmem:[#allocation2 + $0xdb] sm:$0xff]
      %v3766 = vld [vmem:[#allocation2 + $0xe3] sm:$0xff]
      %v3767 = vld [vmem:[#allocation2 + $0xeb] sm:$0xff]
      %v3768 = vld [vmem:[#allocation2 + $0xf3] sm:$0xff]
      %v3769 = vld [vmem:[#allocation2 + $0xfb] sm:$0xff]
      %v3770 = vld [vmem:[#allocation2 + $0x103] sm:$0xff]
      %v3771 = vld [vmem:[#allocation2 + $0x10b] sm:$0xff]
      %v3772 = vld [vmem:[#allocation2 + $0x113] sm:$0xff]
      %v3773 = vld [vmem:[#allocation2 + $0x11b] sm:$0xff]
      %v3774 = vld [vmem:[#allocation2 + $0x123] sm:$0xff]
      %v3775 = vld [vmem:[#allocation2 + $0x12b] sm:$0x3f]
      %v3776 = vpack.c.bf16 %v3741, %v3740
      %v3777 = vpack.c.bf16 %v3743, %v3742
      %v3778 = vpack.c.bf16 %v3745, %v3744
      %v3779 = vpack.c.bf16 %v3747, %v3746
      %v3780 = vpack.c.bf16 %v3749, %v3748
      %v3781 = vpack.c.bf16 %v3751, %v3750
      %v3782 = vpack.c.bf16 %v3753, %v3752
      %v3783 = vpack.c.bf16 %v3755, %v3754
      %v3784 = vpack.c.bf16 %v3757, %v3756
      %v3785 = vpack.c.bf16 %v3759, %v3758
      %v3786 = vpack.c.bf16 %v3761, %v3760
      %v3787 = vpack.c.bf16 %v3763, %v3762
      %v3788 = vpack.c.bf16 %v3765, %v3764
      %v3789 = vpack.c.bf16 %v3767, %v3766
      %v3790 = vpack.c.bf16 %v3769, %v3768
      %v3791 = vpack.c.bf16 %v3771, %v3770
      %v3792 = vpack.c.bf16 %v3773, %v3772
      %v3793 = vpack.c.bf16 %v3775, %v3774
      %s3794 = scalar_lea.vmem %s3, 8
      %v3795 = vld [vmem:[%s3794] sm:$0x3]
      %v3797 = vsel %vm364, %v3776, 0
      %v3800 = vsel %vm364, %v3777, 0
      %v3803 = vsel %vm364, %v3778, 0
      %v3806 = vsel %vm364, %v3779, 0
      %v3809 = vsel %vm364, %v3780, 0
      %v3812 = vsel %vm364, %v3781, 0
      %v3815 = vsel %vm364, %v3782, 0
      %v3818 = vsel %vm364, %v3783, 0
      %v3821 = vsel %vm364, %v3784, 0
      %v3824 = vsel %vm364, %v3785, 0
      %v3827 = vsel %vm364, %v3786, 0
      %v3830 = vsel %vm364, %v3787, 0
      %v3833 = vsel %vm364, %v3788, 0
      %v3836 = vsel %vm364, %v3789, 0
      %v3839 = vsel %vm364, %v3790, 0
      %v3842 = vsel %vm364, %v3791, 0
      %v3845 = vsel %vm364, %v3792, 0
      %v3848 = vsel %vm364, %v3793, 0
      %v3851 = vsel %vm419, %v3795, 0
      %3853 = vmatpush.bf16.msra.mxu0 0
      %3854 = vmatpush.bf16.msra.mxu0 0
      %3855 = vmatpush.bf16.msra.mxu0 0
      %3856 = vmatpush.bf16.msra.mxu0 0
      %3857 = vmatpush.bf16.msra.mxu0 0
      %3858 = vmatpush.bf16.msra.mxu0 0
      %3859 = vmatpush.bf16.msra.mxu0 0
      %3860 = vmatpush.bf16.msra.mxu0 %v3851
      %3861 = vmatmul.bf16.gmra.mxu0 %v3797
      %v3862 = vpop.f32.mrf.mxu0
      %v3863 = vadd.f32 0.0, %v3862
      %v3864 = vpop.f32.mrf.mxu0
      %v3865 = vadd.f32 0.0, %v3864
      %3866 = vmatmul.bf16.gmra.mxu0 %v3800
      %v3867 = vpop.f32.mrf.mxu0
      %v3868 = vadd.f32 0.0, %v3867
      %v3869 = vpop.f32.mrf.mxu0
      %v3870 = vadd.f32 0.0, %v3869
      %3871 = vmatmul.bf16.gmra.mxu0 %v3803
      %v3872 = vpop.f32.mrf.mxu0
      %v3873 = vadd.f32 0.0, %v3872
      %v3874 = vpop.f32.mrf.mxu0
      %v3875 = vadd.f32 0.0, %v3874
      %3876 = vmatmul.bf16.gmra.mxu0 %v3806
      %v3877 = vpop.f32.mrf.mxu0
      %v3878 = vadd.f32 0.0, %v3877
      %v3879 = vpop.f32.mrf.mxu0
      %v3880 = vadd.f32 0.0, %v3879
      %3881 = vmatmul.bf16.gmra.mxu0 %v3809
      %v3882 = vpop.f32.mrf.mxu0
      %v3883 = vadd.f32 0.0, %v3882
      %v3884 = vpop.f32.mrf.mxu0
      %v3885 = vadd.f32 0.0, %v3884
      %3886 = vmatmul.bf16.gmra.mxu0 %v3812
      %v3887 = vpop.f32.mrf.mxu0
      %v3888 = vadd.f32 0.0, %v3887
      %v3889 = vpop.f32.mrf.mxu0
      %v3890 = vadd.f32 0.0, %v3889
      %3891 = vmatmul.bf16.gmra.mxu0 %v3815
      %v3892 = vpop.f32.mrf.mxu0
      %v3893 = vadd.f32 0.0, %v3892
      %v3894 = vpop.f32.mrf.mxu0
      %v3895 = vadd.f32 0.0, %v3894
      %3896 = vmatmul.bf16.gmra.mxu0 %v3818
      %v3897 = vpop.f32.mrf.mxu0
      %v3898 = vadd.f32 0.0, %v3897
      %v3899 = vpop.f32.mrf.mxu0
      %v3900 = vadd.f32 0.0, %v3899
      %3901 = vmatmul.bf16.gmra.mxu0 %v3821
      %v3902 = vpop.f32.mrf.mxu0
      %v3903 = vadd.f32 0.0, %v3902
      %v3904 = vpop.f32.mrf.mxu0
      %v3905 = vadd.f32 0.0, %v3904
      %3906 = vmatmul.bf16.gmra.mxu0 %v3824
      %v3907 = vpop.f32.mrf.mxu0
      %v3908 = vadd.f32 0.0, %v3907
      %v3909 = vpop.f32.mrf.mxu0
      %v3910 = vadd.f32 0.0, %v3909
      %3911 = vmatmul.bf16.gmra.mxu0 %v3827
      %v3912 = vpop.f32.mrf.mxu0
      %v3913 = vadd.f32 0.0, %v3912
      %v3914 = vpop.f32.mrf.mxu0
      %v3915 = vadd.f32 0.0, %v3914
      %3916 = vmatmul.bf16.gmra.mxu0 %v3830
      %v3917 = vpop.f32.mrf.mxu0
      %v3918 = vadd.f32 0.0, %v3917
      %v3919 = vpop.f32.mrf.mxu0
      %v3920 = vadd.f32 0.0, %v3919
      %3921 = vmatmul.bf16.gmra.mxu0 %v3833
      %v3922 = vpop.f32.mrf.mxu0
      %v3923 = vadd.f32 0.0, %v3922
      %v3924 = vpop.f32.mrf.mxu0
      %v3925 = vadd.f32 0.0, %v3924
      %3926 = vmatmul.bf16.gmra.mxu0 %v3836
      %v3927 = vpop.f32.mrf.mxu0
      %v3928 = vadd.f32 0.0, %v3927
      %v3929 = vpop.f32.mrf.mxu0
      %v3930 = vadd.f32 0.0, %v3929
      %3931 = vmatmul.bf16.gmra.mxu0 %v3839
      %v3932 = vpop.f32.mrf.mxu0
      %v3933 = vadd.f32 0.0, %v3932
      %v3934 = vpop.f32.mrf.mxu0
      %v3935 = vadd.f32 0.0, %v3934
      %3936 = vmatmul.bf16.gmra.mxu0 %v3842
      %v3937 = vpop.f32.mrf.mxu0
      %v3938 = vadd.f32 0.0, %v3937
      %v3939 = vpop.f32.mrf.mxu0
      %v3940 = vadd.f32 0.0, %v3939
      %3941 = vmatmul.bf16.gmra.mxu0 %v3845
      %v3942 = vpop.f32.mrf.mxu0
      %v3943 = vadd.f32 0.0, %v3942
      %v3944 = vpop.f32.mrf.mxu0
      %v3945 = vadd.f32 0.0, %v3944
      %3946 = vmatmul.bf16.gmra.mxu0 %v3848
      %v3947 = vpop.f32.mrf.mxu0
      %v3948 = vadd.f32 0.0, %v3947
      %v3949 = vpop.f32.mrf.mxu0
      %v3950 = vadd.f32 0.0, %v3949
      %3951 = vdwg.mxu0
      %v3952 = vadd.f32 %v3704, %v3863
      %v3953 = vadd.f32 %v3705, %v3865
      %v3954 = vadd.f32 %v3706, %v3868
      %v3955 = vadd.f32 %v3707, %v3870
      %v3956 = vadd.f32 %v3708, %v3873
      %v3957 = vadd.f32 %v3709, %v3875
      %v3958 = vadd.f32 %v3710, %v3878
      %v3959 = vadd.f32 %v3711, %v3880
      %v3960 = vadd.f32 %v3712, %v3883
      %v3961 = vadd.f32 %v3713, %v3885
      %v3962 = vadd.f32 %v3714, %v3888
      %v3963 = vadd.f32 %v3715, %v3890
      %v3964 = vadd.f32 %v3716, %v3893
      %v3965 = vadd.f32 %v3717, %v3895
      %v3966 = vadd.f32 %v3718, %v3898
      %v3967 = vadd.f32 %v3719, %v3900
      %v3968 = vadd.f32 %v3720, %v3903
      %v3969 = vadd.f32 %v3721, %v3905
      %v3970 = vadd.f32 %v3722, %v3908
      %v3971 = vadd.f32 %v3723, %v3910
      %v3972 = vadd.f32 %v3724, %v3913
      %v3973 = vadd.f32 %v3725, %v3915
      %v3974 = vadd.f32 %v3726, %v3918
      %v3975 = vadd.f32 %v3727, %v3920
      %v3976 = vadd.f32 %v3728, %v3923
      %v3977 = vadd.f32 %v3729, %v3925
      %v3978 = vadd.f32 %v3730, %v3928
      %v3979 = vadd.f32 %v3731, %v3930
      %v3980 = vadd.f32 %v3732, %v3933
      %v3981 = vadd.f32 %v3733, %v3935
      %v3982 = vadd.f32 %v3734, %v3938
      %v3983 = vadd.f32 %v3735, %v3940
      %v3984 = vadd.f32 %v3736, %v3943
      %v3985 = vadd.f32 %v3737, %v3945
      %v3986 = vadd.f32 %v3738, %v3948
      %v3987 = vadd.f32 %v3739, %v3950
      %v3988 = vld [vmem:[#allocation2 + $0x14] sm:$0xff]
      %v3989 = vld [vmem:[#allocation2 + $0x1c] sm:$0xff]
      %v3990 = vld [vmem:[#allocation2 + $0x24] sm:$0xff]
      %v3991 = vld [vmem:[#allocation2 + $0x2c] sm:$0xff]
      %v3992 = vld [vmem:[#allocation2 + $0x34] sm:$0xff]
      %v3993 = vld [vmem:[#allocation2 + $0x3c] sm:$0xff]
      %v3994 = vld [vmem:[#allocation2 + $0x44] sm:$0xff]
      %v3995 = vld [vmem:[#allocation2 + $0x4c] sm:$0xff]
      %v3996 = vld [vmem:[#allocation2 + $0x54] sm:$0xff]
      %v3997 = vld [vmem:[#allocation2 + $0x5c] sm:$0xff]
      %v3998 = vld [vmem:[#allocation2 + $0x64] sm:$0xff]
      %v3999 = vld [vmem:[#allocation2 + $0x6c] sm:$0xff]
      %v4000 = vld [vmem:[#allocation2 + $0x74] sm:$0xff]
      %v4001 = vld [vmem:[#allocation2 + $0x7c] sm:$0xff]
      %v4002 = vld [vmem:[#allocation2 + $0x84] sm:$0xff]
      %v4003 = vld [vmem:[#allocation2 + $0x8c] sm:$0xff]
      %v4004 = vld [vmem:[#allocation2 + $0x94] sm:$0xff]
      %v4005 = vld [vmem:[#allocation2 + $0x9c] sm:$0xff]
      %v4006 = vld [vmem:[#allocation2 + $0xa4] sm:$0xff]
      %v4007 = vld [vmem:[#allocation2 + $0xac] sm:$0xff]
      %v4008 = vld [vmem:[#allocation2 + $0xb4] sm:$0xff]
      %v4009 = vld [vmem:[#allocation2 + $0xbc] sm:$0xff]
      %v4010 = vld [vmem:[#allocation2 + $0xc4] sm:$0xff]
      %v4011 = vld [vmem:[#allocation2 + $0xcc] sm:$0xff]
      %v4012 = vld [vmem:[#allocation2 + $0xd4] sm:$0xff]
      %v4013 = vld [vmem:[#allocation2 + $0xdc] sm:$0xff]
      %v4014 = vld [vmem:[#allocation2 + $0xe4] sm:$0xff]
      %v4015 = vld [vmem:[#allocation2 + $0xec] sm:$0xff]
      %v4016 = vld [vmem:[#allocation2 + $0xf4] sm:$0xff]
      %v4017 = vld [vmem:[#allocation2 + $0xfc] sm:$0xff]
      %v4018 = vld [vmem:[#allocation2 + $0x104] sm:$0xff]
      %v4019 = vld [vmem:[#allocation2 + $0x10c] sm:$0xff]
      %v4020 = vld [vmem:[#allocation2 + $0x114] sm:$0xff]
      %v4021 = vld [vmem:[#allocation2 + $0x11c] sm:$0xff]
      %v4022 = vld [vmem:[#allocation2 + $0x124] sm:$0xff]
      %v4023 = vld [vmem:[#allocation2 + $0x12c] sm:$0x3f]
      %v4024 = vpack.c.bf16 %v3989, %v3988
      %v4025 = vpack.c.bf16 %v3991, %v3990
      %v4026 = vpack.c.bf16 %v3993, %v3992
      %v4027 = vpack.c.bf16 %v3995, %v3994
      %v4028 = vpack.c.bf16 %v3997, %v3996
      %v4029 = vpack.c.bf16 %v3999, %v3998
      %v4030 = vpack.c.bf16 %v4001, %v4000
      %v4031 = vpack.c.bf16 %v4003, %v4002
      %v4032 = vpack.c.bf16 %v4005, %v4004
      %v4033 = vpack.c.bf16 %v4007, %v4006
      %v4034 = vpack.c.bf16 %v4009, %v4008
      %v4035 = vpack.c.bf16 %v4011, %v4010
      %v4036 = vpack.c.bf16 %v4013, %v4012
      %v4037 = vpack.c.bf16 %v4015, %v4014
      %v4038 = vpack.c.bf16 %v4017, %v4016
      %v4039 = vpack.c.bf16 %v4019, %v4018
      %v4040 = vpack.c.bf16 %v4021, %v4020
      %v4041 = vpack.c.bf16 %v4023, %v4022
      %s4042 = scalar_lea.vmem %s3, 10
      %v4043 = vld [vmem:[%s4042] sm:$0x3]
      %v4045 = vsel %vm364, %v4024, 0
      %v4048 = vsel %vm364, %v4025, 0
      %v4051 = vsel %vm364, %v4026, 0
      %v4054 = vsel %vm364, %v4027, 0
      %v4057 = vsel %vm364, %v4028, 0
      %v4060 = vsel %vm364, %v4029, 0
      %v4063 = vsel %vm364, %v4030, 0
      %v4066 = vsel %vm364, %v4031, 0
      %v4069 = vsel %vm364, %v4032, 0
      %v4072 = vsel %vm364, %v4033, 0
      %v4075 = vsel %vm364, %v4034, 0
      %v4078 = vsel %vm364, %v4035, 0
      %v4081 = vsel %vm364, %v4036, 0
      %v4084 = vsel %vm364, %v4037, 0
      %v4087 = vsel %vm364, %v4038, 0
      %v4090 = vsel %vm364, %v4039, 0
      %v4093 = vsel %vm364, %v4040, 0
      %v4096 = vsel %vm364, %v4041, 0
      %v4099 = vsel %vm419, %v4043, 0
      %4101 = vmatpush.bf16.msra.mxu0 0
      %4102 = vmatpush.bf16.msra.mxu0 0
      %4103 = vmatpush.bf16.msra.mxu0 0
      %4104 = vmatpush.bf16.msra.mxu0 0
      %4105 = vmatpush.bf16.msra.mxu0 0
      %4106 = vmatpush.bf16.msra.mxu0 0
      %4107 = vmatpush.bf16.msra.mxu0 0
      %4108 = vmatpush.bf16.msra.mxu0 %v4099
      %4109 = vmatmul.bf16.gmra.mxu0 %v4045
      %v4110 = vpop.f32.mrf.mxu0
      %v4111 = vadd.f32 0.0, %v4110
      %v4112 = vpop.f32.mrf.mxu0
      %v4113 = vadd.f32 0.0, %v4112
      %4114 = vmatmul.bf16.gmra.mxu0 %v4048
      %v4115 = vpop.f32.mrf.mxu0
      %v4116 = vadd.f32 0.0, %v4115
      %v4117 = vpop.f32.mrf.mxu0
      %v4118 = vadd.f32 0.0, %v4117
      %4119 = vmatmul.bf16.gmra.mxu0 %v4051
      %v4120 = vpop.f32.mrf.mxu0
      %v4121 = vadd.f32 0.0, %v4120
      %v4122 = vpop.f32.mrf.mxu0
      %v4123 = vadd.f32 0.0, %v4122
      %4124 = vmatmul.bf16.gmra.mxu0 %v4054
      %v4125 = vpop.f32.mrf.mxu0
      %v4126 = vadd.f32 0.0, %v4125
      %v4127 = vpop.f32.mrf.mxu0
      %v4128 = vadd.f32 0.0, %v4127
      %4129 = vmatmul.bf16.gmra.mxu0 %v4057
      %v4130 = vpop.f32.mrf.mxu0
      %v4131 = vadd.f32 0.0, %v4130
      %v4132 = vpop.f32.mrf.mxu0
      %v4133 = vadd.f32 0.0, %v4132
      %4134 = vmatmul.bf16.gmra.mxu0 %v4060
      %v4135 = vpop.f32.mrf.mxu0
      %v4136 = vadd.f32 0.0, %v4135
      %v4137 = vpop.f32.mrf.mxu0
      %v4138 = vadd.f32 0.0, %v4137
      %4139 = vmatmul.bf16.gmra.mxu0 %v4063
      %v4140 = vpop.f32.mrf.mxu0
      %v4141 = vadd.f32 0.0, %v4140
      %v4142 = vpop.f32.mrf.mxu0
      %v4143 = vadd.f32 0.0, %v4142
      %4144 = vmatmul.bf16.gmra.mxu0 %v4066
      %v4145 = vpop.f32.mrf.mxu0
      %v4146 = vadd.f32 0.0, %v4145
      %v4147 = vpop.f32.mrf.mxu0
      %v4148 = vadd.f32 0.0, %v4147
      %4149 = vmatmul.bf16.gmra.mxu0 %v4069
      %v4150 = vpop.f32.mrf.mxu0
      %v4151 = vadd.f32 0.0, %v4150
      %v4152 = vpop.f32.mrf.mxu0
      %v4153 = vadd.f32 0.0, %v4152
      %4154 = vmatmul.bf16.gmra.mxu0 %v4072
      %v4155 = vpop.f32.mrf.mxu0
      %v4156 = vadd.f32 0.0, %v4155
      %v4157 = vpop.f32.mrf.mxu0
      %v4158 = vadd.f32 0.0, %v4157
      %4159 = vmatmul.bf16.gmra.mxu0 %v4075
      %v4160 = vpop.f32.mrf.mxu0
      %v4161 = vadd.f32 0.0, %v4160
      %v4162 = vpop.f32.mrf.mxu0
      %v4163 = vadd.f32 0.0, %v4162
      %4164 = vmatmul.bf16.gmra.mxu0 %v4078
      %v4165 = vpop.f32.mrf.mxu0
      %v4166 = vadd.f32 0.0, %v4165
      %v4167 = vpop.f32.mrf.mxu0
      %v4168 = vadd.f32 0.0, %v4167
      %4169 = vmatmul.bf16.gmra.mxu0 %v4081
      %v4170 = vpop.f32.mrf.mxu0
      %v4171 = vadd.f32 0.0, %v4170
      %v4172 = vpop.f32.mrf.mxu0
      %v4173 = vadd.f32 0.0, %v4172
      %4174 = vmatmul.bf16.gmra.mxu0 %v4084
      %v4175 = vpop.f32.mrf.mxu0
      %v4176 = vadd.f32 0.0, %v4175
      %v4177 = vpop.f32.mrf.mxu0
      %v4178 = vadd.f32 0.0, %v4177
      %4179 = vmatmul.bf16.gmra.mxu0 %v4087
      %v4180 = vpop.f32.mrf.mxu0
      %v4181 = vadd.f32 0.0, %v4180
      %v4182 = vpop.f32.mrf.mxu0
      %v4183 = vadd.f32 0.0, %v4182
      %4184 = vmatmul.bf16.gmra.mxu0 %v4090
      %v4185 = vpop.f32.mrf.mxu0
      %v4186 = vadd.f32 0.0, %v4185
      %v4187 = vpop.f32.mrf.mxu0
      %v4188 = vadd.f32 0.0, %v4187
      %4189 = vmatmul.bf16.gmra.mxu0 %v4093
      %v4190 = vpop.f32.mrf.mxu0
      %v4191 = vadd.f32 0.0, %v4190
      %v4192 = vpop.f32.mrf.mxu0
      %v4193 = vadd.f32 0.0, %v4192
      %4194 = vmatmul.bf16.gmra.mxu0 %v4096
      %v4195 = vpop.f32.mrf.mxu0
      %v4196 = vadd.f32 0.0, %v4195
      %v4197 = vpop.f32.mrf.mxu0
      %v4198 = vadd.f32 0.0, %v4197
      %4199 = vdwg.mxu0
      %v4200 = vadd.f32 %v3952, %v4111
      %v4201 = vadd.f32 %v3953, %v4113
      %v4202 = vadd.f32 %v3954, %v4116
      %v4203 = vadd.f32 %v3955, %v4118
      %v4204 = vadd.f32 %v3956, %v4121
      %v4205 = vadd.f32 %v3957, %v4123
      %v4206 = vadd.f32 %v3958, %v4126
      %v4207 = vadd.f32 %v3959, %v4128
      %v4208 = vadd.f32 %v3960, %v4131
      %v4209 = vadd.f32 %v3961, %v4133
      %v4210 = vadd.f32 %v3962, %v4136
      %v4211 = vadd.f32 %v3963, %v4138
      %v4212 = vadd.f32 %v3964, %v4141
      %v4213 = vadd.f32 %v3965, %v4143
      %v4214 = vadd.f32 %v3966, %v4146
      %v4215 = vadd.f32 %v3967, %v4148
      %v4216 = vadd.f32 %v3968, %v4151
      %v4217 = vadd.f32 %v3969, %v4153
      %v4218 = vadd.f32 %v3970, %v4156
      %v4219 = vadd.f32 %v3971, %v4158
      %v4220 = vadd.f32 %v3972, %v4161
      %v4221 = vadd.f32 %v3973, %v4163
      %v4222 = vadd.f32 %v3974, %v4166
      %v4223 = vadd.f32 %v3975, %v4168
      %v4224 = vadd.f32 %v3976, %v4171
      %v4225 = vadd.f32 %v3977, %v4173
      %v4226 = vadd.f32 %v3978, %v4176
      %v4227 = vadd.f32 %v3979, %v4178
      %v4228 = vadd.f32 %v3980, %v4181
      %v4229 = vadd.f32 %v3981, %v4183
      %v4230 = vadd.f32 %v3982, %v4186
      %v4231 = vadd.f32 %v3983, %v4188
      %v4232 = vadd.f32 %v3984, %v4191
      %v4233 = vadd.f32 %v3985, %v4193
      %v4234 = vadd.f32 %v3986, %v4196
      %v4235 = vadd.f32 %v3987, %v4198
      %v4236 = vld [vmem:[#allocation2 + $0x24] sm:$0xff]
      %v4237 = vld [vmem:[#allocation2 + $0x2c] sm:$0xff]
      %v4238 = vld [vmem:[#allocation2 + $0x34] sm:$0xff]
      %v4239 = vld [vmem:[#allocation2 + $0x3c] sm:$0xff]
      %v4240 = vld [vmem:[#allocation2 + $0x44] sm:$0xff]
      %v4241 = vld [vmem:[#allocation2 + $0x4c] sm:$0xff]
      %v4242 = vld [vmem:[#allocation2 + $0x54] sm:$0xff]
      %v4243 = vld [vmem:[#allocation2 + $0x5c] sm:$0xff]
      %v4244 = vld [vmem:[#allocation2 + $0x64] sm:$0xff]
      %v4245 = vld [vmem:[#allocation2 + $0x6c] sm:$0xff]
      %v4246 = vld [vmem:[#allocation2 + $0x74] sm:$0xff]
      %v4247 = vld [vmem:[#allocation2 + $0x7c] sm:$0xff]
      %v4248 = vld [vmem:[#allocation2 + $0x84] sm:$0xff]
      %v4249 = vld [vmem:[#allocation2 + $0x8c] sm:$0xff]
      %v4250 = vld [vmem:[#allocation2 + $0x94] sm:$0xff]
      %v4251 = vld [vmem:[#allocation2 + $0x9c] sm:$0xff]
      %v4252 = vld [vmem:[#allocation2 + $0xa4] sm:$0xff]
      %v4253 = vld [vmem:[#allocation2 + $0xac] sm:$0xff]
      %v4254 = vld [vmem:[#allocation2 + $0xb4] sm:$0xff]
      %v4255 = vld [vmem:[#allocation2 + $0xbc] sm:$0xff]
      %v4256 = vld [vmem:[#allocation2 + $0xc4] sm:$0xff]
      %v4257 = vld [vmem:[#allocation2 + $0xcc] sm:$0xff]
      %v4258 = vld [vmem:[#allocation2 + $0xd4] sm:$0xff]
      %v4259 = vld [vmem:[#allocation2 + $0xdc] sm:$0xff]
      %v4260 = vld [vmem:[#allocation2 + $0xe4] sm:$0xff]
      %v4261 = vld [vmem:[#allocation2 + $0xec] sm:$0xff]
      %v4262 = vld [vmem:[#allocation2 + $0xf4] sm:$0xff]
      %v4263 = vld [vmem:[#allocation2 + $0xfc] sm:$0xff]
      %v4264 = vld [vmem:[#allocation2 + $0x104] sm:$0xff]
      %v4265 = vld [vmem:[#allocation2 + $0x10c] sm:$0xff]
      %v4266 = vld [vmem:[#allocation2 + $0x114] sm:$0xff]
      %v4267 = vld [vmem:[#allocation2 + $0x11c] sm:$0xff]
      %v4268 = vld [vmem:[#allocation2 + $0x124] sm:$0xff]
      %v4269 = vld [vmem:[#allocation2 + $0x12c] sm:$0xff]
      %v4270 = vld [vmem:[#allocation2 + $0x134] sm:$0xff]
      %v4271 = vld [vmem:[#allocation2 + $0x13c] sm:$0x3f]
      %v4272 = vpack.c.bf16 %v4237, %v4236
      %v4273 = vpack.c.bf16 %v4239, %v4238
      %v4274 = vpack.c.bf16 %v4241, %v4240
      %v4275 = vpack.c.bf16 %v4243, %v4242
      %v4276 = vpack.c.bf16 %v4245, %v4244
      %v4277 = vpack.c.bf16 %v4247, %v4246
      %v4278 = vpack.c.bf16 %v4249, %v4248
      %v4279 = vpack.c.bf16 %v4251, %v4250
      %v4280 = vpack.c.bf16 %v4253, %v4252
      %v4281 = vpack.c.bf16 %v4255, %v4254
      %v4282 = vpack.c.bf16 %v4257, %v4256
      %v4283 = vpack.c.bf16 %v4259, %v4258
      %v4284 = vpack.c.bf16 %v4261, %v4260
      %v4285 = vpack.c.bf16 %v4263, %v4262
      %v4286 = vpack.c.bf16 %v4265, %v4264
      %v4287 = vpack.c.bf16 %v4267, %v4266
      %v4288 = vpack.c.bf16 %v4269, %v4268
      %v4289 = vpack.c.bf16 %v4271, %v4270
      %s4290 = scalar_lea.vmem %s3, 12
      %v4291 = vld [vmem:[%s4290] sm:$0x3]
      %v4293 = vsel %vm364, %v4272, 0
      %v4296 = vsel %vm364, %v4273, 0
      %v4299 = vsel %vm364, %v4274, 0
      %v4302 = vsel %vm364, %v4275, 0
      %v4305 = vsel %vm364, %v4276, 0
      %v4308 = vsel %vm364, %v4277, 0
      %v4311 = vsel %vm364, %v4278, 0
      %v4314 = vsel %vm364, %v4279, 0
      %v4317 = vsel %vm364, %v4280, 0
      %v4320 = vsel %vm364, %v4281, 0
      %v4323 = vsel %vm364, %v4282, 0
      %v4326 = vsel %vm364, %v4283, 0
      %v4329 = vsel %vm364, %v4284, 0
      %v4332 = vsel %vm364, %v4285, 0
      %v4335 = vsel %vm364, %v4286, 0
      %v4338 = vsel %vm364, %v4287, 0
      %v4341 = vsel %vm364, %v4288, 0
      %v4344 = vsel %vm364, %v4289, 0
      %v4347 = vsel %vm419, %v4291, 0
      %4349 = vmatpush.bf16.msra.mxu0 0
      %4350 = vmatpush.bf16.msra.mxu0 0
      %4351 = vmatpush.bf16.msra.mxu0 0
      %4352 = vmatpush.bf16.msra.mxu0 0
      %4353 = vmatpush.bf16.msra.mxu0 0
      %4354 = vmatpush.bf16.msra.mxu0 0
      %4355 = vmatpush.bf16.msra.mxu0 0
      %4356 = vmatpush.bf16.msra.mxu0 %v4347
      %4357 = vmatmul.bf16.gmra.mxu0 %v4293
      %v4358 = vpop.f32.mrf.mxu0
      %v4359 = vadd.f32 0.0, %v4358
      %v4360 = vpop.f32.mrf.mxu0
      %v4361 = vadd.f32 0.0, %v4360
      %4362 = vmatmul.bf16.gmra.mxu0 %v4296
      %v4363 = vpop.f32.mrf.mxu0
      %v4364 = vadd.f32 0.0, %v4363
      %v4365 = vpop.f32.mrf.mxu0
      %v4366 = vadd.f32 0.0, %v4365
      %4367 = vmatmul.bf16.gmra.mxu0 %v4299
      %v4368 = vpop.f32.mrf.mxu0
      %v4369 = vadd.f32 0.0, %v4368
      %v4370 = vpop.f32.mrf.mxu0
      %v4371 = vadd.f32 0.0, %v4370
      %4372 = vmatmul.bf16.gmra.mxu0 %v4302
      %v4373 = vpop.f32.mrf.mxu0
      %v4374 = vadd.f32 0.0, %v4373
      %v4375 = vpop.f32.mrf.mxu0
      %v4376 = vadd.f32 0.0, %v4375
      %4377 = vmatmul.bf16.gmra.mxu0 %v4305
      %v4378 = vpop.f32.mrf.mxu0
      %v4379 = vadd.f32 0.0, %v4378
      %v4380 = vpop.f32.mrf.mxu0
      %v4381 = vadd.f32 0.0, %v4380
      %4382 = vmatmul.bf16.gmra.mxu0 %v4308
      %v4383 = vpop.f32.mrf.mxu0
      %v4384 = vadd.f32 0.0, %v4383
      %v4385 = vpop.f32.mrf.mxu0
      %v4386 = vadd.f32 0.0, %v4385
      %4387 = vmatmul.bf16.gmra.mxu0 %v4311
      %v4388 = vpop.f32.mrf.mxu0
      %v4389 = vadd.f32 0.0, %v4388
      %v4390 = vpop.f32.mrf.mxu0
      %v4391 = vadd.f32 0.0, %v4390
      %4392 = vmatmul.bf16.gmra.mxu0 %v4314
      %v4393 = vpop.f32.mrf.mxu0
      %v4394 = vadd.f32 0.0, %v4393
      %v4395 = vpop.f32.mrf.mxu0
      %v4396 = vadd.f32 0.0, %v4395
      %4397 = vmatmul.bf16.gmra.mxu0 %v4317
      %v4398 = vpop.f32.mrf.mxu0
      %v4399 = vadd.f32 0.0, %v4398
      %v4400 = vpop.f32.mrf.mxu0
      %v4401 = vadd.f32 0.0, %v4400
      %4402 = vmatmul.bf16.gmra.mxu0 %v4320
      %v4403 = vpop.f32.mrf.mxu0
      %v4404 = vadd.f32 0.0, %v4403
      %v4405 = vpop.f32.mrf.mxu0
      %v4406 = vadd.f32 0.0, %v4405
      %4407 = vmatmul.bf16.gmra.mxu0 %v4323
      %v4408 = vpop.f32.mrf.mxu0
      %v4409 = vadd.f32 0.0, %v4408
      %v4410 = vpop.f32.mrf.mxu0
      %v4411 = vadd.f32 0.0, %v4410
      %4412 = vmatmul.bf16.gmra.mxu0 %v4326
      %v4413 = vpop.f32.mrf.mxu0
      %v4414 = vadd.f32 0.0, %v4413
      %v4415 = vpop.f32.mrf.mxu0
      %v4416 = vadd.f32 0.0, %v4415
      %4417 = vmatmul.bf16.gmra.mxu0 %v4329
      %v4418 = vpop.f32.mrf.mxu0
      %v4419 = vadd.f32 0.0, %v4418
      %v4420 = vpop.f32.mrf.mxu0
      %v4421 = vadd.f32 0.0, %v4420
      %4422 = vmatmul.bf16.gmra.mxu0 %v4332
      %v4423 = vpop.f32.mrf.mxu0
      %v4424 = vadd.f32 0.0, %v4423
      %v4425 = vpop.f32.mrf.mxu0
      %v4426 = vadd.f32 0.0, %v4425
      %4427 = vmatmul.bf16.gmra.mxu0 %v4335
      %v4428 = vpop.f32.mrf.mxu0
      %v4429 = vadd.f32 0.0, %v4428
      %v4430 = vpop.f32.mrf.mxu0
      %v4431 = vadd.f32 0.0, %v4430
      %4432 = vmatmul.bf16.gmra.mxu0 %v4338
      %v4433 = vpop.f32.mrf.mxu0
      %v4434 = vadd.f32 0.0, %v4433
      %v4435 = vpop.f32.mrf.mxu0
      %v4436 = vadd.f32 0.0, %v4435
      %4437 = vmatmul.bf16.gmra.mxu0 %v4341
      %v4438 = vpop.f32.mrf.mxu0
      %v4439 = vadd.f32 0.0, %v4438
      %v4440 = vpop.f32.mrf.mxu0
      %v4441 = vadd.f32 0.0, %v4440
      %4442 = vmatmul.bf16.gmra.mxu0 %v4344
      %v4443 = vpop.f32.mrf.mxu0
      %v4444 = vadd.f32 0.0, %v4443
      %v4445 = vpop.f32.mrf.mxu0
      %v4446 = vadd.f32 0.0, %v4445
      %4447 = vdwg.mxu0
      %v4448 = vadd.f32 %v4200, %v4359
      %v4449 = vadd.f32 %v4201, %v4361
      %v4450 = vadd.f32 %v4202, %v4364
      %v4451 = vadd.f32 %v4203, %v4366
      %v4452 = vadd.f32 %v4204, %v4369
      %v4453 = vadd.f32 %v4205, %v4371
      %v4454 = vadd.f32 %v4206, %v4374
      %v4455 = vadd.f32 %v4207, %v4376
      %v4456 = vadd.f32 %v4208, %v4379
      %v4457 = vadd.f32 %v4209, %v4381
      %v4458 = vadd.f32 %v4210, %v4384
      %v4459 = vadd.f32 %v4211, %v4386
      %v4460 = vadd.f32 %v4212, %v4389
      %v4461 = vadd.f32 %v4213, %v4391
      %v4462 = vadd.f32 %v4214, %v4394
      %v4463 = vadd.f32 %v4215, %v4396
      %v4464 = vadd.f32 %v4216, %v4399
      %v4465 = vadd.f32 %v4217, %v4401
      %v4466 = vadd.f32 %v4218, %v4404
      %v4467 = vadd.f32 %v4219, %v4406
      %v4468 = vadd.f32 %v4220, %v4409
      %v4469 = vadd.f32 %v4221, %v4411
      %v4470 = vadd.f32 %v4222, %v4414
      %v4471 = vadd.f32 %v4223, %v4416
      %v4472 = vadd.f32 %v4224, %v4419
      %v4473 = vadd.f32 %v4225, %v4421
      %v4474 = vadd.f32 %v4226, %v4424
      %v4475 = vadd.f32 %v4227, %v4426
      %v4476 = vadd.f32 %v4228, %v4429
      %v4477 = vadd.f32 %v4229, %v4431
      %v4478 = vadd.f32 %v4230, %v4434
      %v4479 = vadd.f32 %v4231, %v4436
      %v4480 = vadd.f32 %v4232, %v4439
      %v4481 = vadd.f32 %v4233, %v4441
      %v4482 = vadd.f32 %v4234, %v4444
      %v4483 = vadd.f32 %v4235, %v4446
      %v4484 = vld [vmem:[#allocation2 + $0x25] sm:$0xff]
      %v4485 = vld [vmem:[#allocation2 + $0x2d] sm:$0xff]
      %v4486 = vld [vmem:[#allocation2 + $0x35] sm:$0xff]
      %v4487 = vld [vmem:[#allocation2 + $0x3d] sm:$0xff]
      %v4488 = vld [vmem:[#allocation2 + $0x45] sm:$0xff]
      %v4489 = vld [vmem:[#allocation2 + $0x4d] sm:$0xff]
      %v4490 = vld [vmem:[#allocation2 + $0x55] sm:$0xff]
      %v4491 = vld [vmem:[#allocation2 + $0x5d] sm:$0xff]
      %v4492 = vld [vmem:[#allocation2 + $0x65] sm:$0xff]
      %v4493 = vld [vmem:[#allocation2 + $0x6d] sm:$0xff]
      %v4494 = vld [vmem:[#allocation2 + $0x75] sm:$0xff]
      %v4495 = vld [vmem:[#allocation2 + $0x7d] sm:$0xff]
      %v4496 = vld [vmem:[#allocation2 + $0x85] sm:$0xff]
      %v4497 = vld [vmem:[#allocation2 + $0x8d] sm:$0xff]
      %v4498 = vld [vmem:[#allocation2 + $0x95] sm:$0xff]
      %v4499 = vld [vmem:[#allocation2 + $0x9d] sm:$0xff]
      %v4500 = vld [vmem:[#allocation2 + $0xa5] sm:$0xff]
      %v4501 = vld [vmem:[#allocation2 + $0xad] sm:$0xff]
      %v4502 = vld [vmem:[#allocation2 + $0xb5] sm:$0xff]
      %v4503 = vld [vmem:[#allocation2 + $0xbd] sm:$0xff]
      %v4504 = vld [vmem:[#allocation2 + $0xc5] sm:$0xff]
      %v4505 = vld [vmem:[#allocation2 + $0xcd] sm:$0xff]
      %v4506 = vld [vmem:[#allocation2 + $0xd5] sm:$0xff]
      %v4507 = vld [vmem:[#allocation2 + $0xdd] sm:$0xff]
      %v4508 = vld [vmem:[#allocation2 + $0xe5] sm:$0xff]
      %v4509 = vld [vmem:[#allocation2 + $0xed] sm:$0xff]
      %v4510 = vld [vmem:[#allocation2 + $0xf5] sm:$0xff]
      %v4511 = vld [vmem:[#allocation2 + $0xfd] sm:$0xff]
      %v4512 = vld [vmem:[#allocation2 + $0x105] sm:$0xff]
      %v4513 = vld [vmem:[#allocation2 + $0x10d] sm:$0xff]
      %v4514 = vld [vmem:[#allocation2 + $0x115] sm:$0xff]
      %v4515 = vld [vmem:[#allocation2 + $0x11d] sm:$0xff]
      %v4516 = vld [vmem:[#allocation2 + $0x125] sm:$0xff]
      %v4517 = vld [vmem:[#allocation2 + $0x12d] sm:$0xff]
      %v4518 = vld [vmem:[#allocation2 + $0x135] sm:$0xff]
      %v4519 = vld [vmem:[#allocation2 + $0x13d] sm:$0x3f]
      %v4520 = vpack.c.bf16 %v4485, %v4484
      %v4521 = vpack.c.bf16 %v4487, %v4486
      %v4522 = vpack.c.bf16 %v4489, %v4488
      %v4523 = vpack.c.bf16 %v4491, %v4490
      %v4524 = vpack.c.bf16 %v4493, %v4492
      %v4525 = vpack.c.bf16 %v4495, %v4494
      %v4526 = vpack.c.bf16 %v4497, %v4496
      %v4527 = vpack.c.bf16 %v4499, %v4498
      %v4528 = vpack.c.bf16 %v4501, %v4500
      %v4529 = vpack.c.bf16 %v4503, %v4502
      %v4530 = vpack.c.bf16 %v4505, %v4504
      %v4531 = vpack.c.bf16 %v4507, %v4506
      %v4532 = vpack.c.bf16 %v4509, %v4508
      %v4533 = vpack.c.bf16 %v4511, %v4510
      %v4534 = vpack.c.bf16 %v4513, %v4512
      %v4535 = vpack.c.bf16 %v4515, %v4514
      %v4536 = vpack.c.bf16 %v4517, %v4516
      %v4537 = vpack.c.bf16 %v4519, %v4518
      %s4538 = scalar_lea.vmem %s3, 14
      %v4539 = vld [vmem:[%s4538] sm:$0x3]
      %v4541 = vsel %vm364, %v4520, 0
      %v4544 = vsel %vm364, %v4521, 0
      %v4547 = vsel %vm364, %v4522, 0
      %v4550 = vsel %vm364, %v4523, 0
      %v4553 = vsel %vm364, %v4524, 0
      %v4556 = vsel %vm364, %v4525, 0
      %v4559 = vsel %vm364, %v4526, 0
      %v4562 = vsel %vm364, %v4527, 0
      %v4565 = vsel %vm364, %v4528, 0
      %v4568 = vsel %vm364, %v4529, 0
      %v4571 = vsel %vm364, %v4530, 0
      %v4574 = vsel %vm364, %v4531, 0
      %v4577 = vsel %vm364, %v4532, 0
      %v4580 = vsel %vm364, %v4533, 0
      %v4583 = vsel %vm364, %v4534, 0
      %v4586 = vsel %vm364, %v4535, 0
      %v4589 = vsel %vm364, %v4536, 0
      %v4592 = vsel %vm364, %v4537, 0
      %v4595 = vsel %vm419, %v4539, 0
      %4597 = vmatpush.bf16.msra.mxu0 0
      %4598 = vmatpush.bf16.msra.mxu0 0
      %4599 = vmatpush.bf16.msra.mxu0 0
      %4600 = vmatpush.bf16.msra.mxu0 0
      %4601 = vmatpush.bf16.msra.mxu0 0
      %4602 = vmatpush.bf16.msra.mxu0 0
      %4603 = vmatpush.bf16.msra.mxu0 0
      %4604 = vmatpush.bf16.msra.mxu0 %v4595
      %4605 = vmatmul.bf16.gmra.mxu0 %v4541
      %v4606 = vpop.f32.mrf.mxu0
      %v4607 = vadd.f32 0.0, %v4606
      %v4608 = vpop.f32.mrf.mxu0
      %v4609 = vadd.f32 0.0, %v4608
      %4610 = vmatmul.bf16.gmra.mxu0 %v4544
      %v4611 = vpop.f32.mrf.mxu0
      %v4612 = vadd.f32 0.0, %v4611
      %v4613 = vpop.f32.mrf.mxu0
      %v4614 = vadd.f32 0.0, %v4613
      %4615 = vmatmul.bf16.gmra.mxu0 %v4547
      %v4616 = vpop.f32.mrf.mxu0
      %v4617 = vadd.f32 0.0, %v4616
      %v4618 = vpop.f32.mrf.mxu0
      %v4619 = vadd.f32 0.0, %v4618
      %4620 = vmatmul.bf16.gmra.mxu0 %v4550
      %v4621 = vpop.f32.mrf.mxu0
      %v4622 = vadd.f32 0.0, %v4621
      %v4623 = vpop.f32.mrf.mxu0
      %v4624 = vadd.f32 0.0, %v4623
      %4625 = vmatmul.bf16.gmra.mxu0 %v4553
      %v4626 = vpop.f32.mrf.mxu0
      %v4627 = vadd.f32 0.0, %v4626
      %v4628 = vpop.f32.mrf.mxu0
      %v4629 = vadd.f32 0.0, %v4628
      %4630 = vmatmul.bf16.gmra.mxu0 %v4556
      %v4631 = vpop.f32.mrf.mxu0
      %v4632 = vadd.f32 0.0, %v4631
      %v4633 = vpop.f32.mrf.mxu0
      %v4634 = vadd.f32 0.0, %v4633
      %4635 = vmatmul.bf16.gmra.mxu0 %v4559
      %v4636 = vpop.f32.mrf.mxu0
      %v4637 = vadd.f32 0.0, %v4636
      %v4638 = vpop.f32.mrf.mxu0
      %v4639 = vadd.f32 0.0, %v4638
      %4640 = vmatmul.bf16.gmra.mxu0 %v4562
      %v4641 = vpop.f32.mrf.mxu0
      %v4642 = vadd.f32 0.0, %v4641
      %v4643 = vpop.f32.mrf.mxu0
      %v4644 = vadd.f32 0.0, %v4643
      %4645 = vmatmul.bf16.gmra.mxu0 %v4565
      %v4646 = vpop.f32.mrf.mxu0
      %v4647 = vadd.f32 0.0, %v4646
      %v4648 = vpop.f32.mrf.mxu0
      %v4649 = vadd.f32 0.0, %v4648
      %4650 = vmatmul.bf16.gmra.mxu0 %v4568
      %v4651 = vpop.f32.mrf.mxu0
      %v4652 = vadd.f32 0.0, %v4651
      %v4653 = vpop.f32.mrf.mxu0
      %v4654 = vadd.f32 0.0, %v4653
      %4655 = vmatmul.bf16.gmra.mxu0 %v4571
      %v4656 = vpop.f32.mrf.mxu0
      %v4657 = vadd.f32 0.0, %v4656
      %v4658 = vpop.f32.mrf.mxu0
      %v4659 = vadd.f32 0.0, %v4658
      %4660 = vmatmul.bf16.gmra.mxu0 %v4574
      %v4661 = vpop.f32.mrf.mxu0
      %v4662 = vadd.f32 0.0, %v4661
      %v4663 = vpop.f32.mrf.mxu0
      %v4664 = vadd.f32 0.0, %v4663
      %4665 = vmatmul.bf16.gmra.mxu0 %v4577
      %v4666 = vpop.f32.mrf.mxu0
      %v4667 = vadd.f32 0.0, %v4666
      %v4668 = vpop.f32.mrf.mxu0
      %v4669 = vadd.f32 0.0, %v4668
      %4670 = vmatmul.bf16.gmra.mxu0 %v4580
      %v4671 = vpop.f32.mrf.mxu0
      %v4672 = vadd.f32 0.0, %v4671
      %v4673 = vpop.f32.mrf.mxu0
      %v4674 = vadd.f32 0.0, %v4673
      %4675 = vmatmul.bf16.gmra.mxu0 %v4583
      %v4676 = vpop.f32.mrf.mxu0
      %v4677 = vadd.f32 0.0, %v4676
      %v4678 = vpop.f32.mrf.mxu0
      %v4679 = vadd.f32 0.0, %v4678
      %4680 = vmatmul.bf16.gmra.mxu0 %v4586
      %v4681 = vpop.f32.mrf.mxu0
      %v4682 = vadd.f32 0.0, %v4681
      %v4683 = vpop.f32.mrf.mxu0
      %v4684 = vadd.f32 0.0, %v4683
      %4685 = vmatmul.bf16.gmra.mxu0 %v4589
      %v4686 = vpop.f32.mrf.mxu0
      %v4687 = vadd.f32 0.0, %v4686
      %v4688 = vpop.f32.mrf.mxu0
      %v4689 = vadd.f32 0.0, %v4688
      %4690 = vmatmul.bf16.gmra.mxu0 %v4592
      %v4691 = vpop.f32.mrf.mxu0
      %v4692 = vadd.f32 0.0, %v4691
      %v4693 = vpop.f32.mrf.mxu0
      %v4694 = vadd.f32 0.0, %v4693
      %4695 = vdwg.mxu0
      %v4696 = vadd.f32 %v4448, %v4607
      %v4697 = vadd.f32 %v4449, %v4609
      %v4698 = vadd.f32 %v4450, %v4612
      %v4699 = vadd.f32 %v4451, %v4614
      %v4700 = vadd.f32 %v4452, %v4617
      %v4701 = vadd.f32 %v4453, %v4619
      %v4702 = vadd.f32 %v4454, %v4622
      %v4703 = vadd.f32 %v4455, %v4624
      %v4704 = vadd.f32 %v4456, %v4627
      %v4705 = vadd.f32 %v4457, %v4629
      %v4706 = vadd.f32 %v4458, %v4632
      %v4707 = vadd.f32 %v4459, %v4634
      %v4708 = vadd.f32 %v4460, %v4637
      %v4709 = vadd.f32 %v4461, %v4639
      %v4710 = vadd.f32 %v4462, %v4642
      %v4711 = vadd.f32 %v4463, %v4644
      %v4712 = vadd.f32 %v4464, %v4647
      %v4713 = vadd.f32 %v4465, %v4649
      %v4714 = vadd.f32 %v4466, %v4652
      %v4715 = vadd.f32 %v4467, %v4654
      %v4716 = vadd.f32 %v4468, %v4657
      %v4717 = vadd.f32 %v4469, %v4659
      %v4718 = vadd.f32 %v4470, %v4662
      %v4719 = vadd.f32 %v4471, %v4664
      %v4720 = vadd.f32 %v4472, %v4667
      %v4721 = vadd.f32 %v4473, %v4669
      %v4722 = vadd.f32 %v4474, %v4672
      %v4723 = vadd.f32 %v4475, %v4674
      %v4724 = vadd.f32 %v4476, %v4677
      %v4725 = vadd.f32 %v4477, %v4679
      %v4726 = vadd.f32 %v4478, %v4682
      %v4727 = vadd.f32 %v4479, %v4684
      %v4728 = vadd.f32 %v4480, %v4687
      %v4729 = vadd.f32 %v4481, %v4689
      %v4730 = vadd.f32 %v4482, %v4692
      %v4731 = vadd.f32 %v4483, %v4694
      %v4732 = vld [vmem:[#allocation2 + $0x26] sm:$0xff]
      %v4733 = vld [vmem:[#allocation2 + $0x2e] sm:$0xff]
      %v4734 = vld [vmem:[#allocation2 + $0x36] sm:$0xff]
      %v4735 = vld [vmem:[#allocation2 + $0x3e] sm:$0xff]
      %v4736 = vld [vmem:[#allocation2 + $0x46] sm:$0xff]
      %v4737 = vld [vmem:[#allocation2 + $0x4e] sm:$0xff]
      %v4738 = vld [vmem:[#allocation2 + $0x56] sm:$0xff]
      %v4739 = vld [vmem:[#allocation2 + $0x5e] sm:$0xff]
      %v4740 = vld [vmem:[#allocation2 + $0x66] sm:$0xff]
      %v4741 = vld [vmem:[#allocation2 + $0x6e] sm:$0xff]
      %v4742 = vld [vmem:[#allocation2 + $0x76] sm:$0xff]
      %v4743 = vld [vmem:[#allocation2 + $0x7e] sm:$0xff]
      %v4744 = vld [vmem:[#allocation2 + $0x86] sm:$0xff]
      %v4745 = vld [vmem:[#allocation2 + $0x8e] sm:$0xff]
      %v4746 = vld [vmem:[#allocation2 + $0x96] sm:$0xff]
      %v4747 = vld [vmem:[#allocation2 + $0x9e] sm:$0xff]
      %v4748 = vld [vmem:[#allocation2 + $0xa6] sm:$0xff]
      %v4749 = vld [vmem:[#allocation2 + $0xae] sm:$0xff]
      %v4750 = vld [vmem:[#allocation2 + $0xb6] sm:$0xff]
      %v4751 = vld [vmem:[#allocation2 + $0xbe] sm:$0xff]
      %v4752 = vld [vmem:[#allocation2 + $0xc6] sm:$0xff]
      %v4753 = vld [vmem:[#allocation2 + $0xce] sm:$0xff]
      %v4754 = vld [vmem:[#allocation2 + $0xd6] sm:$0xff]
      %v4755 = vld [vmem:[#allocation2 + $0xde] sm:$0xff]
      %v4756 = vld [vmem:[#allocation2 + $0xe6] sm:$0xff]
      %v4757 = vld [vmem:[#allocation2 + $0xee] sm:$0xff]
      %v4758 = vld [vmem:[#allocation2 + $0xf6] sm:$0xff]
      %v4759 = vld [vmem:[#allocation2 + $0xfe] sm:$0xff]
      %v4760 = vld [vmem:[#allocation2 + $0x106] sm:$0xff]
      %v4761 = vld [vmem:[#allocation2 + $0x10e] sm:$0xff]
      %v4762 = vld [vmem:[#allocation2 + $0x116] sm:$0xff]
      %v4763 = vld [vmem:[#allocation2 + $0x11e] sm:$0xff]
      %v4764 = vld [vmem:[#allocation2 + $0x126] sm:$0xff]
      %v4765 = vld [vmem:[#allocation2 + $0x12e] sm:$0xff]
      %v4766 = vld [vmem:[#allocation2 + $0x136] sm:$0xff]
      %v4767 = vld [vmem:[#allocation2 + $0x13e] sm:$0x3f]
      %v4768 = vpack.c.bf16 %v4733, %v4732
      %v4769 = vpack.c.bf16 %v4735, %v4734
      %v4770 = vpack.c.bf16 %v4737, %v4736
      %v4771 = vpack.c.bf16 %v4739, %v4738
      %v4772 = vpack.c.bf16 %v4741, %v4740
      %v4773 = vpack.c.bf16 %v4743, %v4742
      %v4774 = vpack.c.bf16 %v4745, %v4744
      %v4775 = vpack.c.bf16 %v4747, %v4746
      %v4776 = vpack.c.bf16 %v4749, %v4748
      %v4777 = vpack.c.bf16 %v4751, %v4750
      %v4778 = vpack.c.bf16 %v4753, %v4752
      %v4779 = vpack.c.bf16 %v4755, %v4754
      %v4780 = vpack.c.bf16 %v4757, %v4756
      %v4781 = vpack.c.bf16 %v4759, %v4758
      %v4782 = vpack.c.bf16 %v4761, %v4760
      %v4783 = vpack.c.bf16 %v4763, %v4762
      %v4784 = vpack.c.bf16 %v4765, %v4764
      %v4785 = vpack.c.bf16 %v4767, %v4766
      %s4786 = scalar_lea.vmem %s3, 16
      %v4787 = vld [vmem:[%s4786] sm:$0x3]
      %v4789 = vsel %vm364, %v4768, 0
      %v4792 = vsel %vm364, %v4769, 0
      %v4795 = vsel %vm364, %v4770, 0
      %v4798 = vsel %vm364, %v4771, 0
      %v4801 = vsel %vm364, %v4772, 0
      %v4804 = vsel %vm364, %v4773, 0
      %v4807 = vsel %vm364, %v4774, 0
      %v4810 = vsel %vm364, %v4775, 0
      %v4813 = vsel %vm364, %v4776, 0
      %v4816 = vsel %vm364, %v4777, 0
      %v4819 = vsel %vm364, %v4778, 0
      %v4822 = vsel %vm364, %v4779, 0
      %v4825 = vsel %vm364, %v4780, 0
      %v4828 = vsel %vm364, %v4781, 0
      %v4831 = vsel %vm364, %v4782, 0
      %v4834 = vsel %vm364, %v4783, 0
      %v4837 = vsel %vm364, %v4784, 0
      %v4840 = vsel %vm364, %v4785, 0
      %v4843 = vsel %vm419, %v4787, 0
      %4845 = vmatpush.bf16.msra.mxu0 0
      %4846 = vmatpush.bf16.msra.mxu0 0
      %4847 = vmatpush.bf16.msra.mxu0 0
      %4848 = vmatpush.bf16.msra.mxu0 0
      %4849 = vmatpush.bf16.msra.mxu0 0
      %4850 = vmatpush.bf16.msra.mxu0 0
      %4851 = vmatpush.bf16.msra.mxu0 0
      %4852 = vmatpush.bf16.msra.mxu0 %v4843
      %4853 = vmatmul.bf16.gmra.mxu0 %v4789
      %v4854 = vpop.f32.mrf.mxu0
      %v4855 = vadd.f32 0.0, %v4854
      %v4856 = vpop.f32.mrf.mxu0
      %v4857 = vadd.f32 0.0, %v4856
      %4858 = vmatmul.bf16.gmra.mxu0 %v4792
      %v4859 = vpop.f32.mrf.mxu0
      %v4860 = vadd.f32 0.0, %v4859
      %v4861 = vpop.f32.mrf.mxu0
      %v4862 = vadd.f32 0.0, %v4861
      %4863 = vmatmul.bf16.gmra.mxu0 %v4795
      %v4864 = vpop.f32.mrf.mxu0
      %v4865 = vadd.f32 0.0, %v4864
      %v4866 = vpop.f32.mrf.mxu0
      %v4867 = vadd.f32 0.0, %v4866
      %4868 = vmatmul.bf16.gmra.mxu0 %v4798
      %v4869 = vpop.f32.mrf.mxu0
      %v4870 = vadd.f32 0.0, %v4869
      %v4871 = vpop.f32.mrf.mxu0
      %v4872 = vadd.f32 0.0, %v4871
      %4873 = vmatmul.bf16.gmra.mxu0 %v4801
      %v4874 = vpop.f32.mrf.mxu0
      %v4875 = vadd.f32 0.0, %v4874
      %v4876 = vpop.f32.mrf.mxu0
      %v4877 = vadd.f32 0.0, %v4876
      %4878 = vmatmul.bf16.gmra.mxu0 %v4804
      %v4879 = vpop.f32.mrf.mxu0
      %v4880 = vadd.f32 0.0, %v4879
      %v4881 = vpop.f32.mrf.mxu0
      %v4882 = vadd.f32 0.0, %v4881
      %4883 = vmatmul.bf16.gmra.mxu0 %v4807
      %v4884 = vpop.f32.mrf.mxu0
      %v4885 = vadd.f32 0.0, %v4884
      %v4886 = vpop.f32.mrf.mxu0
      %v4887 = vadd.f32 0.0, %v4886
      %4888 = vmatmul.bf16.gmra.mxu0 %v4810
      %v4889 = vpop.f32.mrf.mxu0
      %v4890 = vadd.f32 0.0, %v4889
      %v4891 = vpop.f32.mrf.mxu0
      %v4892 = vadd.f32 0.0, %v4891
      %4893 = vmatmul.bf16.gmra.mxu0 %v4813
      %v4894 = vpop.f32.mrf.mxu0
      %v4895 = vadd.f32 0.0, %v4894
      %v4896 = vpop.f32.mrf.mxu0
      %v4897 = vadd.f32 0.0, %v4896
      %4898 = vmatmul.bf16.gmra.mxu0 %v4816
      %v4899 = vpop.f32.mrf.mxu0
      %v4900 = vadd.f32 0.0, %v4899
      %v4901 = vpop.f32.mrf.mxu0
      %v4902 = vadd.f32 0.0, %v4901
      %4903 = vmatmul.bf16.gmra.mxu0 %v4819
      %v4904 = vpop.f32.mrf.mxu0
      %v4905 = vadd.f32 0.0, %v4904
      %v4906 = vpop.f32.mrf.mxu0
      %v4907 = vadd.f32 0.0, %v4906
      %4908 = vmatmul.bf16.gmra.mxu0 %v4822
      %v4909 = vpop.f32.mrf.mxu0
      %v4910 = vadd.f32 0.0, %v4909
      %v4911 = vpop.f32.mrf.mxu0
      %v4912 = vadd.f32 0.0, %v4911
      %4913 = vmatmul.bf16.gmra.mxu0 %v4825
      %v4914 = vpop.f32.mrf.mxu0
      %v4915 = vadd.f32 0.0, %v4914
      %v4916 = vpop.f32.mrf.mxu0
      %v4917 = vadd.f32 0.0, %v4916
      %4918 = vmatmul.bf16.gmra.mxu0 %v4828
      %v4919 = vpop.f32.mrf.mxu0
      %v4920 = vadd.f32 0.0, %v4919
      %v4921 = vpop.f32.mrf.mxu0
      %v4922 = vadd.f32 0.0, %v4921
      %4923 = vmatmul.bf16.gmra.mxu0 %v4831
      %v4924 = vpop.f32.mrf.mxu0
      %v4925 = vadd.f32 0.0, %v4924
      %v4926 = vpop.f32.mrf.mxu0
      %v4927 = vadd.f32 0.0, %v4926
      %4928 = vmatmul.bf16.gmra.mxu0 %v4834
      %v4929 = vpop.f32.mrf.mxu0
      %v4930 = vadd.f32 0.0, %v4929
      %v4931 = vpop.f32.mrf.mxu0
      %v4932 = vadd.f32 0.0, %v4931
      %4933 = vmatmul.bf16.gmra.mxu0 %v4837
      %v4934 = vpop.f32.mrf.mxu0
      %v4935 = vadd.f32 0.0, %v4934
      %v4936 = vpop.f32.mrf.mxu0
      %v4937 = vadd.f32 0.0, %v4936
      %4938 = vmatmul.bf16.gmra.mxu0 %v4840
      %v4939 = vpop.f32.mrf.mxu0
      %v4940 = vadd.f32 0.0, %v4939
      %v4941 = vpop.f32.mrf.mxu0
      %v4942 = vadd.f32 0.0, %v4941
      %4943 = vdwg.mxu0
      %v4944 = vadd.f32 %v4696, %v4855
      %v4945 = vadd.f32 %v4697, %v4857
      %v4946 = vadd.f32 %v4698, %v4860
      %v4947 = vadd.f32 %v4699, %v4862
      %v4948 = vadd.f32 %v4700, %v4865
      %v4949 = vadd.f32 %v4701, %v4867
      %v4950 = vadd.f32 %v4702, %v4870
      %v4951 = vadd.f32 %v4703, %v4872
      %v4952 = vadd.f32 %v4704, %v4875
      %v4953 = vadd.f32 %v4705, %v4877
      %v4954 = vadd.f32 %v4706, %v4880
      %v4955 = vadd.f32 %v4707, %v4882
      %v4956 = vadd.f32 %v4708, %v4885
      %v4957 = vadd.f32 %v4709, %v4887
      %v4958 = vadd.f32 %v4710, %v4890
      %v4959 = vadd.f32 %v4711, %v4892
      %v4960 = vadd.f32 %v4712, %v4895
      %v4961 = vadd.f32 %v4713, %v4897
      %v4962 = vadd.f32 %v4714, %v4900
      %v4963 = vadd.f32 %v4715, %v4902
      %v4964 = vadd.f32 %v4716, %v4905
      %v4965 = vadd.f32 %v4717, %v4907
      %v4966 = vadd.f32 %v4718, %v4910
      %v4967 = vadd.f32 %v4719, %v4912
      %v4968 = vadd.f32 %v4720, %v4915
      %v4969 = vadd.f32 %v4721, %v4917
      %v4970 = vadd.f32 %v4722, %v4920
      %v4971 = vadd.f32 %v4723, %v4922
      %v4972 = vadd.f32 %v4724, %v4925
      %v4973 = vadd.f32 %v4725, %v4927
      %v4974 = vadd.f32 %v4726, %v4930
      %v4975 = vadd.f32 %v4727, %v4932
      %v4976 = vadd.f32 %v4728, %v4935
      %v4977 = vadd.f32 %v4729, %v4937
      %v4978 = vadd.f32 %v4730, %v4940
      %v4979 = vadd.f32 %v4731, %v4942
      %v4980 = vld [vmem:[%s4] sm:$0x1]
      %v4982 = vperm.slane %v4980, 0
      %v4984 = vadd.f32 %v4944, %v4982
      %v4985 = vadd.f32 %v4945, %v4982
      %v4986 = vadd.f32 %v4946, %v4982
      %v4987 = vadd.f32 %v4947, %v4982
      %v4988 = vadd.f32 %v4948, %v4982
      %v4989 = vadd.f32 %v4949, %v4982
      %v4990 = vadd.f32 %v4950, %v4982
      %v4991 = vadd.f32 %v4951, %v4982
      %v4992 = vadd.f32 %v4952, %v4982
      %v4993 = vadd.f32 %v4953, %v4982
      %v4994 = vadd.f32 %v4954, %v4982
      %v4995 = vadd.f32 %v4955, %v4982
      %v4996 = vadd.f32 %v4956, %v4982
      %v4997 = vadd.f32 %v4957, %v4982
      %v4998 = vadd.f32 %v4958, %v4982
      %v4999 = vadd.f32 %v4959, %v4982
      %v5000 = vadd.f32 %v4960, %v4982
      %v5001 = vadd.f32 %v4961, %v4982
      %v5002 = vadd.f32 %v4962, %v4982
      %v5003 = vadd.f32 %v4963, %v4982
      %v5004 = vadd.f32 %v4964, %v4982
      %v5005 = vadd.f32 %v4965, %v4982
      %v5006 = vadd.f32 %v4966, %v4982
      %v5007 = vadd.f32 %v4967, %v4982
      %v5008 = vadd.f32 %v4968, %v4982
      %v5009 = vadd.f32 %v4969, %v4982
      %v5010 = vadd.f32 %v4970, %v4982
      %v5011 = vadd.f32 %v4971, %v4982
      %v5012 = vadd.f32 %v4972, %v4982
      %v5013 = vadd.f32 %v4973, %v4982
      %v5014 = vadd.f32 %v4974, %v4982
      %v5015 = vadd.f32 %v4975, %v4982
      %v5016 = vadd.f32 %v4976, %v4982
      %v5017 = vadd.f32 %v4977, %v4982
      %v5018 = vadd.f32 %v4978, %v4982
      %v5019 = vadd.f32 %v4979, %v4982
      %v5020 = vld [vmem:[%s246 + $0x13] sm:$0xff]
      %v5021 = vld [vmem:[%s246 + $0x1b] sm:$0xff]
      %v5022 = vld [vmem:[%s246 + $0x23] sm:$0xff]
      %v5023 = vld [vmem:[%s246 + $0x2b] sm:$0xff]
      %v5024 = vld [vmem:[%s246 + $0x33] sm:$0xff]
      %v5025 = vld [vmem:[%s246 + $0x3b] sm:$0xff]
      %v5026 = vld [vmem:[%s246 + $0x43] sm:$0xff]
      %v5027 = vld [vmem:[%s246 + $0x4b] sm:$0xff]
      %v5028 = vld [vmem:[%s246 + $0x53] sm:$0xff]
      %v5029 = vld [vmem:[%s246 + $0x5b] sm:$0xff]
      %v5030 = vld [vmem:[%s246 + $0x63] sm:$0xff]
      %v5031 = vld [vmem:[%s246 + $0x6b] sm:$0xff]
      %v5032 = vld [vmem:[%s246 + $0x73] sm:$0xff]
      %v5033 = vld [vmem:[%s246 + $0x7b] sm:$0xff]
      %v5034 = vld [vmem:[%s246 + $0x83] sm:$0xff]
      %v5035 = vld [vmem:[%s246 + $0x8b] sm:$0xff]
      %v5036 = vld [vmem:[%s246 + $0x93] sm:$0xff]
      %v5037 = vld [vmem:[%s246 + $0x9b] sm:$0xff]
      %v5038 = vld [vmem:[%s246 + $0xa3] sm:$0xff]
      %v5039 = vld [vmem:[%s246 + $0xab] sm:$0xff]
      %v5040 = vld [vmem:[%s246 + $0xb3] sm:$0xff]
      %v5041 = vld [vmem:[%s246 + $0xbb] sm:$0xff]
      %v5042 = vld [vmem:[%s246 + $0xc3] sm:$0xff]
      %v5043 = vld [vmem:[%s246 + $0xcb] sm:$0xff]
      %v5044 = vld [vmem:[%s246 + $0xd3] sm:$0xff]
      %v5045 = vld [vmem:[%s246 + $0xdb] sm:$0xff]
      %v5046 = vld [vmem:[%s246 + $0xe3] sm:$0xff]
      %v5047 = vld [vmem:[%s246 + $0xeb] sm:$0xff]
      %v5048 = vld [vmem:[%s246 + $0xf3] sm:$0xff]
      %v5049 = vld [vmem:[%s246 + $0xfb] sm:$0xff]
      %v5050 = vld [vmem:[%s246 + $0x103] sm:$0xff]
      %v5051 = vld [vmem:[%s246 + $0x10b] sm:$0xff]
      %v5052 = vld [vmem:[%s246 + $0x113] sm:$0xff]
      %v5053 = vld [vmem:[%s246 + $0x11b] sm:$0xff]
      %v5054 = vld [vmem:[%s246 + $0x123] sm:$0xff]
      %v5055 = vld [vmem:[%s246 + $0x12b] sm:$0x3f]
      %v5056 = vadd.f32 %v4984, %v5020
      %v5057 = vadd.f32 %v4985, %v5021
      %v5058 = vadd.f32 %v4986, %v5022
      %v5059 = vadd.f32 %v4987, %v5023
      %v5060 = vadd.f32 %v4988, %v5024
      %v5061 = vadd.f32 %v4989, %v5025
      %v5062 = vadd.f32 %v4990, %v5026
      %v5063 = vadd.f32 %v4991, %v5027
      %v5064 = vadd.f32 %v4992, %v5028
      %v5065 = vadd.f32 %v4993, %v5029
      %v5066 = vadd.f32 %v4994, %v5030
      %v5067 = vadd.f32 %v4995, %v5031
      %v5068 = vadd.f32 %v4996, %v5032
      %v5069 = vadd.f32 %v4997, %v5033
      %v5070 = vadd.f32 %v4998, %v5034
      %v5071 = vadd.f32 %v4999, %v5035
      %v5072 = vadd.f32 %v5000, %v5036
      %v5073 = vadd.f32 %v5001, %v5037
      %v5074 = vadd.f32 %v5002, %v5038
      %v5075 = vadd.f32 %v5003, %v5039
      %v5076 = vadd.f32 %v5004, %v5040
      %v5077 = vadd.f32 %v5005, %v5041
      %v5078 = vadd.f32 %v5006, %v5042
      %v5079 = vadd.f32 %v5007, %v5043
      %v5080 = vadd.f32 %v5008, %v5044
      %v5081 = vadd.f32 %v5009, %v5045
      %v5082 = vadd.f32 %v5010, %v5046
      %v5083 = vadd.f32 %v5011, %v5047
      %v5084 = vadd.f32 %v5012, %v5048
      %v5085 = vadd.f32 %v5013, %v5049
      %v5086 = vadd.f32 %v5014, %v5050
      %v5087 = vadd.f32 %v5015, %v5051
      %v5088 = vadd.f32 %v5016, %v5052
      %v5089 = vadd.f32 %v5017, %v5053
      %v5090 = vadd.f32 %v5018, %v5054
      %v5091 = vadd.f32 %v5019, %v5055
      %v5092 = vmax.f32 %v5056, 0.0
      %v5093 = vmax.f32 %v5057, 0.0
      %v5094 = vmax.f32 %v5058, 0.0
      %v5095 = vmax.f32 %v5059, 0.0
      %v5096 = vmax.f32 %v5060, 0.0
      %v5097 = vmax.f32 %v5061, 0.0
      %v5098 = vmax.f32 %v5062, 0.0
      %v5099 = vmax.f32 %v5063, 0.0
      %v5100 = vmax.f32 %v5064, 0.0
      %v5101 = vmax.f32 %v5065, 0.0
      %v5102 = vmax.f32 %v5066, 0.0
      %v5103 = vmax.f32 %v5067, 0.0
      %v5104 = vmax.f32 %v5068, 0.0
      %v5105 = vmax.f32 %v5069, 0.0
      %v5106 = vmax.f32 %v5070, 0.0
      %v5107 = vmax.f32 %v5071, 0.0
      %v5108 = vmax.f32 %v5072, 0.0
      %v5109 = vmax.f32 %v5073, 0.0
      %v5110 = vmax.f32 %v5074, 0.0
      %v5111 = vmax.f32 %v5075, 0.0
      %v5112 = vmax.f32 %v5076, 0.0
      %v5113 = vmax.f32 %v5077, 0.0
      %v5114 = vmax.f32 %v5078, 0.0
      %v5115 = vmax.f32 %v5079, 0.0
      %v5116 = vmax.f32 %v5080, 0.0
      %v5117 = vmax.f32 %v5081, 0.0
      %v5118 = vmax.f32 %v5082, 0.0
      %v5119 = vmax.f32 %v5083, 0.0
      %v5120 = vmax.f32 %v5084, 0.0
      %v5121 = vmax.f32 %v5085, 0.0
      %v5122 = vmax.f32 %v5086, 0.0
      %v5123 = vmax.f32 %v5087, 0.0
      %v5124 = vmax.f32 %v5088, 0.0
      %v5125 = vmax.f32 %v5089, 0.0
      %v5126 = vmax.f32 %v5090, 0.0
      %v5127 = vmax.f32 %v5091, 0.0
      %5128 = vst.msk [vmem:[%s251] sm:$0xff] %vm364, %v5092
      %5129 = vst.msk [vmem:[%s251 + $0x8] sm:$0xff] %vm364, %v5093
      %5130 = vst.msk [vmem:[%s251 + $0x10] sm:$0xff] %vm364, %v5094
      %5131 = vst.msk [vmem:[%s251 + $0x18] sm:$0xff] %vm364, %v5095
      %5132 = vst.msk [vmem:[%s251 + $0x20] sm:$0xff] %vm364, %v5096
      %5133 = vst.msk [vmem:[%s251 + $0x28] sm:$0xff] %vm364, %v5097
      %5134 = vst.msk [vmem:[%s251 + $0x30] sm:$0xff] %vm364, %v5098
      %5135 = vst.msk [vmem:[%s251 + $0x38] sm:$0xff] %vm364, %v5099
      %5136 = vst.msk [vmem:[%s251 + $0x40] sm:$0xff] %vm364, %v5100
      %5137 = vst.msk [vmem:[%s251 + $0x48] sm:$0xff] %vm364, %v5101
      %5138 = vst.msk [vmem:[%s251 + $0x50] sm:$0xff] %vm364, %v5102
      %5139 = vst.msk [vmem:[%s251 + $0x58] sm:$0xff] %vm364, %v5103
      %5140 = vst.msk [vmem:[%s251 + $0x60] sm:$0xff] %vm364, %v5104
      %5141 = vst.msk [vmem:[%s251 + $0x68] sm:$0xff] %vm364, %v5105
      %5142 = vst.msk [vmem:[%s251 + $0x70] sm:$0xff] %vm364, %v5106
      %5143 = vst.msk [vmem:[%s251 + $0x78] sm:$0xff] %vm364, %v5107
      %5144 = vst.msk [vmem:[%s251 + $0x80] sm:$0xff] %vm364, %v5108
      %5145 = vst.msk [vmem:[%s251 + $0x88] sm:$0xff] %vm364, %v5109
      %5146 = vst.msk [vmem:[%s251 + $0x90] sm:$0xff] %vm364, %v5110
      %5147 = vst.msk [vmem:[%s251 + $0x98] sm:$0xff] %vm364, %v5111
      %5148 = vst.msk [vmem:[%s251 + $0xa0] sm:$0xff] %vm364, %v5112
      %5149 = vst.msk [vmem:[%s251 + $0xa8] sm:$0xff] %vm364, %v5113
      %5150 = vst.msk [vmem:[%s251 + $0xb0] sm:$0xff] %vm364, %v5114
      %5151 = vst.msk [vmem:[%s251 + $0xb8] sm:$0xff] %vm364, %v5115
      %5152 = vst.msk [vmem:[%s251 + $0xc0] sm:$0xff] %vm364, %v5116
      %5153 = vst.msk [vmem:[%s251 + $0xc8] sm:$0xff] %vm364, %v5117
      %5154 = vst.msk [vmem:[%s251 + $0xd0] sm:$0xff] %vm364, %v5118
      %5155 = vst.msk [vmem:[%s251 + $0xd8] sm:$0xff] %vm364, %v5119
      %5156 = vst.msk [vmem:[%s251 + $0xe0] sm:$0xff] %vm364, %v5120
      %5157 = vst.msk [vmem:[%s251 + $0xe8] sm:$0xff] %vm364, %v5121
      %5158 = vst.msk [vmem:[%s251 + $0xf0] sm:$0xff] %vm364, %v5122
      %5159 = vst.msk [vmem:[%s251 + $0xf8] sm:$0xff] %vm364, %v5123
      %5160 = vst.msk [vmem:[%s251 + $0x100] sm:$0xff] %vm364, %v5124
      %5161 = vst.msk [vmem:[%s251 + $0x108] sm:$0xff] %vm364, %v5125
      %5162 = vst.msk [vmem:[%s251 + $0x110] sm:$0xff] %vm364, %v5126
      %5163 = vst.msk [vmem:[%s251 + $0x118] sm:$0x3f] %vm2819, %v5127
      %p5164 = scmp.lt.s32.totalorder %s17, 1
      %s5165 = scalar_select %p5164, %s17, 1
      %s5166 = smul.addr %s5165, 36
      %s5167 = smul.addr %s5166, 8
      %s5168 = scalar_lea.vmem %s6, %s5167
      // Predicated region
      $region45: #{tpu_custom_call.1} parent=43 // pred_check
        %p5169 = pneg %p166
      $region46: #{tpu_custom_call.1} parent=43 // pred_check_branch
        %5171 = sbr.rel (%p5169) target = $region48
      $region47: #{tpu_custom_call.1} parent=43 // pred_region
        _
      $region48: #{tpu_custom_call.1} parent=43 // pred_fallthru
        _
    $region44: #{tpu_custom_call.1} parent=5 // pred_fallthru
      _
    %p5172 = scmp.le.s32.totalorder 2, %s12
    // Predicated region
    $region49: #{tpu_custom_call.1} parent=5 // pred_check
      %p5173 = pneg %p5172
    $region50: #{tpu_custom_call.1} parent=5 // pred_check_branch
      %5175 = sbr.rel (%p5173) target = $region52
    $region51: #{tpu_custom_call.1} parent=5 // pred_region
      %s5176 = ssub.s32 %s12, 2
      // Predicated region
      $region53: #{tpu_custom_call.1} parent=51 // pred_check
        %p5177 = pneg %p172
      $region54: #{tpu_custom_call.1} parent=51 // pred_check_branch
        %5179 = sbr.rel (%p5177) target = $region56
      $region55: #{tpu_custom_call.1} parent=51 // pred_region
        %p5180 = scmp.lt.s32.totalorder %s18, 1
        %s5181 = scalar_select %p5180, %s18, 1
        %s5182 = smul.addr %s5181, 36
        %s5183 = smul.addr %s5182, 8
        %s5184 = scalar_lea.vmem %s6, %s5183
      $region56: #{tpu_custom_call.1} parent=51 // pred_fallthru
        _
    $region52: #{tpu_custom_call.1} parent=5 // pred_fallthru
      _
  $region6: #{tpu_custom_call.1} parent=0 // loop_footer
    %s16 = sadd.s32 1, %s12
  $region7: #{tpu_custom_call.1} parent=0 // loop_footer_branch
    %11 = sbr.rel target = $region3
  $region8: #{tpu_custom_call.1} parent=0 // loop_exit
    _

</llo_original>
